<compile_context>
chip_gen: v6e
topology: v6e:2x2x1
jax: 0.10.0
libtpu: 0.0.40
codegen_flags: <defaults>
</compile_context>

<pallas_src>
import functools

import jax
import jax.numpy as jnp
from jax.experimental import pallas as pl
from jax.experimental.pallas import tpu as pltpu


_VMEM_LIMIT = 32 * 1024 * 1024  # explicit scoped-VMEM budget (v5e/v6e/v7x safe)


# ----------------------------- Pallas kernels ------------------------------ #

def _conv_pool_kernel(p_ref, w_ref, b_ref, o_ref, *, cout):
    """Fused conv3x3 + bias + ReLU + 2x2 max-pool for one batch tile.

    p_ref: (TN, 16*Cin)     bf16 patch rows (one row per POOLED output pixel)
    w_ref: (16*Cin, 4*Cout) bf16 expanded conv weights (4 pooling quadrants)
    b_ref: (1, Cout)        f32 bias
    o_ref: (TN, Cout)       f32 pooled activations
    """
    y = jnp.dot(p_ref[...], w_ref[...], preferred_element_type=jnp.float32)
    m = jnp.maximum(jnp.maximum(y[:, 0 * cout:1 * cout], y[:, 1 * cout:2 * cout]),
                    jnp.maximum(y[:, 2 * cout:3 * cout], y[:, 3 * cout:4 * cout]))
    o_ref[...] = jnp.maximum(m + b_ref[...], 0.0).astype(o_ref.dtype)


def _linear_kernel(x_ref, w_ref, b_ref, o_ref):
    """(TB, K) @ (K, 128) + b; classes zero-padded to a full 128-lane store."""
    o_ref[...] = (
        jnp.dot(x_ref[...], w_ref[...], preferred_element_type=jnp.float32)
        + b_ref[...]
    ).astype(o_ref.dtype)


# ----------------------------- tiling helpers ------------------------------ #

def _largest_divisor_leq(n, cap):
    cap = max(1, min(cap, n))
    best = 1
    for d in range(1, cap + 1):
        if n % d == 0:
            best = d
    return best


def _batch_tile(n_images, rows_per_image, target_rows=1024):
    cap = max(1, target_rows // rows_per_image)
    if n_images >= 2:                      # keep >=2 grid steps (v7x: 2 TCs)
        cap = min(cap, n_images // 2)
    return _largest_divisor_leq(n_images, cap)


# ----------------------------- Pallas wrappers ------------------------------ #

def fused_conv_pool(patches, w_big, bias, rows_per_image, n_images, cout):
    """patches: (B*H2*W2, 16*Cin) bf16; w_big: (16*Cin, 4*Cout) bf16."""
    n_rows, k = patches.shape
    tb = _batch_tile(n_images, rows_per_image)
    tn = tb * rows_per_image
    grid = (n_rows // tn,)
    kernel = functools.partial(_conv_pool_kernel, cout=cout)
    cost = pl.CostEstimate(
        flops=2 * n_rows * k * 4 * cout,
        transcendentals=0,
        bytes_accessed=n_rows * k * 2 + k * 4 * cout * 2 + n_rows * cout * 4 + 4 * cout,
    )
    return pl.pallas_call(
        kernel,
        out_shape=jax.ShapeDtypeStruct((n_rows, cout), jnp.float32),
        grid=grid,
        in_specs=[
            pl.BlockSpec((tn, k), lambda i: (i, 0)),
            pl.BlockSpec((k, 4 * cout), lambda i: (0, 0)),   # VMEM-resident weights
            pl.BlockSpec((1, cout), lambda i: (0, 0)),        # VMEM-resident bias
        ],
        out_specs=pl.BlockSpec((tn, cout), lambda i: (i, 0)),
        compiler_params=pltpu.CompilerParams(
            dimension_semantics=("parallel",),
            vmem_limit_bytes=_VMEM_LIMIT,
        ),
        cost_estimate=cost,
    )(patches, w_big, bias)


def linear_padded(x, w_pad, b_pad):
    """x: (B, K) bf16; w_pad: (K, 128) bf16; b_pad: (1, 128) f32 -> (B, 128) f32."""
    batch, k = x.shape
    ncols = w_pad.shape[1]
    tb = batch
    if batch % 16 == 0:
        cand = _largest_divisor_leq(batch, max(8, min(256, batch // 2)))
        if cand % 8 == 0:
            tb = cand
    grid = (batch // tb,)
    cost = pl.CostEstimate(
        flops=2 * batch * k * ncols,
        transcendentals=0,
        bytes_accessed=batch * k * 2 + k * ncols * 2 + batch * ncols * 4 + 4 * ncols,
    )
    return pl.pallas_call(
        _linear_kernel,
        out_shape=jax.ShapeDtypeStruct((batch, ncols), jnp.float32),
        grid=grid,
        in_specs=[
            pl.BlockSpec((tb, k), lambda i: (i, 0)),
            pl.BlockSpec((k, ncols), lambda i: (0, 0)),
            pl.BlockSpec((1, ncols), lambda i: (0, 0)),
        ],
        out_specs=pl.BlockSpec((tb, ncols), lambda i: (i, 0)),
        compiler_params=pltpu.CompilerParams(
            dimension_semantics=("parallel",),
            vmem_limit_bytes=_VMEM_LIMIT,
        ),
        cost_estimate=cost,
    )(x, w_pad, b_pad)


# ------------------------------- JAX glue ----------------------------------- #

def _pool_conv_patches(x_nhwc):
    """(B, H, W, C) f32 -> ((B*H2*W2, 16*C) bf16 patches, (B, H2, W2)).

    Row (b, h2, w2) holds the 4x4 zero-padded input window feeding the four
    conv outputs pooled into pixel (h2, w2).  K is ordered (a, b, r, c, ci)
    with input offsets s = 2a + r, t = 2b + c in [0, 4).
    """
    B, H, W, C = x_nhwc.shape
    H2, W2 = H // 2, W // 2
    xp = jnp.pad(x_nhwc, ((0, 0), (1, 1), (1, 1), (0, 0)))
    # parity pack: channel blocks ordered (r, c); shape (B, H2+1, W2+1, 4C)
    xq = jnp.concatenate([xp[:, r::2, c::2, :] for r in (0, 1) for c in (0, 1)],
                         axis=-1)
    # 2x2 window concat: channel blocks ordered (a, b); shape (B, H2, W2, 16C)
    win = jnp.concatenate([xq[:, a:a + H2, b:b + W2, :]
                           for a in (0, 1) for b in (0, 1)], axis=-1)
    return win.reshape(B * H2 * W2, 16 * C).astype(jnp.bfloat16), (B, H2, W2)


def _expand_conv_weight(w_oihw):
    """(Cout, Cin, 3, 3) -> (16*Cin, 4*Cout) bf16 matching _pool_conv_patches.

    Column block q = 2*py + px holds the conv weights for pooling quadrant
    (py, px), zero-padded from the 3x3 taps onto the 4x4 pooled input window.
    """
    cout, cin = w_oihw.shape[0], w_oihw.shape[1]
    w_t = jnp.transpose(w_oihw, (2, 3, 1, 0)).astype(jnp.float32)   # (dy, dx, ci, co)
    wb = jnp.zeros((4, 4, cin, 2, 2, cout), jnp.float32)            # (s, t, ci, py, px, co)
    for py in range(2):
        for px in range(2):
            wb = wb.at[py:py + 3, px:px + 3, :, py, px, :].set(w_t)
    wb = wb.reshape(2, 2, 2, 2, cin, 2, 2, cout)                    # (a, r, b, c, ci, py, px, co)
    wb = jnp.transpose(wb, (0, 2, 1, 3, 4, 5, 6, 7))                # (a, b, r, c, ci, py, px, co)
    return wb.reshape(16 * cin, 4 * cout).astype(jnp.bfloat16)


def conv_block(x_nhwc, w_oihw, b):
    cout = w_oihw.shape[0]
    patches, (B, H2, W2) = _pool_conv_patches(x_nhwc)
    w_big = _expand_conv_weight(w_oihw)
    y = fused_conv_pool(patches, w_big,
                        b.reshape(1, cout).astype(jnp.float32),
                        rows_per_image=H2 * W2, n_images=B, cout=cout)
    return y.reshape(B, H2, W2, cout)


def cnn_forward(x_nchw, params, num_classes=10):
    x = jnp.transpose(x_nchw, (0, 2, 3, 1)).astype(jnp.float32)   # NCHW -> NHWC
    x = conv_block(x, params["w1"], params["b1"])   # (B, 16, 16, 32)
    x = conv_block(x, params["w2"], params["b2"])   # (B,  8,  8, 64)
    x = conv_block(x, params["w3"], params["b3"])   # (B,  4,  4, 128)
    B = x.shape[0]
    # Flatten in (h, w, c) order; PyTorch's (c, h, w) flatten order is folded
    # into a one-time permutation of the FC weight (no runtime transpose).
    x_fc = x.reshape(B, 4 * 4 * 128).astype(jnp.bfloat16)
    wfc = params["wfc"]                                          # (ncls, 128*4*4) chw order
    w_hwc = jnp.transpose(wfc.reshape(num_classes, 128, 4, 4), (0, 2, 3, 1))
    w_mat = jnp.transpose(w_hwc.reshape(num_classes, 4 * 4 * 128), (1, 0))
    pad_cols = 128 - num_classes                                 # lane-dense FC store
    w_mat = jnp.pad(w_mat, ((0, 0), (0, pad_cols))).astype(jnp.bfloat16)
    b_pad = jnp.pad(params["bfc"], (0, pad_cols)).reshape(1, 128).astype(jnp.float32)
    logits = linear_padded(x_fc, w_mat, b_pad)
    return logits[:, :num_classes]


# ----------------------------- reference & init ----------------------------- #

def _reference_forward(x_nchw, params):
    def block(x, w, b):
        y = jax.lax.conv_general_dilated(
            x, w, window_strides=(1, 1), padding=((1, 1), (1, 1)),
            dimension_numbers=("NCHW", "OIHW", "NCHW"))
        y = jax.nn.relu(y + b[None, :, None, None])
        return jax.lax.reduce_window(y, -jnp.inf, jax.lax.max,
                                     (1, 1, 2, 2), (1, 1, 2, 2), "VALID")
    x = block(x_nchw, params["w1"], params["b1"])
    x = block(x, params["w2"], params["b2"])
    x = block(x, params["w3"], params["b3"])
    x = x.reshape(x.shape[0], -1)
    return x @ params["wfc"].T + params["bfc"]


def init_params(key, num_classes=10):
    ks = jax.random.split(key, 8)
    s = 0.05
    return {
        "w1": s * jax.random.normal(ks[0], (32, 3, 3, 3), jnp.float32),
        "b1": s * jax.random.normal(ks[1], (32,), jnp.float32),
        "w2": s * jax.random.normal(ks[2], (64, 32, 3, 3), jnp.float32),
        "b2": s * jax.random.normal(ks[3], (64,), jnp.float32),
        "w3": s * jax.random.normal(ks[4], (128, 64, 3, 3), jnp.float32),
        "b3": s * jax.random.normal(ks[5], (128,), jnp.float32),
        "wfc": s * jax.random.normal(ks[6], (num_classes, 128 * 4 * 4), jnp.float32),
        "bfc": s * jax.random.normal(ks[7], (num_classes,), jnp.float32),
    }


if __name__ == "__main__":
    key = jax.random.PRNGKey(0)
    pkey, xkey = jax.random.split(key)
    params = init_params(pkey, num_classes=10)
    # Spatial must be 32x32 so the FC sees 128*4*4 features (as in the module).
    x = jax.random.normal(xkey, (2, 3, 32, 32), jnp.float32)

    logits = jax.jit(cnn_forward)(x, params)
    logits = jax.block_until_ready(logits)
    assert logits.shape == (2, 10) and logits.dtype == jnp.float32

    # Loose check against a pure-JAX f32 reference (kernel matmuls use bf16).
    ref = _reference_forward(x, params)
    max_err = float(jnp.max(jnp.abs(logits - ref)))
    assert max_err < 1e-1, f"mismatch vs reference: {max_err}"

    print("KERNEL_OK")
</pallas_src>

<mosaic_0001>
module attributes {stable_mosaic.version = 11 : i64} {
  func.func @_conv_pool_kernel(%arg0: i32, %arg1: memref<256x48xbf16, #tpu.memory_space<vmem>>, %arg2: memref<48x128xbf16, #tpu.memory_space<vmem>>, %arg3: memref<1x32xf32, #tpu.memory_space<vmem>>, %arg4: memref<256x32xf32, #tpu.memory_space<vmem>>) attributes {dimension_semantics = [#tpu.dimension_semantics<parallel>], iteration_bounds = array<i64: 2>, scalar_prefetch = 0 : i64, scratch_operands = 0 : i64, tpu.core_type = #tpu.core_type<tc>, window_params = [{transform_indices = @transform_0, window_bounds = array<i64: 256, 48>}, {pipeline_mode = #tpu.pipeline_mode<synchronous>, transform_indices = @transform_1, window_bounds = array<i64: 48, 128>}, {pipeline_mode = #tpu.pipeline_mode<synchronous>, transform_indices = @transform_2, window_bounds = array<i64: 1, 32>}, {transform_indices = @transform_3, window_bounds = array<i64: 256, 32>}]} {
    %c0 = arith.constant 0 : index
    %c0_0 = arith.constant 0 : index
    %0 = vector.load %arg1[%c0, %c0_0] : memref<256x48xbf16, #tpu.memory_space<vmem>>, vector<256x48xbf16>
    %c0_1 = arith.constant 0 : index
    %c0_2 = arith.constant 0 : index
    %1 = vector.load %arg2[%c0_1, %c0_2] : memref<48x128xbf16, #tpu.memory_space<vmem>>, vector<48x128xbf16>
    %cst = arith.constant dense<0.000000e+00> : vector<256x128xf32>
    %2 = tpu.matmul %0, %1, %cst {dimension_numbers = #tpu.dot_dimension_numbers<[1], [0], [0], [1], [0, 0, 1, 1], [], []>} : vector<256x48xbf16>, vector<48x128xbf16>, vector<256x128xf32> -> vector<256x128xf32>
    %3 = vector.extract_strided_slice %2 {offsets = [0, 0], sizes = [256, 32], strides = [1, 1]} : vector<256x128xf32> to vector<256x32xf32>
    %4 = vector.extract_strided_slice %2 {offsets = [0, 32], sizes = [256, 32], strides = [1, 1]} : vector<256x128xf32> to vector<256x32xf32>
    %5 = arith.maximumf %3, %4 : vector<256x32xf32>
    %6 = vector.extract_strided_slice %2 {offsets = [0, 64], sizes = [256, 32], strides = [1, 1]} : vector<256x128xf32> to vector<256x32xf32>
    %7 = vector.extract_strided_slice %2 {offsets = [0, 96], sizes = [256, 32], strides = [1, 1]} : vector<256x128xf32> to vector<256x32xf32>
    %8 = arith.maximumf %6, %7 : vector<256x32xf32>
    %9 = arith.maximumf %5, %8 : vector<256x32xf32>
    %c0_3 = arith.constant 0 : index
    %c0_4 = arith.constant 0 : index
    %10 = vector.load %arg3[%c0_3, %c0_4] : memref<1x32xf32, #tpu.memory_space<vmem>>, vector<1x32xf32>
    %11 = vector.broadcast %10 : vector<1x32xf32> to vector<256x32xf32>
    %12 = arith.addf %9, %11 : vector<256x32xf32>
    %cst_5 = arith.constant 0.000000e+00 : f32
    %13 = vector.broadcast %cst_5 : f32 to vector<256x32xf32>
    %14 = arith.maximumf %12, %13 : vector<256x32xf32>
    %c0_6 = arith.constant 0 : index
    %c0_7 = arith.constant 0 : index
    %15 = vector.load %arg4[%c0_6, %c0_7] : memref<256x32xf32, #tpu.memory_space<vmem>>, vector<256x32xf32>
    tpu.vector_store %arg4[%c0_6, %c0_7], %14 {strides = array<i32>} : memref<256x32xf32, #tpu.memory_space<vmem>>, vector<256x32xf32>,
    return
  }
  func.func @transform_0(%arg0: i32) -> (i32, i32) {
    %c0_i32 = arith.constant 0 : i32
    %c0_i32_0 = arith.constant 0 : i32
    return %arg0, %c0_i32 : i32, i32
  }
  func.func @transform_1(%arg0: i32) -> (i32, i32) {
    %c0_i32 = arith.constant 0 : i32
    %c0_i32_0 = arith.constant 0 : i32
    %c0_i32_1 = arith.constant 0 : i32
    return %c0_i32, %c0_i32_0 : i32, i32
  }
  func.func @transform_2(%arg0: i32) -> (i32, i32) {
    %c0_i32 = arith.constant 0 : i32
    %c0_i32_0 = arith.constant 0 : i32
    %c0_i32_1 = arith.constant 0 : i32
    return %c0_i32, %c0_i32_0 : i32, i32
  }
  func.func @transform_3(%arg0: i32) -> (i32, i32) {
    %c0_i32 = arith.constant 0 : i32
    %c0_i32_0 = arith.constant 0 : i32
    return %arg0, %c0_i32 : i32, i32
  }
}

module attributes {stable_mosaic.version = 11 : i64} {
  func.func @_conv_pool_kernel(%arg0: i32, %arg1: memref<64x512xbf16, #tpu.memory_space<vmem>>, %arg2: memref<512x256xbf16, #tpu.memory_space<vmem>>, %arg3: memref<1x64xf32, #tpu.memory_space<vmem>>, %arg4: memref<64x64xf32, #tpu.memory_space<vmem>>) attributes {dimension_semantics = [#tpu.dimension_semantics<parallel>], iteration_bounds = array<i64: 2>, scalar_prefetch = 0 : i64, scratch_operands = 0 : i64, tpu.core_type = #tpu.core_type<tc>, window_params = [{transform_indices = @transform_0, window_bounds = array<i64: 64, 512>}, {pipeline_mode = #tpu.pipeline_mode<synchronous>, transform_indices = @transform_1, window_bounds = array<i64: 512, 256>}, {pipeline_mode = #tpu.pipeline_mode<synchronous>, transform_indices = @transform_2, window_bounds = array<i64: 1, 64>}, {transform_indices = @transform_3, window_bounds = array<i64: 64, 64>}]} {
    %c0 = arith.constant 0 : index
    %c0_0 = arith.constant 0 : index
    %0 = vector.load %arg1[%c0, %c0_0] : memref<64x512xbf16, #tpu.memory_space<vmem>>, vector<64x512xbf16>
    %c0_1 = arith.constant 0 : index
    %c0_2 = arith.constant 0 : index
    %1 = vector.load %arg2[%c0_1, %c0_2] : memref<512x256xbf16, #tpu.memory_space<vmem>>, vector<512x256xbf16>
    %cst = arith.constant dense<0.000000e+00> : vector<64x256xf32>
    %2 = tpu.matmul %0, %1, %cst {dimension_numbers = #tpu.dot_dimension_numbers<[1], [0], [0], [1], [0, 0, 1, 1], [], []>} : vector<64x512xbf16>, vector<512x256xbf16>, vector<64x256xf32> -> vector<64x256xf32>
    %3 = vector.extract_strided_slice %2 {offsets = [0, 0], sizes = [64, 64], strides = [1, 1]} : vector<64x256xf32> to vector<64x64xf32>
    %4 = vector.extract_strided_slice %2 {offsets = [0, 64], sizes = [64, 64], strides = [1, 1]} : vector<64x256xf32> to vector<64x64xf32>
    %5 = arith.maximumf %3, %4 : vector<64x64xf32>
    %6 = vector.extract_strided_slice %2 {offsets = [0, 128], sizes = [64, 64], strides = [1, 1]} : vector<64x256xf32> to vector<64x64xf32>
    %7 = vector.extract_strided_slice %2 {offsets = [0, 192], sizes = [64, 64], strides = [1, 1]} : vector<64x256xf32> to vector<64x64xf32>
    %8 = arith.maximumf %6, %7 : vector<64x64xf32>
    %9 = arith.maximumf %5, %8 : vector<64x64xf32>
    %c0_3 = arith.constant 0 : index
    %c0_4 = arith.constant 0 : index
    %10 = vector.load %arg3[%c0_3, %c0_4] : memref<1x64xf32, #tpu.memory_space<vmem>>, vector<1x64xf32>
    %11 = vector.broadcast %10 : vector<1x64xf32> to vector<64x64xf32>
    %12 = arith.addf %9, %11 : vector<64x64xf32>
    %cst_5 = arith.constant 0.000000e+00 : f32
    %13 = vector.broadcast %cst_5 : f32 to vector<64x64xf32>
    %14 = arith.maximumf %12, %13 : vector<64x64xf32>
    %c0_6 = arith.constant 0 : index
    %c0_7 = arith.constant 0 : index
    %15 = vector.load %arg4[%c0_6, %c0_7] : memref<64x64xf32, #tpu.memory_space<vmem>>, vector<64x64xf32>
    tpu.vector_store %arg4[%c0_6, %c0_7], %14 {strides = array<i32>} : memref<64x64xf32, #tpu.memory_space<vmem>>, vector<64x64xf32>,
    return
  }
  func.func @transform_0(%arg0: i32) -> (i32, i32) {
    %c0_i32 = arith.constant 0 : i32
    %c0_i32_0 = arith.constant 0 : i32
    return %arg0, %c0_i32 : i32, i32
  }
  func.func @transform_1(%arg0: i32) -> (i32, i32) {
    %c0_i32 = arith.constant 0 : i32
    %c0_i32_0 = arith.constant 0 : i32
    %c0_i32_1 = arith.constant 0 : i32
    return %c0_i32, %c0_i32_0 : i32, i32
  }
  func.func @transform_2(%arg0: i32) -> (i32, i32) {
    %c0_i32 = arith.constant 0 : i32
    %c0_i32_0 = arith.constant 0 : i32
    %c0_i32_1 = arith.constant 0 : i32
    return %c0_i32, %c0_i32_0 : i32, i32
  }
  func.func @transform_3(%arg0: i32) -> (i32, i32) {
    %c0_i32 = arith.constant 0 : i32
    %c0_i32_0 = arith.constant 0 : i32
    return %arg0, %c0_i32 : i32, i32
  }
}

module attributes {stable_mosaic.version = 11 : i64} {
  func.func @_conv_pool_kernel(%arg0: i32, %arg1: memref<16x1024xbf16, #tpu.memory_space<vmem>>, %arg2: memref<1024x512xbf16, #tpu.memory_space<vmem>>, %arg3: memref<1x128xf32, #tpu.memory_space<vmem>>, %arg4: memref<16x128xf32, #tpu.memory_space<vmem>>) attributes {dimension_semantics = [#tpu.dimension_semantics<parallel>], iteration_bounds = array<i64: 2>, scalar_prefetch = 0 : i64, scratch_operands = 0 : i64, tpu.core_type = #tpu.core_type<tc>, window_params = [{transform_indices = @transform_0, window_bounds = array<i64: 16, 1024>}, {pipeline_mode = #tpu.pipeline_mode<synchronous>, transform_indices = @transform_1, window_bounds = array<i64: 1024, 512>}, {pipeline_mode = #tpu.pipeline_mode<synchronous>, transform_indices = @transform_2, window_bounds = array<i64: 1, 128>}, {transform_indices = @transform_3, window_bounds = array<i64: 16, 128>}]} {
    %c0 = arith.constant 0 : index
    %c0_0 = arith.constant 0 : index
    %0 = vector.load %arg1[%c0, %c0_0] : memref<16x1024xbf16, #tpu.memory_space<vmem>>, vector<16x1024xbf16>
    %c0_1 = arith.constant 0 : index
    %c0_2 = arith.constant 0 : index
    %1 = vector.load %arg2[%c0_1, %c0_2] : memref<1024x512xbf16, #tpu.memory_space<vmem>>, vector<1024x512xbf16>
    %cst = arith.constant dense<0.000000e+00> : vector<16x512xf32>
    %2 = tpu.matmul %0, %1, %cst {dimension_numbers = #tpu.dot_dimension_numbers<[1], [0], [0], [1], [0, 0, 1, 1], [], []>} : vector<16x1024xbf16>, vector<1024x512xbf16>, vector<16x512xf32> -> vector<16x512xf32>
    %3 = vector.extract_strided_slice %2 {offsets = [0, 0], sizes = [16, 128], strides = [1, 1]} : vector<16x512xf32> to vector<16x128xf32>
    %4 = vector.extract_strided_slice %2 {offsets = [0, 128], sizes = [16, 128], strides = [1, 1]} : vector<16x512xf32> to vector<16x128xf32>
    %5 = arith.maximumf %3, %4 : vector<16x128xf32>
    %6 = vector.extract_strided_slice %2 {offsets = [0, 256], sizes = [16, 128], strides = [1, 1]} : vector<16x512xf32> to vector<16x128xf32>
    %7 = vector.extract_strided_slice %2 {offsets = [0, 384], sizes = [16, 128], strides = [1, 1]} : vector<16x512xf32> to vector<16x128xf32>
    %8 = arith.maximumf %6, %7 : vector<16x128xf32>
    %9 = arith.maximumf %5, %8 : vector<16x128xf32>
    %c0_3 = arith.constant 0 : index
    %c0_4 = arith.constant 0 : index
    %10 = vector.load %arg3[%c0_3, %c0_4] : memref<1x128xf32, #tpu.memory_space<vmem>>, vector<1x128xf32>
    %11 = vector.broadcast %10 : vector<1x128xf32> to vector<16x128xf32>
    %12 = arith.addf %9, %11 : vector<16x128xf32>
    %cst_5 = arith.constant 0.000000e+00 : f32
    %13 = vector.broadcast %cst_5 : f32 to vector<16x128xf32>
    %14 = arith.maximumf %12, %13 : vector<16x128xf32>
    %c0_6 = arith.constant 0 : index
    %c0_7 = arith.constant 0 : index
    %15 = vector.load %arg4[%c0_6, %c0_7] : memref<16x128xf32, #tpu.memory_space<vmem>>, vector<16x128xf32>
    tpu.vector_store %arg4[%c0_6, %c0_7], %14 {strides = array<i32>} : memref<16x128xf32, #tpu.memory_space<vmem>>, vector<16x128xf32>,
    return
  }
  func.func @transform_0(%arg0: i32) -> (i32, i32) {
    %c0_i32 = arith.constant 0 : i32
    %c0_i32_0 = arith.constant 0 : i32
    return %arg0, %c0_i32 : i32, i32
  }
  func.func @transform_1(%arg0: i32) -> (i32, i32) {
    %c0_i32 = arith.constant 0 : i32
    %c0_i32_0 = arith.constant 0 : i32
    %c0_i32_1 = arith.constant 0 : i32
    return %c0_i32, %c0_i32_0 : i32, i32
  }
  func.func @transform_2(%arg0: i32) -> (i32, i32) {
    %c0_i32 = arith.constant 0 : i32
    %c0_i32_0 = arith.constant 0 : i32
    %c0_i32_1 = arith.constant 0 : i32
    return %c0_i32, %c0_i32_0 : i32, i32
  }
  func.func @transform_3(%arg0: i32) -> (i32, i32) {
    %c0_i32 = arith.constant 0 : i32
    %c0_i32_0 = arith.constant 0 : i32
    return %arg0, %c0_i32 : i32, i32
  }
}

module attributes {stable_mosaic.version = 11 : i64} {
  func.func @_linear_kernel(%arg0: i32, %arg1: memref<2x2048xbf16, #tpu.memory_space<vmem>>, %arg2: memref<2048x128xbf16, #tpu.memory_space<vmem>>, %arg3: memref<1x128xf32, #tpu.memory_space<vmem>>, %arg4: memref<2x128xf32, #tpu.memory_space<vmem>>) attributes {dimension_semantics = [#tpu.dimension_semantics<parallel>], iteration_bounds = array<i64: 1>, scalar_prefetch = 0 : i64, scratch_operands = 0 : i64, tpu.core_type = #tpu.core_type<tc>, window_params = [{transform_indices = @transform_0, window_bounds = array<i64: 2, 2048>}, {pipeline_mode = #tpu.pipeline_mode<synchronous>, transform_indices = @transform_1, window_bounds = array<i64: 2048, 128>}, {pipeline_mode = #tpu.pipeline_mode<synchronous>, transform_indices = @transform_2, window_bounds = array<i64: 1, 128>}, {transform_indices = @transform_3, window_bounds = array<i64: 2, 128>}]} {
    %c0 = arith.constant 0 : index
    %c0_0 = arith.constant 0 : index
    %0 = vector.load %arg1[%c0, %c0_0] : memref<2x2048xbf16, #tpu.memory_space<vmem>>, vector<2x2048xbf16>
    %c0_1 = arith.constant 0 : index
    %c0_2 = arith.constant 0 : index
    %1 = vector.load %arg2[%c0_1, %c0_2] : memref<2048x128xbf16, #tpu.memory_space<vmem>>, vector<2048x128xbf16>
    %cst = arith.constant dense<0.000000e+00> : vector<2x128xf32>
    %2 = tpu.matmul %0, %1, %cst {dimension_numbers = #tpu.dot_dimension_numbers<[1], [0], [0], [1], [0, 0, 1, 1], [], []>} : vector<2x2048xbf16>, vector<2048x128xbf16>, vector<2x128xf32> -> vector<2x128xf32>
    %c0_3 = arith.constant 0 : index
    %c0_4 = arith.constant 0 : index
    %3 = vector.load %arg3[%c0_3, %c0_4] : memref<1x128xf32, #tpu.memory_space<vmem>>, vector<1x128xf32>
    %4 = vector.broadcast %3 : vector<1x128xf32> to vector<2x128xf32>
    %5 = arith.addf %2, %4 : vector<2x128xf32>
    %c0_5 = arith.constant 0 : index
    %c0_6 = arith.constant 0 : index
    %6 = vector.load %arg4[%c0_5, %c0_6] : memref<2x128xf32, #tpu.memory_space<vmem>>, vector<2x128xf32>
    tpu.vector_store %arg4[%c0_5, %c0_6], %5 {strides = array<i32>} : memref<2x128xf32, #tpu.memory_space<vmem>>, vector<2x128xf32>,
    return
  }
  func.func @transform_0(%arg0: i32) -> (i32, i32) {
    %c0_i32 = arith.constant 0 : i32
    %c0_i32_0 = arith.constant 0 : i32
    return %arg0, %c0_i32 : i32, i32
  }
  func.func @transform_1(%arg0: i32) -> (i32, i32) {
    %c0_i32 = arith.constant 0 : i32
    %c0_i32_0 = arith.constant 0 : i32
    %c0_i32_1 = arith.constant 0 : i32
    return %c0_i32, %c0_i32_0 : i32, i32
  }
  func.func @transform_2(%arg0: i32) -> (i32, i32) {
    %c0_i32 = arith.constant 0 : i32
    %c0_i32_0 = arith.constant 0 : i32
    %c0_i32_1 = arith.constant 0 : i32
    return %c0_i32, %c0_i32_0 : i32, i32
  }
  func.func @transform_3(%arg0: i32) -> (i32, i32) {
    %c0_i32 = arith.constant 0 : i32
    %c0_i32_0 = arith.constant 0 : i32
    return %arg0, %c0_i32 : i32, i32
  }
}

</mosaic_0001>

<llo_original>
// kernel: cnn_forward.4
$region0: #{cnn_forward.4}
  #allocation0 [shape = 'u32[]', space=smem, size = 0x4, offset = 0x4, fixed_abs, tag = 'smem constant byte address 0x4 - core index']
  #allocation1 [shape = 'u32[144,128]{1,0:T(1,128)}', space=vmem, size = 0x12000, scoped, tag = 'internal scratch']
  %s0 = inlined_call_operand.vmem [shape: bf16[512,48], index: 0, kind: input, shape index: {}]
  %s1 = inlined_call_operand.vmem [shape: bf16[48,128], index: 1, kind: input, shape index: {}]
  %s2 = inlined_call_operand.vmem [shape: f32[1,32], index: 2, kind: input, shape index: {}]
  %s3 = inlined_call_operand.vmem [shape: f32[512,32], index: 3, kind: output, shape index: {}]
  %s4 = sld [smem:[#allocation0]]
  $region45: #{cnn_forward.4} parent=0
    _
  %s6 = ssub.s32 1, %s4
  %s7 = scalar_select 0, %s6, %s4
  loop: start=0, step=1, limit=4
  $region2: #{cnn_forward.4} parent=0 // loop_pre_header
    _
  $region3: #{cnn_forward.4} parent=0 // loop_header
    %s9 = sphi 0, %s13
    %p10 = scmp.ge.s32.totalorder %s9, 4
    %s19 = sphi 0, %s21
    %s22 = sphi 0, %s19
    %s23 = sphi 0, %s22
    %s39 = sphi 0, %s23
    %s43 = sphi 0, %s43
    %s45 = sphi 0, %s43
    %s46 = sphi 0, %s45
    %s60 = sphi 0, %s46
    %s64 = sphi 0, %s64
    %s66 = sphi 0, %s64
    %s67 = sphi 0, %s66
    %s81 = sphi 0, %s67
    %s87 = sphi 0, %s89
    %s90 = sphi 0, %s87
    %s91 = sphi 0, %s90
    %s107 = sphi 0, %s91
  $region4: #{cnn_forward.4} parent=0 // loop_header_branch
    %12 = sbr.rel (%p10) target = $region8
  $region5: #{cnn_forward.4} parent=0 // loop_body
    %s14 = ssub.s32 %s9, 1
    %s15 = ssub.s32 %s9, 2
    %s16 = sadd.s32 %s9, 1
    %s17 = ssub.s32 %s9, %s16
    %p18 = scmp.eq.s32.totalorder %s17, 0
    %s20 = sadd.s32 %s19, 1
    %s21 = scalar_select %p18, %s19, %s20
    %p24 = pneg %p18
    %p25 = scmp.eq.s32.totalorder %s9, 1
    %p26 = por %p24, %p25
    %p27 = scmp.ne.s32.totalorder %s19, %s22
    %p28 = scmp.eq.s32.totalorder %s9, 0
    %p29 = por %p27, %p28
    %p30 = scmp.ne.s32.totalorder %s19, %s22
    %p31 = scmp.eq.s32.totalorder %s14, 1
    %p32 = por %p30, %p31
    %p33 = scmp.ne.s32.totalorder %s22, %s23
    %p34 = scmp.eq.s32.totalorder %s14, 0
    %p35 = por %p33, %p34
    %p36 = scmp.ne.s32.totalorder %s22, %s23
    %p37 = scmp.eq.s32.totalorder %s15, 1
    %p38 = por %p36, %p37
    %p40 = scmp.ne.s32.totalorder %s23, %s39
    %p41 = scmp.eq.s32.totalorder %s15, 0
    %p42 = por %p40, %p41
    %s44 = sadd.s32 %s43, 1
    %p47 = scmp.eq.s32.totalorder %s9, 1
    %p48 = scmp.ne.s32.totalorder %s43, %s45
    %p49 = scmp.eq.s32.totalorder %s9, 0
    %p50 = por %p48, %p49
    %p51 = scmp.ne.s32.totalorder %s43, %s45
    %p52 = scmp.eq.s32.totalorder %s14, 1
    %p53 = por %p51, %p52
    %p54 = scmp.ne.s32.totalorder %s45, %s46
    %p55 = scmp.eq.s32.totalorder %s14, 0
    %p56 = por %p54, %p55
    %p57 = scmp.ne.s32.totalorder %s45, %s46
    %p58 = scmp.eq.s32.totalorder %s15, 1
    %p59 = por %p57, %p58
    %p61 = scmp.ne.s32.totalorder %s46, %s60
    %p62 = scmp.eq.s32.totalorder %s15, 0
    %p63 = por %p61, %p62
    %s65 = sadd.s32 %s64, 1
    %p68 = scmp.eq.s32.totalorder %s9, 1
    %p69 = scmp.ne.s32.totalorder %s64, %s66
    %p70 = scmp.eq.s32.totalorder %s9, 0
    %p71 = por %p69, %p70
    %p72 = scmp.ne.s32.totalorder %s64, %s66
    %p73 = scmp.eq.s32.totalorder %s14, 1
    %p74 = por %p72, %p73
    %p75 = scmp.ne.s32.totalorder %s66, %s67
    %p76 = scmp.eq.s32.totalorder %s14, 0
    %p77 = por %p75, %p76
    %p78 = scmp.ne.s32.totalorder %s66, %s67
    %p79 = scmp.eq.s32.totalorder %s15, 1
    %p80 = por %p78, %p79
    %p82 = scmp.ne.s32.totalorder %s67, %s81
    %p83 = scmp.eq.s32.totalorder %s15, 0
    %p84 = por %p82, %p83
    %s85 = ssub.s32 %s9, %s16
    %p86 = scmp.eq.s32.totalorder %s85, 0
    %s88 = sadd.s32 %s87, 1
    %s89 = scalar_select %p86, %s87, %s88
    %p92 = pneg %p86
    %p93 = scmp.eq.s32.totalorder %s9, 1
    %p94 = por %p92, %p93
    %p95 = scmp.ne.s32.totalorder %s87, %s90
    %p96 = scmp.eq.s32.totalorder %s9, 0
    %p97 = por %p95, %p96
    %p98 = scmp.ne.s32.totalorder %s87, %s90
    %p99 = scmp.eq.s32.totalorder %s14, 1
    %p100 = por %p98, %p99
    %p101 = scmp.ne.s32.totalorder %s90, %s91
    %p102 = scmp.eq.s32.totalorder %s14, 0
    %p103 = por %p101, %p102
    %p104 = scmp.ne.s32.totalorder %s90, %s91
    %p105 = scmp.eq.s32.totalorder %s15, 1
    %p106 = por %p104, %p105
    %p108 = scmp.ne.s32.totalorder %s91, %s107
    %p109 = scmp.eq.s32.totalorder %s15, 0
    %p110 = por %p108, %p109
    %p111 = scmp.le.s32.totalorder 1, %s9
    %p112 = scmp.lt.s32.totalorder %s9, 3
    %p113 = pnand %p111, %p112
    %p114 = pneg %p113
    // Predicated region
    $region9: #{cnn_forward.4} parent=5 // pred_check
      _
    $region10: #{cnn_forward.4} parent=5 // pred_check_branch
      %116 = sbr.rel (%p113) target = $region12
    $region11: #{cnn_forward.4} parent=5 // pred_region
      %s117 = ssub.s32 %s9, 1
      // Predicated region
      $region13: #{cnn_forward.4} parent=11 // pred_check
        %p118 = pneg %p56
      $region14: #{cnn_forward.4} parent=11 // pred_check_branch
        %120 = sbr.rel (%p118) target = $region16
      $region15: #{cnn_forward.4} parent=11 // pred_region
        _
      $region16: #{cnn_forward.4} parent=11 // pred_fallthru
        _
      // Predicated region
      $region17: #{cnn_forward.4} parent=11 // pred_check
        %p121 = pneg %p77
      $region18: #{cnn_forward.4} parent=11 // pred_check_branch
        %123 = sbr.rel (%p121) target = $region20
      $region19: #{cnn_forward.4} parent=11 // pred_region
        _
      $region20: #{cnn_forward.4} parent=11 // pred_fallthru
        _
    $region12: #{cnn_forward.4} parent=5 // pred_fallthru
      _
    %p124 = scmp.lt.s32.totalorder %s9, 2
    // Predicated region
    $region21: #{cnn_forward.4} parent=5 // pred_check
      %p125 = pneg %p124
    $region22: #{cnn_forward.4} parent=5 // pred_check_branch
      %127 = sbr.rel (%p125) target = $region24
    $region23: #{cnn_forward.4} parent=5 // pred_region
      // Predicated region
      $region25: #{cnn_forward.4} parent=23 // pred_check
        %p128 = pneg %p29
      $region26: #{cnn_forward.4} parent=23 // pred_check_branch
        %130 = sbr.rel (%p128) target = $region28
      $region27: #{cnn_forward.4} parent=23 // pred_region
        %s131 = smul.u32 32, %s9
        %p132 = scmp.lt.s32.totalorder %s131, 63
        %s133 = scalar_select %p132, %s131, 63
        %s134 = smul.addr %s133, 4
        %s135 = scalar_lea.vmem %s0, %s134
        %s136 = smul.u32 32, %s9
      $region28: #{cnn_forward.4} parent=23 // pred_fallthru
        _
    $region24: #{cnn_forward.4} parent=5 // pred_fallthru
      _
    %p137 = scmp.le.s32.totalorder 1, %s9
    %p138 = scmp.lt.s32.totalorder %s9, 3
    %p139 = pnand %p137, %p138
    %p140 = pneg %p139
    // Predicated region
    $region29: #{cnn_forward.4} parent=5 // pred_check
      _
    $region30: #{cnn_forward.4} parent=5 // pred_check_branch
      %142 = sbr.rel (%p139) target = $region32
    $region31: #{cnn_forward.4} parent=5 // pred_region
      %s143 = ssub.s32 %s9, 1
      %s144 = smul.u32 32, %s14
      %p145 = scmp.lt.s32.totalorder %s144, 63
      %s146 = scalar_select %p145, %s144, 63
      %s147 = smul.addr %s146, 4
      %s148 = scalar_lea.vmem %s0, %s147
      %p149 = pneg %p35
      %p150 = pneg %p32
      %p151 = pneg %p56
      %p152 = pneg %p53
      %p153 = pneg %p77
      %p154 = pneg %p74
      %p155 = pneg %p103
      %p156 = pneg %p100
      %s157 = smul.u32 32, %s14
      %p158 = scmp.lt.s32.totalorder %s157, 63
      %s159 = scalar_select %p158, %s157, 63
      %s160 = smul.addr %s159, 8
      %s161 = scalar_lea.vmem %s3, %s160
      %s162 = smul.u32 32, %s14
      %p163 = scmp.lt.s32.totalorder %s162, 63
      %s164 = scalar_select %p163, %s162, 63
      %s165 = smul.addr %s164, 4
      %s166 = scalar_lea.vmem %s0, %s165
      %s167 = smul.u32 32, %s14
      %s168 = smul.u32 32, %s14
      %p169 = scmp.lt.s32.totalorder %s168, 63
      %s170 = scalar_select %p169, %s168, 63
      %s171 = smul.addr %s170, 8
      %s172 = scalar_lea.vmem %s3, %s171
      %s173 = smul.u32 32, %s14
      %v175 = vld [vmem:[%s166] sm:$0xf]
      %v176 = vld [vmem:[%s166 + $0x4] sm:$0xf]
      %v177 = vld [vmem:[%s166 + $0x8] sm:$0xf]
      %v178 = vld [vmem:[%s166 + $0xc] sm:$0xf]
      %v179 = vld [vmem:[%s166 + $0x10] sm:$0xf]
      %v180 = vld [vmem:[%s166 + $0x14] sm:$0xf]
      %v181 = vld [vmem:[%s166 + $0x18] sm:$0xf]
      %v182 = vld [vmem:[%s166 + $0x1c] sm:$0xf]
      %v183 = vld [vmem:[%s166 + $0x20] sm:$0xf]
      %v184 = vld [vmem:[%s166 + $0x24] sm:$0xf]
      %v185 = vld [vmem:[%s166 + $0x28] sm:$0xf]
      %v186 = vld [vmem:[%s166 + $0x2c] sm:$0xf]
      %v187 = vld [vmem:[%s166 + $0x30] sm:$0xf]
      %v188 = vld [vmem:[%s166 + $0x34] sm:$0xf]
      %v189 = vld [vmem:[%s166 + $0x38] sm:$0xf]
      %v190 = vld [vmem:[%s166 + $0x3c] sm:$0xf]
      %v191 = vld [vmem:[%s166 + $0x40] sm:$0xf]
      %v192 = vld [vmem:[%s166 + $0x44] sm:$0xf]
      %v193 = vld [vmem:[%s166 + $0x48] sm:$0xf]
      %v194 = vld [vmem:[%s166 + $0x4c] sm:$0xf]
      %v195 = vld [vmem:[%s166 + $0x50] sm:$0xf]
      %v196 = vld [vmem:[%s166 + $0x54] sm:$0xf]
      %v197 = vld [vmem:[%s166 + $0x58] sm:$0xf]
      %v198 = vld [vmem:[%s166 + $0x5c] sm:$0xf]
      %v199 = vld [vmem:[%s166 + $0x60] sm:$0xf]
      %v200 = vld [vmem:[%s166 + $0x64] sm:$0xf]
      %v201 = vld [vmem:[%s166 + $0x68] sm:$0xf]
      %v202 = vld [vmem:[%s166 + $0x6c] sm:$0xf]
      %v203 = vld [vmem:[%s166 + $0x70] sm:$0xf]
      %v204 = vld [vmem:[%s166 + $0x74] sm:$0xf]
      %v205 = vld [vmem:[%s166 + $0x78] sm:$0xf]
      %v206 = vld [vmem:[%s166 + $0x7c] sm:$0xf]
      %v207 = vld [vmem:[%s1] sm:$0xf]
      %v208 = vld [vmem:[%s1 + $0x4] sm:$0xf]
      %v209 = vld [vmem:[%s1 + $0x8] sm:$0xf]
      %v210 = vld [vmem:[%s1 + $0xc] sm:$0xf]
      %v211 = vld [vmem:[%s1 + $0x10] sm:$0xf]
      %v212 = vld [vmem:[%s1 + $0x14] sm:$0xf]
      %v245 = vunpack.c.l.b16 %v175
      %v246 = vunpack.c.l.b16 %v176
      %v247 = vunpack.c.l.b16 %v177
      %v248 = vunpack.c.l.b16 %v178
      %v249 = vunpack.c.l.b16 %v179
      %v250 = vunpack.c.l.b16 %v180
      %v251 = vunpack.c.l.b16 %v181
      %v252 = vunpack.c.l.b16 %v182
      %v253 = vunpack.c.l.b16 %v183
      %v254 = vunpack.c.l.b16 %v184
      %v255 = vunpack.c.l.b16 %v185
      %v256 = vunpack.c.l.b16 %v186
      %v257 = vunpack.c.l.b16 %v187
      %v258 = vunpack.c.l.b16 %v188
      %v259 = vunpack.c.l.b16 %v189
      %v260 = vunpack.c.l.b16 %v190
      %v261 = vunpack.c.l.b16 %v191
      %v262 = vunpack.c.l.b16 %v192
      %v263 = vunpack.c.l.b16 %v193
      %v264 = vunpack.c.l.b16 %v194
      %v265 = vunpack.c.l.b16 %v195
      %v266 = vunpack.c.l.b16 %v196
      %v267 = vunpack.c.l.b16 %v197
      %v268 = vunpack.c.l.b16 %v198
      %v269 = vunpack.c.l.b16 %v199
      %v270 = vunpack.c.l.b16 %v200
      %v271 = vunpack.c.l.b16 %v201
      %v272 = vunpack.c.l.b16 %v202
      %v273 = vunpack.c.l.b16 %v203
      %v274 = vunpack.c.l.b16 %v204
      %v275 = vunpack.c.l.b16 %v205
      %v276 = vunpack.c.l.b16 %v206
      %v277 = vpack.c.b16 %v246, %v245
      %v278 = vpack.c.b16 %v248, %v247
      %v279 = vpack.c.b16 %v250, %v249
      %v280 = vpack.c.b16 %v252, %v251
      %v281 = vpack.c.b16 %v254, %v253
      %v282 = vpack.c.b16 %v256, %v255
      %v283 = vpack.c.b16 %v258, %v257
      %v284 = vpack.c.b16 %v260, %v259
      %v285 = vpack.c.b16 %v262, %v261
      %v286 = vpack.c.b16 %v264, %v263
      %v287 = vpack.c.b16 %v266, %v265
      %v288 = vpack.c.b16 %v268, %v267
      %v289 = vpack.c.b16 %v270, %v269
      %v290 = vpack.c.b16 %v272, %v271
      %v291 = vpack.c.b16 %v274, %v273
      %v292 = vpack.c.b16 %v276, %v275
      %v299 = vunpack.c.l.b16 %v207
      %v300 = vunpack.c.l.b16 %v208
      %v301 = vunpack.c.l.b16 %v209
      %v302 = vunpack.c.l.b16 %v210
      %v303 = vunpack.c.l.b16 %v211
      %v304 = vunpack.c.l.b16 %v212
      %v305 = vpack.c.b16 %v300, %v299
      %v306 = vpack.c.b16 %v302, %v301
      %v307 = vpack.c.b16 %v304, %v303
      %vm311 = vcmask 392192
      %v313 = vsel %vm311, %v277, 0
      %v316 = vsel %vm311, %v278, 0
      %v319 = vsel %vm311, %v279, 0
      %v322 = vsel %vm311, %v280, 0
      %v325 = vsel %vm311, %v281, 0
      %v328 = vsel %vm311, %v282, 0
      %v331 = vsel %vm311, %v283, 0
      %v334 = vsel %vm311, %v284, 0
      %v337 = vsel %vm311, %v285, 0
      %v340 = vsel %vm311, %v286, 0
      %v343 = vsel %vm311, %v287, 0
      %v346 = vsel %vm311, %v288, 0
      %v349 = vsel %vm311, %v289, 0
      %v352 = vsel %vm311, %v290, 0
      %v355 = vsel %vm311, %v291, 0
      %v358 = vsel %vm311, %v292, 0
      %360 = vmatprep.subr.bf16.mxu0 0
      %361 = vmatpush1.bf16.msra.mxu0 0
      %362 = vmatprep.subr.bf16.mxu0 0
      %363 = vmatpush1.bf16.msra.mxu0 0
      %364 = vmatprep.subr.bf16.mxu0 0
      %365 = vmatpush1.bf16.msra.mxu0 0
      %366 = vmatprep.subr.bf16.mxu0 0
      %367 = vmatpush1.bf16.msra.mxu0 0
      %368 = vmatprep.subr.bf16.mxu0 0
      %369 = vmatpush1.bf16.msra.mxu0 0
      %370 = vmatprep.subr.bf16.mxu0 0
      %371 = vmatpush1.bf16.msra.mxu0 %v307
      %372 = vmatprep.subr.bf16.mxu0 0
      %373 = vmatpush1.bf16.msra.mxu0 %v306
      %374 = vmatprep.subr.bf16.mxu0 0
      %375 = vmatpush1.bf16.msra.mxu0 %v305
      %376 = vmatprep.subr.bf16.mxu0 0
      %377 = vmatpush2.bf16.msra.mxu0 0
      %378 = vmatprep.subr.bf16.mxu0 0
      %379 = vmatpush2.bf16.msra.mxu0 0
      %380 = vmatprep.subr.bf16.mxu0 0
      %381 = vmatpush2.bf16.msra.mxu0 0
      %382 = vmatprep.subr.bf16.mxu0 0
      %383 = vmatpush2.bf16.msra.mxu0 0
      %384 = vmatprep.subr.bf16.mxu0 0
      %385 = vmatpush2.bf16.msra.mxu0 0
      %386 = vmatprep.subr.bf16.mxu0 0
      %387 = vmatpush2.bf16.msra.mxu0 0
      %388 = vmatprep.subr.bf16.mxu0 0
      %389 = vmatpush2.bf16.msra.mxu0 0
      %390 = vmatprep.subr.bf16.mxu0 0
      %391 = vmatpush2.bf16.msra.mxu0 0
      %392 = vmatprep.mubr.bf16.mxu0 0
      %393 = vmatmul.mubr.bf16.gmra.mxu0 %v313
      %v394 = vpop.f32.mrf.mxu0
      %v395 = vadd.f32 0.0, %v394
      %v396 = vpop.f32.mrf.mxu0
      %v397 = vpop.f32.mrf.mxu0
      %v398 = vadd.f32 0.0, %v397
      %v399 = vpop.f32.mrf.mxu0
      %400 = vmatprep.mubr.bf16.mxu0 0
      %401 = vmatmul.mubr.bf16.gmra.mxu0 %v316
      %v402 = vpop.f32.mrf.mxu0
      %v403 = vadd.f32 0.0, %v402
      %v404 = vpop.f32.mrf.mxu0
      %v405 = vpop.f32.mrf.mxu0
      %v406 = vadd.f32 0.0, %v405
      %v407 = vpop.f32.mrf.mxu0
      %408 = vmatprep.mubr.bf16.mxu0 0
      %409 = vmatmul.mubr.bf16.gmra.mxu0 %v319
      %v410 = vpop.f32.mrf.mxu0
      %v411 = vadd.f32 0.0, %v410
      %v412 = vpop.f32.mrf.mxu0
      %v413 = vpop.f32.mrf.mxu0
      %v414 = vadd.f32 0.0, %v413
      %v415 = vpop.f32.mrf.mxu0
      %416 = vmatprep.mubr.bf16.mxu0 0
      %417 = vmatmul.mubr.bf16.gmra.mxu0 %v322
      %v418 = vpop.f32.mrf.mxu0
      %v419 = vadd.f32 0.0, %v418
      %v420 = vpop.f32.mrf.mxu0
      %v421 = vpop.f32.mrf.mxu0
      %v422 = vadd.f32 0.0, %v421
      %v423 = vpop.f32.mrf.mxu0
      %424 = vmatprep.mubr.bf16.mxu0 0
      %425 = vmatmul.mubr.bf16.gmra.mxu0 %v325
      %v426 = vpop.f32.mrf.mxu0
      %v427 = vadd.f32 0.0, %v426
      %v428 = vpop.f32.mrf.mxu0
      %v429 = vpop.f32.mrf.mxu0
      %v430 = vadd.f32 0.0, %v429
      %v431 = vpop.f32.mrf.mxu0
      %432 = vmatprep.mubr.bf16.mxu0 0
      %433 = vmatmul.mubr.bf16.gmra.mxu0 %v328
      %v434 = vpop.f32.mrf.mxu0
      %v435 = vadd.f32 0.0, %v434
      %v436 = vpop.f32.mrf.mxu0
      %v437 = vpop.f32.mrf.mxu0
      %v438 = vadd.f32 0.0, %v437
      %v439 = vpop.f32.mrf.mxu0
      %440 = vmatprep.mubr.bf16.mxu0 0
      %441 = vmatmul.mubr.bf16.gmra.mxu0 %v331
      %v442 = vpop.f32.mrf.mxu0
      %v443 = vadd.f32 0.0, %v442
      %v444 = vpop.f32.mrf.mxu0
      %v445 = vpop.f32.mrf.mxu0
      %v446 = vadd.f32 0.0, %v445
      %v447 = vpop.f32.mrf.mxu0
      %448 = vmatprep.mubr.bf16.mxu0 0
      %449 = vmatmul.mubr.bf16.gmra.mxu0 %v334
      %v450 = vpop.f32.mrf.mxu0
      %v451 = vadd.f32 0.0, %v450
      %v452 = vpop.f32.mrf.mxu0
      %v453 = vpop.f32.mrf.mxu0
      %v454 = vadd.f32 0.0, %v453
      %v455 = vpop.f32.mrf.mxu0
      %456 = vmatprep.mubr.bf16.mxu0 0
      %457 = vmatmul.mubr.bf16.gmra.mxu0 %v337
      %v458 = vpop.f32.mrf.mxu0
      %v459 = vadd.f32 0.0, %v458
      %v460 = vpop.f32.mrf.mxu0
      %v461 = vpop.f32.mrf.mxu0
      %v462 = vadd.f32 0.0, %v461
      %v463 = vpop.f32.mrf.mxu0
      %464 = vmatprep.mubr.bf16.mxu0 0
      %465 = vmatmul.mubr.bf16.gmra.mxu0 %v340
      %v466 = vpop.f32.mrf.mxu0
      %v467 = vadd.f32 0.0, %v466
      %v468 = vpop.f32.mrf.mxu0
      %v469 = vpop.f32.mrf.mxu0
      %v470 = vadd.f32 0.0, %v469
      %v471 = vpop.f32.mrf.mxu0
      %472 = vmatprep.mubr.bf16.mxu0 0
      %473 = vmatmul.mubr.bf16.gmra.mxu0 %v343
      %v474 = vpop.f32.mrf.mxu0
      %v475 = vadd.f32 0.0, %v474
      %v476 = vpop.f32.mrf.mxu0
      %v477 = vpop.f32.mrf.mxu0
      %v478 = vadd.f32 0.0, %v477
      %v479 = vpop.f32.mrf.mxu0
      %480 = vmatprep.mubr.bf16.mxu0 0
      %481 = vmatmul.mubr.bf16.gmra.mxu0 %v346
      %v482 = vpop.f32.mrf.mxu0
      %v483 = vadd.f32 0.0, %v482
      %v484 = vpop.f32.mrf.mxu0
      %v485 = vpop.f32.mrf.mxu0
      %v486 = vadd.f32 0.0, %v485
      %v487 = vpop.f32.mrf.mxu0
      %488 = vmatprep.mubr.bf16.mxu0 0
      %489 = vmatmul.mubr.bf16.gmra.mxu0 %v349
      %v490 = vpop.f32.mrf.mxu0
      %v491 = vadd.f32 0.0, %v490
      %v492 = vpop.f32.mrf.mxu0
      %v493 = vpop.f32.mrf.mxu0
      %v494 = vadd.f32 0.0, %v493
      %v495 = vpop.f32.mrf.mxu0
      %496 = vmatprep.mubr.bf16.mxu0 0
      %497 = vmatmul.mubr.bf16.gmra.mxu0 %v352
      %v498 = vpop.f32.mrf.mxu0
      %v499 = vadd.f32 0.0, %v498
      %v500 = vpop.f32.mrf.mxu0
      %v501 = vpop.f32.mrf.mxu0
      %v502 = vadd.f32 0.0, %v501
      %v503 = vpop.f32.mrf.mxu0
      %504 = vmatprep.mubr.bf16.mxu0 0
      %505 = vmatmul.mubr.bf16.gmra.mxu0 %v355
      %v506 = vpop.f32.mrf.mxu0
      %v507 = vadd.f32 0.0, %v506
      %v508 = vpop.f32.mrf.mxu0
      %v509 = vpop.f32.mrf.mxu0
      %v510 = vadd.f32 0.0, %v509
      %v511 = vpop.f32.mrf.mxu0
      %512 = vmatprep.mubr.bf16.mxu0 0
      %513 = vmatmul.mubr.bf16.gmra.mxu0 %v358
      %v514 = vpop.f32.mrf.mxu0
      %v515 = vadd.f32 0.0, %v514
      %v516 = vpop.f32.mrf.mxu0
      %v517 = vpop.f32.mrf.mxu0
      %v518 = vadd.f32 0.0, %v517
      %v519 = vpop.f32.mrf.mxu0
      %520 = vdwg.mxu0
      %553 = vrot.lane.b32.xlu0 %v395, 96
      %v554 = vpop.permute.xlu0 %553
      %555 = vrot.lane.b32.xlu0 %v398, 96
      %v556 = vpop.permute.xlu0 %555
      %557 = vrot.lane.b32.xlu0 %v403, 96
      %v558 = vpop.permute.xlu0 %557
      %559 = vrot.lane.b32.xlu0 %v406, 96
      %v560 = vpop.permute.xlu0 %559
      %561 = vrot.lane.b32.xlu0 %v411, 96
      %v562 = vpop.permute.xlu0 %561
      %563 = vrot.lane.b32.xlu0 %v414, 96
      %v564 = vpop.permute.xlu0 %563
      %565 = vrot.lane.b32.xlu0 %v419, 96
      %v566 = vpop.permute.xlu0 %565
      %567 = vrot.lane.b32.xlu0 %v422, 96
      %v568 = vpop.permute.xlu0 %567
      %569 = vrot.lane.b32.xlu0 %v427, 96
      %v570 = vpop.permute.xlu0 %569
      %571 = vrot.lane.b32.xlu0 %v430, 96
      %v572 = vpop.permute.xlu0 %571
      %573 = vrot.lane.b32.xlu0 %v435, 96
      %v574 = vpop.permute.xlu0 %573
      %575 = vrot.lane.b32.xlu0 %v438, 96
      %v576 = vpop.permute.xlu0 %575
      %577 = vrot.lane.b32.xlu0 %v443, 96
      %v578 = vpop.permute.xlu0 %577
      %579 = vrot.lane.b32.xlu0 %v446, 96
      %v580 = vpop.permute.xlu0 %579
      %581 = vrot.lane.b32.xlu0 %v451, 96
      %v582 = vpop.permute.xlu0 %581
      %583 = vrot.lane.b32.xlu0 %v454, 96
      %v584 = vpop.permute.xlu0 %583
      %585 = vrot.lane.b32.xlu0 %v459, 96
      %v586 = vpop.permute.xlu0 %585
      %587 = vrot.lane.b32.xlu0 %v462, 96
      %v588 = vpop.permute.xlu0 %587
      %589 = vrot.lane.b32.xlu0 %v467, 96
      %v590 = vpop.permute.xlu0 %589
      %591 = vrot.lane.b32.xlu0 %v470, 96
      %v592 = vpop.permute.xlu0 %591
      %593 = vrot.lane.b32.xlu0 %v475, 96
      %v594 = vpop.permute.xlu0 %593
      %595 = vrot.lane.b32.xlu0 %v478, 96
      %v596 = vpop.permute.xlu0 %595
      %597 = vrot.lane.b32.xlu0 %v483, 96
      %v598 = vpop.permute.xlu0 %597
      %599 = vrot.lane.b32.xlu0 %v486, 96
      %v600 = vpop.permute.xlu0 %599
      %601 = vrot.lane.b32.xlu0 %v491, 96
      %v602 = vpop.permute.xlu0 %601
      %603 = vrot.lane.b32.xlu0 %v494, 96
      %v604 = vpop.permute.xlu0 %603
      %605 = vrot.lane.b32.xlu0 %v499, 96
      %v606 = vpop.permute.xlu0 %605
      %607 = vrot.lane.b32.xlu0 %v502, 96
      %v608 = vpop.permute.xlu0 %607
      %609 = vrot.lane.b32.xlu0 %v507, 96
      %v610 = vpop.permute.xlu0 %609
      %611 = vrot.lane.b32.xlu0 %v510, 96
      %v612 = vpop.permute.xlu0 %611
      %613 = vrot.lane.b32.xlu0 %v515, 96
      %v614 = vpop.permute.xlu0 %613
      %615 = vrot.lane.b32.xlu0 %v518, 96
      %v616 = vpop.permute.xlu0 %615
      %v649 = vmax.f32 %v395, %v554
      %v650 = vmax.f32 %v398, %v556
      %v651 = vmax.f32 %v403, %v558
      %v652 = vmax.f32 %v406, %v560
      %v653 = vmax.f32 %v411, %v562
      %v654 = vmax.f32 %v414, %v564
      %v655 = vmax.f32 %v419, %v566
      %v656 = vmax.f32 %v422, %v568
      %v657 = vmax.f32 %v427, %v570
      %v658 = vmax.f32 %v430, %v572
      %v659 = vmax.f32 %v435, %v574
      %v660 = vmax.f32 %v438, %v576
      %v661 = vmax.f32 %v443, %v578
      %v662 = vmax.f32 %v446, %v580
      %v663 = vmax.f32 %v451, %v582
      %v664 = vmax.f32 %v454, %v584
      %v665 = vmax.f32 %v459, %v586
      %v666 = vmax.f32 %v462, %v588
      %v667 = vmax.f32 %v467, %v590
      %v668 = vmax.f32 %v470, %v592
      %v669 = vmax.f32 %v475, %v594
      %v670 = vmax.f32 %v478, %v596
      %v671 = vmax.f32 %v483, %v598
      %v672 = vmax.f32 %v486, %v600
      %v673 = vmax.f32 %v491, %v602
      %v674 = vmax.f32 %v494, %v604
      %v675 = vmax.f32 %v499, %v606
      %v676 = vmax.f32 %v502, %v608
      %v677 = vmax.f32 %v507, %v610
      %v678 = vmax.f32 %v510, %v612
      %v679 = vmax.f32 %v515, %v614
      %v680 = vmax.f32 %v518, %v616
      %713 = vrot.lane.b32.xlu0 %v649, 64
      %v714 = vpop.permute.xlu0 %713
      %715 = vrot.lane.b32.xlu0 %v650, 64
      %v716 = vpop.permute.xlu0 %715
      %717 = vrot.lane.b32.xlu0 %v651, 64
      %v718 = vpop.permute.xlu0 %717
      %719 = vrot.lane.b32.xlu0 %v652, 64
      %v720 = vpop.permute.xlu0 %719
      %721 = vrot.lane.b32.xlu0 %v653, 64
      %v722 = vpop.permute.xlu0 %721
      %723 = vrot.lane.b32.xlu0 %v654, 64
      %v724 = vpop.permute.xlu0 %723
      %725 = vrot.lane.b32.xlu0 %v655, 64
      %v726 = vpop.permute.xlu0 %725
      %727 = vrot.lane.b32.xlu0 %v656, 64
      %v728 = vpop.permute.xlu0 %727
      %729 = vrot.lane.b32.xlu0 %v657, 64
      %v730 = vpop.permute.xlu0 %729
      %731 = vrot.lane.b32.xlu0 %v658, 64
      %v732 = vpop.permute.xlu0 %731
      %733 = vrot.lane.b32.xlu0 %v659, 64
      %v734 = vpop.permute.xlu0 %733
      %735 = vrot.lane.b32.xlu0 %v660, 64
      %v736 = vpop.permute.xlu0 %735
      %737 = vrot.lane.b32.xlu0 %v661, 64
      %v738 = vpop.permute.xlu0 %737
      %739 = vrot.lane.b32.xlu0 %v662, 64
      %v740 = vpop.permute.xlu0 %739
      %741 = vrot.lane.b32.xlu0 %v663, 64
      %v742 = vpop.permute.xlu0 %741
      %743 = vrot.lane.b32.xlu0 %v664, 64
      %v744 = vpop.permute.xlu0 %743
      %745 = vrot.lane.b32.xlu0 %v665, 64
      %v746 = vpop.permute.xlu0 %745
      %747 = vrot.lane.b32.xlu0 %v666, 64
      %v748 = vpop.permute.xlu0 %747
      %749 = vrot.lane.b32.xlu0 %v667, 64
      %v750 = vpop.permute.xlu0 %749
      %751 = vrot.lane.b32.xlu0 %v668, 64
      %v752 = vpop.permute.xlu0 %751
      %753 = vrot.lane.b32.xlu0 %v669, 64
      %v754 = vpop.permute.xlu0 %753
      %755 = vrot.lane.b32.xlu0 %v670, 64
      %v756 = vpop.permute.xlu0 %755
      %757 = vrot.lane.b32.xlu0 %v671, 64
      %v758 = vpop.permute.xlu0 %757
      %759 = vrot.lane.b32.xlu0 %v672, 64
      %v760 = vpop.permute.xlu0 %759
      %761 = vrot.lane.b32.xlu0 %v673, 64
      %v762 = vpop.permute.xlu0 %761
      %763 = vrot.lane.b32.xlu0 %v674, 64
      %v764 = vpop.permute.xlu0 %763
      %765 = vrot.lane.b32.xlu0 %v675, 64
      %v766 = vpop.permute.xlu0 %765
      %767 = vrot.lane.b32.xlu0 %v676, 64
      %v768 = vpop.permute.xlu0 %767
      %769 = vrot.lane.b32.xlu0 %v677, 64
      %v770 = vpop.permute.xlu0 %769
      %771 = vrot.lane.b32.xlu0 %v678, 64
      %v772 = vpop.permute.xlu0 %771
      %773 = vrot.lane.b32.xlu0 %v679, 64
      %v774 = vpop.permute.xlu0 %773
      %775 = vrot.lane.b32.xlu0 %v680, 64
      %v776 = vpop.permute.xlu0 %775
      %v809 = vmax.f32 %v649, %v714
      %v810 = vmax.f32 %v650, %v716
      %v811 = vmax.f32 %v651, %v718
      %v812 = vmax.f32 %v652, %v720
      %v813 = vmax.f32 %v653, %v722
      %v814 = vmax.f32 %v654, %v724
      %v815 = vmax.f32 %v655, %v726
      %v816 = vmax.f32 %v656, %v728
      %v817 = vmax.f32 %v657, %v730
      %v818 = vmax.f32 %v658, %v732
      %v819 = vmax.f32 %v659, %v734
      %v820 = vmax.f32 %v660, %v736
      %v821 = vmax.f32 %v661, %v738
      %v822 = vmax.f32 %v662, %v740
      %v823 = vmax.f32 %v663, %v742
      %v824 = vmax.f32 %v664, %v744
      %v825 = vmax.f32 %v665, %v746
      %v826 = vmax.f32 %v666, %v748
      %v827 = vmax.f32 %v667, %v750
      %v828 = vmax.f32 %v668, %v752
      %v829 = vmax.f32 %v669, %v754
      %v830 = vmax.f32 %v670, %v756
      %v831 = vmax.f32 %v671, %v758
      %v832 = vmax.f32 %v672, %v760
      %v833 = vmax.f32 %v673, %v762
      %v834 = vmax.f32 %v674, %v764
      %v835 = vmax.f32 %v675, %v766
      %v836 = vmax.f32 %v676, %v768
      %v837 = vmax.f32 %v677, %v770
      %v838 = vmax.f32 %v678, %v772
      %v839 = vmax.f32 %v679, %v774
      %v840 = vmax.f32 %v680, %v776
      %v841 = vld [vmem:[%s2] sm:$0x1]
      %v843 = vlaneseq
      %v844 = vshrl.u32 %v843, 7
      %v845 = vsub.s32 0, %v844
      %v846 = vrot.slane %v841, %v845
      %v848 = vadd.f32 %v809, %v846
      %v849 = vadd.f32 %v810, %v846
      %v850 = vadd.f32 %v811, %v846
      %v851 = vadd.f32 %v812, %v846
      %v852 = vadd.f32 %v813, %v846
      %v853 = vadd.f32 %v814, %v846
      %v854 = vadd.f32 %v815, %v846
      %v855 = vadd.f32 %v816, %v846
      %v856 = vadd.f32 %v817, %v846
      %v857 = vadd.f32 %v818, %v846
      %v858 = vadd.f32 %v819, %v846
      %v859 = vadd.f32 %v820, %v846
      %v860 = vadd.f32 %v821, %v846
      %v861 = vadd.f32 %v822, %v846
      %v862 = vadd.f32 %v823, %v846
      %v863 = vadd.f32 %v824, %v846
      %v864 = vadd.f32 %v825, %v846
      %v865 = vadd.f32 %v826, %v846
      %v866 = vadd.f32 %v827, %v846
      %v867 = vadd.f32 %v828, %v846
      %v868 = vadd.f32 %v829, %v846
      %v869 = vadd.f32 %v830, %v846
      %v870 = vadd.f32 %v831, %v846
      %v871 = vadd.f32 %v832, %v846
      %v872 = vadd.f32 %v833, %v846
      %v873 = vadd.f32 %v834, %v846
      %v874 = vadd.f32 %v835, %v846
      %v875 = vadd.f32 %v836, %v846
      %v876 = vadd.f32 %v837, %v846
      %v877 = vadd.f32 %v838, %v846
      %v878 = vadd.f32 %v839, %v846
      %v879 = vadd.f32 %v840, %v846
      %v880 = vmax.f32 %v848, 0.0
      %v881 = vmax.f32 %v849, 0.0
      %v882 = vmax.f32 %v850, 0.0
      %v883 = vmax.f32 %v851, 0.0
      %v884 = vmax.f32 %v852, 0.0
      %v885 = vmax.f32 %v853, 0.0
      %v886 = vmax.f32 %v854, 0.0
      %v887 = vmax.f32 %v855, 0.0
      %v888 = vmax.f32 %v856, 0.0
      %v889 = vmax.f32 %v857, 0.0
      %v890 = vmax.f32 %v858, 0.0
      %v891 = vmax.f32 %v859, 0.0
      %v892 = vmax.f32 %v860, 0.0
      %v893 = vmax.f32 %v861, 0.0
      %v894 = vmax.f32 %v862, 0.0
      %v895 = vmax.f32 %v863, 0.0
      %v896 = vmax.f32 %v864, 0.0
      %v897 = vmax.f32 %v865, 0.0
      %v898 = vmax.f32 %v866, 0.0
      %v899 = vmax.f32 %v867, 0.0
      %v900 = vmax.f32 %v868, 0.0
      %v901 = vmax.f32 %v869, 0.0
      %v902 = vmax.f32 %v870, 0.0
      %v903 = vmax.f32 %v871, 0.0
      %v904 = vmax.f32 %v872, 0.0
      %v905 = vmax.f32 %v873, 0.0
      %v906 = vmax.f32 %v874, 0.0
      %v907 = vmax.f32 %v875, 0.0
      %v908 = vmax.f32 %v876, 0.0
      %v909 = vmax.f32 %v877, 0.0
      %v910 = vmax.f32 %v878, 0.0
      %v911 = vmax.f32 %v879, 0.0
      %vm912 = vcmask 261120
      %913 = vst.msk [vmem:[%s172] sm:$0xff] %vm912, %v880
      %914 = vst.msk [vmem:[%s172 + $0x8] sm:$0xff] %vm912, %v881
      %915 = vst.msk [vmem:[%s172 + $0x10] sm:$0xff] %vm912, %v882
      %916 = vst.msk [vmem:[%s172 + $0x18] sm:$0xff] %vm912, %v883
      %917 = vst.msk [vmem:[%s172 + $0x20] sm:$0xff] %vm912, %v884
      %918 = vst.msk [vmem:[%s172 + $0x28] sm:$0xff] %vm912, %v885
      %919 = vst.msk [vmem:[%s172 + $0x30] sm:$0xff] %vm912, %v886
      %920 = vst.msk [vmem:[%s172 + $0x38] sm:$0xff] %vm912, %v887
      %921 = vst.msk [vmem:[%s172 + $0x40] sm:$0xff] %vm912, %v888
      %922 = vst.msk [vmem:[%s172 + $0x48] sm:$0xff] %vm912, %v889
      %923 = vst.msk [vmem:[%s172 + $0x50] sm:$0xff] %vm912, %v890
      %924 = vst.msk [vmem:[%s172 + $0x58] sm:$0xff] %vm912, %v891
      %925 = vst.msk [vmem:[%s172 + $0x60] sm:$0xff] %vm912, %v892
      %926 = vst.msk [vmem:[%s172 + $0x68] sm:$0xff] %vm912, %v893
      %927 = vst.msk [vmem:[%s172 + $0x70] sm:$0xff] %vm912, %v894
      %928 = vst.msk [vmem:[%s172 + $0x78] sm:$0xff] %vm912, %v895
      %929 = vst.msk [vmem:[%s172 + $0x80] sm:$0xff] %vm912, %v896
      %930 = vst.msk [vmem:[%s172 + $0x88] sm:$0xff] %vm912, %v897
      %931 = vst.msk [vmem:[%s172 + $0x90] sm:$0xff] %vm912, %v898
      %932 = vst.msk [vmem:[%s172 + $0x98] sm:$0xff] %vm912, %v899
      %933 = vst.msk [vmem:[%s172 + $0xa0] sm:$0xff] %vm912, %v900
      %934 = vst.msk [vmem:[%s172 + $0xa8] sm:$0xff] %vm912, %v901
      %935 = vst.msk [vmem:[%s172 + $0xb0] sm:$0xff] %vm912, %v902
      %936 = vst.msk [vmem:[%s172 + $0xb8] sm:$0xff] %vm912, %v903
      %937 = vst.msk [vmem:[%s172 + $0xc0] sm:$0xff] %vm912, %v904
      %938 = vst.msk [vmem:[%s172 + $0xc8] sm:$0xff] %vm912, %v905
      %939 = vst.msk [vmem:[%s172 + $0xd0] sm:$0xff] %vm912, %v906
      %940 = vst.msk [vmem:[%s172 + $0xd8] sm:$0xff] %vm912, %v907
      %941 = vst.msk [vmem:[%s172 + $0xe0] sm:$0xff] %vm912, %v908
      %942 = vst.msk [vmem:[%s172 + $0xe8] sm:$0xff] %vm912, %v909
      %943 = vst.msk [vmem:[%s172 + $0xf0] sm:$0xff] %vm912, %v910
      %944 = vst.msk [vmem:[%s172 + $0xf8] sm:$0xff] %vm912, %v911
      %s945 = smul.u32 32, %s14
      %p946 = scmp.lt.s32.totalorder %s945, 63
      %s947 = scalar_select %p946, %s945, 63
      %s948 = smul.addr %s947, 8
      %s949 = scalar_lea.vmem %s3, %s948
      // Predicated region
      $region33: #{cnn_forward.4} parent=31 // pred_check
        %p950 = pneg %p100
      $region34: #{cnn_forward.4} parent=31 // pred_check_branch
        %952 = sbr.rel (%p950) target = $region36
      $region35: #{cnn_forward.4} parent=31 // pred_region
        %s953 = smul.u32 32, %s14
      $region36: #{cnn_forward.4} parent=31 // pred_fallthru
        _
    $region32: #{cnn_forward.4} parent=5 // pred_fallthru
      _
    %p954 = scmp.le.s32.totalorder 2, %s9
    // Predicated region
    $region37: #{cnn_forward.4} parent=5 // pred_check
      %p955 = pneg %p954
    $region38: #{cnn_forward.4} parent=5 // pred_check_branch
      %957 = sbr.rel (%p955) target = $region40
    $region39: #{cnn_forward.4} parent=5 // pred_region
      %s958 = ssub.s32 %s9, 2
      // Predicated region
      $region41: #{cnn_forward.4} parent=39 // pred_check
        %p959 = pneg %p106
      $region42: #{cnn_forward.4} parent=39 // pred_check_branch
        %961 = sbr.rel (%p959) target = $region44
      $region43: #{cnn_forward.4} parent=39 // pred_region
        %s962 = smul.u32 32, %s15
        %p963 = scmp.lt.s32.totalorder %s962, 63
        %s964 = scalar_select %p963, %s962, 63
        %s965 = smul.addr %s964, 8
        %s966 = scalar_lea.vmem %s3, %s965
      $region44: #{cnn_forward.4} parent=39 // pred_fallthru
        _
    $region40: #{cnn_forward.4} parent=5 // pred_fallthru
      _
  $region6: #{cnn_forward.4} parent=0 // loop_footer
    %s13 = sadd.s32 1, %s9
  $region7: #{cnn_forward.4} parent=0 // loop_footer_branch
    %8 = sbr.rel target = $region3
  $region8: #{cnn_forward.4} parent=0 // loop_exit
    _

// kernel: cnn_forward.5
$region0: #{cnn_forward.5}
  #allocation0 [shape = 'u32[]', space=smem, size = 0x4, offset = 0x4, fixed_abs, tag = 'smem constant byte address 0x4 - core index']
  #allocation1 [shape = 'u32[144,128]{1,0:T(1,128)}', space=vmem, size = 0x12000, scoped, tag = 'internal scratch']
  %s0 = inlined_call_operand.vmem [shape: bf16[128,512], index: 0, kind: input, shape index: {}]
  %s1 = inlined_call_operand.vmem [shape: bf16[512,256], index: 1, kind: input, shape index: {}]
  %s2 = inlined_call_operand.vmem [shape: f32[1,64], index: 2, kind: input, shape index: {}]
  %s3 = inlined_call_operand.vmem [shape: f32[128,64], index: 3, kind: output, shape index: {}]
  %s4 = sld [smem:[#allocation0]]
  $region45: #{cnn_forward.5} parent=0
    _
  %s6 = ssub.s32 1, %s4
  %s7 = scalar_select 0, %s6, %s4
  loop: start=0, step=1, limit=4
  $region2: #{cnn_forward.5} parent=0 // loop_pre_header
    _
  $region3: #{cnn_forward.5} parent=0 // loop_header
    %s9 = sphi 0, %s13
    %p10 = scmp.ge.s32.totalorder %s9, 4
    %s19 = sphi 0, %s21
    %s22 = sphi 0, %s19
    %s23 = sphi 0, %s22
    %s39 = sphi 0, %s23
    %s43 = sphi 0, %s43
    %s45 = sphi 0, %s43
    %s46 = sphi 0, %s45
    %s60 = sphi 0, %s46
    %s64 = sphi 0, %s64
    %s66 = sphi 0, %s64
    %s67 = sphi 0, %s66
    %s81 = sphi 0, %s67
    %s87 = sphi 0, %s89
    %s90 = sphi 0, %s87
    %s91 = sphi 0, %s90
    %s107 = sphi 0, %s91
  $region4: #{cnn_forward.5} parent=0 // loop_header_branch
    %12 = sbr.rel (%p10) target = $region8
  $region5: #{cnn_forward.5} parent=0 // loop_body
    %s14 = ssub.s32 %s9, 1
    %s15 = ssub.s32 %s9, 2
    %s16 = sadd.s32 %s9, 1
    %s17 = ssub.s32 %s9, %s16
    %p18 = scmp.eq.s32.totalorder %s17, 0
    %s20 = sadd.s32 %s19, 1
    %s21 = scalar_select %p18, %s19, %s20
    %p24 = pneg %p18
    %p25 = scmp.eq.s32.totalorder %s9, 1
    %p26 = por %p24, %p25
    %p27 = scmp.ne.s32.totalorder %s19, %s22
    %p28 = scmp.eq.s32.totalorder %s9, 0
    %p29 = por %p27, %p28
    %p30 = scmp.ne.s32.totalorder %s19, %s22
    %p31 = scmp.eq.s32.totalorder %s14, 1
    %p32 = por %p30, %p31
    %p33 = scmp.ne.s32.totalorder %s22, %s23
    %p34 = scmp.eq.s32.totalorder %s14, 0
    %p35 = por %p33, %p34
    %p36 = scmp.ne.s32.totalorder %s22, %s23
    %p37 = scmp.eq.s32.totalorder %s15, 1
    %p38 = por %p36, %p37
    %p40 = scmp.ne.s32.totalorder %s23, %s39
    %p41 = scmp.eq.s32.totalorder %s15, 0
    %p42 = por %p40, %p41
    %s44 = sadd.s32 %s43, 1
    %p47 = scmp.eq.s32.totalorder %s9, 1
    %p48 = scmp.ne.s32.totalorder %s43, %s45
    %p49 = scmp.eq.s32.totalorder %s9, 0
    %p50 = por %p48, %p49
    %p51 = scmp.ne.s32.totalorder %s43, %s45
    %p52 = scmp.eq.s32.totalorder %s14, 1
    %p53 = por %p51, %p52
    %p54 = scmp.ne.s32.totalorder %s45, %s46
    %p55 = scmp.eq.s32.totalorder %s14, 0
    %p56 = por %p54, %p55
    %p57 = scmp.ne.s32.totalorder %s45, %s46
    %p58 = scmp.eq.s32.totalorder %s15, 1
    %p59 = por %p57, %p58
    %p61 = scmp.ne.s32.totalorder %s46, %s60
    %p62 = scmp.eq.s32.totalorder %s15, 0
    %p63 = por %p61, %p62
    %s65 = sadd.s32 %s64, 1
    %p68 = scmp.eq.s32.totalorder %s9, 1
    %p69 = scmp.ne.s32.totalorder %s64, %s66
    %p70 = scmp.eq.s32.totalorder %s9, 0
    %p71 = por %p69, %p70
    %p72 = scmp.ne.s32.totalorder %s64, %s66
    %p73 = scmp.eq.s32.totalorder %s14, 1
    %p74 = por %p72, %p73
    %p75 = scmp.ne.s32.totalorder %s66, %s67
    %p76 = scmp.eq.s32.totalorder %s14, 0
    %p77 = por %p75, %p76
    %p78 = scmp.ne.s32.totalorder %s66, %s67
    %p79 = scmp.eq.s32.totalorder %s15, 1
    %p80 = por %p78, %p79
    %p82 = scmp.ne.s32.totalorder %s67, %s81
    %p83 = scmp.eq.s32.totalorder %s15, 0
    %p84 = por %p82, %p83
    %s85 = ssub.s32 %s9, %s16
    %p86 = scmp.eq.s32.totalorder %s85, 0
    %s88 = sadd.s32 %s87, 1
    %s89 = scalar_select %p86, %s87, %s88
    %p92 = pneg %p86
    %p93 = scmp.eq.s32.totalorder %s9, 1
    %p94 = por %p92, %p93
    %p95 = scmp.ne.s32.totalorder %s87, %s90
    %p96 = scmp.eq.s32.totalorder %s9, 0
    %p97 = por %p95, %p96
    %p98 = scmp.ne.s32.totalorder %s87, %s90
    %p99 = scmp.eq.s32.totalorder %s14, 1
    %p100 = por %p98, %p99
    %p101 = scmp.ne.s32.totalorder %s90, %s91
    %p102 = scmp.eq.s32.totalorder %s14, 0
    %p103 = por %p101, %p102
    %p104 = scmp.ne.s32.totalorder %s90, %s91
    %p105 = scmp.eq.s32.totalorder %s15, 1
    %p106 = por %p104, %p105
    %p108 = scmp.ne.s32.totalorder %s91, %s107
    %p109 = scmp.eq.s32.totalorder %s15, 0
    %p110 = por %p108, %p109
    %p111 = scmp.le.s32.totalorder 1, %s9
    %p112 = scmp.lt.s32.totalorder %s9, 3
    %p113 = pnand %p111, %p112
    %p114 = pneg %p113
    // Predicated region
    $region9: #{cnn_forward.5} parent=5 // pred_check
      _
    $region10: #{cnn_forward.5} parent=5 // pred_check_branch
      %116 = sbr.rel (%p113) target = $region12
    $region11: #{cnn_forward.5} parent=5 // pred_region
      %s117 = ssub.s32 %s9, 1
      // Predicated region
      $region13: #{cnn_forward.5} parent=11 // pred_check
        %p118 = pneg %p56
      $region14: #{cnn_forward.5} parent=11 // pred_check_branch
        %120 = sbr.rel (%p118) target = $region16
      $region15: #{cnn_forward.5} parent=11 // pred_region
        _
      $region16: #{cnn_forward.5} parent=11 // pred_fallthru
        _
      // Predicated region
      $region17: #{cnn_forward.5} parent=11 // pred_check
        %p121 = pneg %p77
      $region18: #{cnn_forward.5} parent=11 // pred_check_branch
        %123 = sbr.rel (%p121) target = $region20
      $region19: #{cnn_forward.5} parent=11 // pred_region
        _
      $region20: #{cnn_forward.5} parent=11 // pred_fallthru
        _
    $region12: #{cnn_forward.5} parent=5 // pred_fallthru
      _
    %p124 = scmp.lt.s32.totalorder %s9, 2
    // Predicated region
    $region21: #{cnn_forward.5} parent=5 // pred_check
      %p125 = pneg %p124
    $region22: #{cnn_forward.5} parent=5 // pred_check_branch
      %127 = sbr.rel (%p125) target = $region24
    $region23: #{cnn_forward.5} parent=5 // pred_region
      // Predicated region
      $region25: #{cnn_forward.5} parent=23 // pred_check
        %p128 = pneg %p29
      $region26: #{cnn_forward.5} parent=23 // pred_check_branch
        %130 = sbr.rel (%p128) target = $region28
      $region27: #{cnn_forward.5} parent=23 // pred_region
        %s131 = smul.u32 8, %s9
        %p132 = scmp.lt.s32.totalorder %s131, 15
        %s133 = scalar_select %p132, %s131, 15
        %s134 = smul.addr %s133, 4
        %s135 = smul.addr %s134, 4
        %s136 = scalar_lea.vmem %s0, %s135
        %s137 = smul.u32 8, %s9
      $region28: #{cnn_forward.5} parent=23 // pred_fallthru
        _
    $region24: #{cnn_forward.5} parent=5 // pred_fallthru
      _
    %p138 = scmp.le.s32.totalorder 1, %s9
    %p139 = scmp.lt.s32.totalorder %s9, 3
    %p140 = pnand %p138, %p139
    %p141 = pneg %p140
    // Predicated region
    $region29: #{cnn_forward.5} parent=5 // pred_check
      _
    $region30: #{cnn_forward.5} parent=5 // pred_check_branch
      %143 = sbr.rel (%p140) target = $region32
    $region31: #{cnn_forward.5} parent=5 // pred_region
      %s144 = ssub.s32 %s9, 1
      %s145 = smul.u32 8, %s14
      %p146 = scmp.lt.s32.totalorder %s145, 15
      %s147 = scalar_select %p146, %s145, 15
      %s148 = smul.addr %s147, 4
      %s149 = smul.addr %s148, 4
      %s150 = scalar_lea.vmem %s0, %s149
      %p151 = pneg %p35
      %p152 = pneg %p32
      %p153 = pneg %p56
      %p154 = pneg %p53
      %p155 = pneg %p77
      %p156 = pneg %p74
      %p157 = pneg %p103
      %p158 = pneg %p100
      %s159 = smul.u32 8, %s14
      %p160 = scmp.lt.s32.totalorder %s159, 15
      %s161 = scalar_select %p160, %s159, 15
      %s162 = smul.addr %s161, 8
      %s163 = scalar_lea.vmem %s3, %s162
      %s164 = smul.u32 8, %s14
      %p165 = scmp.lt.s32.totalorder %s164, 15
      %s166 = scalar_select %p165, %s164, 15
      %s167 = smul.addr %s166, 4
      %s168 = smul.addr %s167, 4
      %s169 = scalar_lea.vmem %s0, %s168
      %s170 = smul.u32 8, %s14
      %s171 = smul.u32 8, %s14
      %p172 = scmp.lt.s32.totalorder %s171, 15
      %s173 = scalar_select %p172, %s171, 15
      %s174 = smul.addr %s173, 8
      %s175 = scalar_lea.vmem %s3, %s174
      %s176 = smul.u32 8, %s14
      %v177 = vld [vmem:[%s169] sm:$0xff]
      %v178 = vld [vmem:[%s169 + $0x8] sm:$0xff]
      %v179 = vld [vmem:[%s169 + $0x10] sm:$0xff]
      %v180 = vld [vmem:[%s169 + $0x18] sm:$0xff]
      %v181 = vld [vmem:[%s169 + $0x20] sm:$0xff]
      %v182 = vld [vmem:[%s169 + $0x28] sm:$0xff]
      %v183 = vld [vmem:[%s169 + $0x30] sm:$0xff]
      %v184 = vld [vmem:[%s169 + $0x38] sm:$0xff]
      %v185 = vld [vmem:[%s169 + $0x40] sm:$0xff]
      %v186 = vld [vmem:[%s169 + $0x48] sm:$0xff]
      %v187 = vld [vmem:[%s169 + $0x50] sm:$0xff]
      %v188 = vld [vmem:[%s169 + $0x58] sm:$0xff]
      %v189 = vld [vmem:[%s169 + $0x60] sm:$0xff]
      %v190 = vld [vmem:[%s169 + $0x68] sm:$0xff]
      %v191 = vld [vmem:[%s169 + $0x70] sm:$0xff]
      %v192 = vld [vmem:[%s169 + $0x78] sm:$0xff]
      %v193 = vld [vmem:[%s1] sm:$0xff]
      %v194 = vld [vmem:[%s1 + $0x8] sm:$0xff]
      %v195 = vld [vmem:[%s1 + $0x10] sm:$0xff]
      %v196 = vld [vmem:[%s1 + $0x18] sm:$0xff]
      %v197 = vld [vmem:[%s1 + $0x20] sm:$0xff]
      %v198 = vld [vmem:[%s1 + $0x28] sm:$0xff]
      %v199 = vld [vmem:[%s1 + $0x30] sm:$0xff]
      %v200 = vld [vmem:[%s1 + $0x38] sm:$0xff]
      %v201 = vld [vmem:[%s1 + $0x40] sm:$0xff]
      %v202 = vld [vmem:[%s1 + $0x48] sm:$0xff]
      %v203 = vld [vmem:[%s1 + $0x50] sm:$0xff]
      %v204 = vld [vmem:[%s1 + $0x58] sm:$0xff]
      %v205 = vld [vmem:[%s1 + $0x60] sm:$0xff]
      %v206 = vld [vmem:[%s1 + $0x68] sm:$0xff]
      %v207 = vld [vmem:[%s1 + $0x70] sm:$0xff]
      %v208 = vld [vmem:[%s1 + $0x78] sm:$0xff]
      %v209 = vld [vmem:[%s1 + $0x80] sm:$0xff]
      %v210 = vld [vmem:[%s1 + $0x88] sm:$0xff]
      %v211 = vld [vmem:[%s1 + $0x90] sm:$0xff]
      %v212 = vld [vmem:[%s1 + $0x98] sm:$0xff]
      %v213 = vld [vmem:[%s1 + $0xa0] sm:$0xff]
      %v214 = vld [vmem:[%s1 + $0xa8] sm:$0xff]
      %v215 = vld [vmem:[%s1 + $0xb0] sm:$0xff]
      %v216 = vld [vmem:[%s1 + $0xb8] sm:$0xff]
      %v217 = vld [vmem:[%s1 + $0xc0] sm:$0xff]
      %v218 = vld [vmem:[%s1 + $0xc8] sm:$0xff]
      %v219 = vld [vmem:[%s1 + $0xd0] sm:$0xff]
      %v220 = vld [vmem:[%s1 + $0xd8] sm:$0xff]
      %v221 = vld [vmem:[%s1 + $0xe0] sm:$0xff]
      %v222 = vld [vmem:[%s1 + $0xe8] sm:$0xff]
      %v223 = vld [vmem:[%s1 + $0xf0] sm:$0xff]
      %v224 = vld [vmem:[%s1 + $0xf8] sm:$0xff]
      %v225 = vld [vmem:[%s1 + $0x100] sm:$0xff]
      %v226 = vld [vmem:[%s1 + $0x108] sm:$0xff]
      %v227 = vld [vmem:[%s1 + $0x110] sm:$0xff]
      %v228 = vld [vmem:[%s1 + $0x118] sm:$0xff]
      %v229 = vld [vmem:[%s1 + $0x120] sm:$0xff]
      %v230 = vld [vmem:[%s1 + $0x128] sm:$0xff]
      %v231 = vld [vmem:[%s1 + $0x130] sm:$0xff]
      %v232 = vld [vmem:[%s1 + $0x138] sm:$0xff]
      %v233 = vld [vmem:[%s1 + $0x140] sm:$0xff]
      %v234 = vld [vmem:[%s1 + $0x148] sm:$0xff]
      %v235 = vld [vmem:[%s1 + $0x150] sm:$0xff]
      %v236 = vld [vmem:[%s1 + $0x158] sm:$0xff]
      %v237 = vld [vmem:[%s1 + $0x160] sm:$0xff]
      %v238 = vld [vmem:[%s1 + $0x168] sm:$0xff]
      %v239 = vld [vmem:[%s1 + $0x170] sm:$0xff]
      %v240 = vld [vmem:[%s1 + $0x178] sm:$0xff]
      %v241 = vld [vmem:[%s1 + $0x180] sm:$0xff]
      %v242 = vld [vmem:[%s1 + $0x188] sm:$0xff]
      %v243 = vld [vmem:[%s1 + $0x190] sm:$0xff]
      %v244 = vld [vmem:[%s1 + $0x198] sm:$0xff]
      %v245 = vld [vmem:[%s1 + $0x1a0] sm:$0xff]
      %v246 = vld [vmem:[%s1 + $0x1a8] sm:$0xff]
      %v247 = vld [vmem:[%s1 + $0x1b0] sm:$0xff]
      %v248 = vld [vmem:[%s1 + $0x1b8] sm:$0xff]
      %v249 = vld [vmem:[%s1 + $0x1c0] sm:$0xff]
      %v250 = vld [vmem:[%s1 + $0x1c8] sm:$0xff]
      %v251 = vld [vmem:[%s1 + $0x1d0] sm:$0xff]
      %v252 = vld [vmem:[%s1 + $0x1d8] sm:$0xff]
      %v253 = vld [vmem:[%s1 + $0x1e0] sm:$0xff]
      %v254 = vld [vmem:[%s1 + $0x1e8] sm:$0xff]
      %v255 = vld [vmem:[%s1 + $0x1f0] sm:$0xff]
      %v256 = vld [vmem:[%s1 + $0x1f8] sm:$0xff]
      %v273 = vunpack.c.l.b16 %v177
      %v274 = vunpack.c.h.b16 %v177
      %v275 = vunpack.c.l.b16 %v178
      %v276 = vunpack.c.h.b16 %v178
      %v277 = vunpack.c.l.b16 %v179
      %v278 = vunpack.c.h.b16 %v179
      %v279 = vunpack.c.l.b16 %v180
      %v280 = vunpack.c.h.b16 %v180
      %v281 = vunpack.c.l.b16 %v181
      %v282 = vunpack.c.h.b16 %v181
      %v283 = vunpack.c.l.b16 %v182
      %v284 = vunpack.c.h.b16 %v182
      %v285 = vunpack.c.l.b16 %v183
      %v286 = vunpack.c.h.b16 %v183
      %v287 = vunpack.c.l.b16 %v184
      %v288 = vunpack.c.h.b16 %v184
      %v289 = vunpack.c.l.b16 %v185
      %v290 = vunpack.c.h.b16 %v185
      %v291 = vunpack.c.l.b16 %v186
      %v292 = vunpack.c.h.b16 %v186
      %v293 = vunpack.c.l.b16 %v187
      %v294 = vunpack.c.h.b16 %v187
      %v295 = vunpack.c.l.b16 %v188
      %v296 = vunpack.c.h.b16 %v188
      %v297 = vunpack.c.l.b16 %v189
      %v298 = vunpack.c.h.b16 %v189
      %v299 = vunpack.c.l.b16 %v190
      %v300 = vunpack.c.h.b16 %v190
      %v301 = vunpack.c.l.b16 %v191
      %v302 = vunpack.c.h.b16 %v191
      %v303 = vunpack.c.l.b16 %v192
      %v304 = vunpack.c.h.b16 %v192
      %v305 = vpack.c.b16 %v277, %v273
      %v306 = vpack.c.b16 %v278, %v274
      %v307 = vpack.c.b16 %v279, %v275
      %v308 = vpack.c.b16 %v280, %v276
      %v309 = vpack.c.b16 %v285, %v281
      %v310 = vpack.c.b16 %v286, %v282
      %v311 = vpack.c.b16 %v287, %v283
      %v312 = vpack.c.b16 %v288, %v284
      %v313 = vpack.c.b16 %v293, %v289
      %v314 = vpack.c.b16 %v294, %v290
      %v315 = vpack.c.b16 %v295, %v291
      %v316 = vpack.c.b16 %v296, %v292
      %v317 = vpack.c.b16 %v301, %v297
      %v318 = vpack.c.b16 %v302, %v298
      %v319 = vpack.c.b16 %v303, %v299
      %v320 = vpack.c.b16 %v304, %v300
      %v401 = vunpack.c.l.b16 %v193
      %v402 = vunpack.c.h.b16 %v193
      %v403 = vunpack.c.l.b16 %v194
      %v404 = vunpack.c.h.b16 %v194
      %v405 = vunpack.c.l.b16 %v195
      %v406 = vunpack.c.h.b16 %v195
      %v407 = vunpack.c.l.b16 %v196
      %v408 = vunpack.c.h.b16 %v196
      %v409 = vunpack.c.l.b16 %v197
      %v410 = vunpack.c.h.b16 %v197
      %v411 = vunpack.c.l.b16 %v198
      %v412 = vunpack.c.h.b16 %v198
      %v413 = vunpack.c.l.b16 %v199
      %v414 = vunpack.c.h.b16 %v199
      %v415 = vunpack.c.l.b16 %v200
      %v416 = vunpack.c.h.b16 %v200
      %v417 = vunpack.c.l.b16 %v201
      %v418 = vunpack.c.h.b16 %v201
      %v419 = vunpack.c.l.b16 %v202
      %v420 = vunpack.c.h.b16 %v202
      %v421 = vunpack.c.l.b16 %v203
      %v422 = vunpack.c.h.b16 %v203
      %v423 = vunpack.c.l.b16 %v204
      %v424 = vunpack.c.h.b16 %v204
      %v425 = vunpack.c.l.b16 %v205
      %v426 = vunpack.c.h.b16 %v205
      %v427 = vunpack.c.l.b16 %v206
      %v428 = vunpack.c.h.b16 %v206
      %v429 = vunpack.c.l.b16 %v207
      %v430 = vunpack.c.h.b16 %v207
      %v431 = vunpack.c.l.b16 %v208
      %v432 = vunpack.c.h.b16 %v208
      %v433 = vunpack.c.l.b16 %v209
      %v434 = vunpack.c.h.b16 %v209
      %v435 = vunpack.c.l.b16 %v210
      %v436 = vunpack.c.h.b16 %v210
      %v437 = vunpack.c.l.b16 %v211
      %v438 = vunpack.c.h.b16 %v211
      %v439 = vunpack.c.l.b16 %v212
      %v440 = vunpack.c.h.b16 %v212
      %v441 = vunpack.c.l.b16 %v213
      %v442 = vunpack.c.h.b16 %v213
      %v443 = vunpack.c.l.b16 %v214
      %v444 = vunpack.c.h.b16 %v214
      %v445 = vunpack.c.l.b16 %v215
      %v446 = vunpack.c.h.b16 %v215
      %v447 = vunpack.c.l.b16 %v216
      %v448 = vunpack.c.h.b16 %v216
      %v449 = vunpack.c.l.b16 %v217
      %v450 = vunpack.c.h.b16 %v217
      %v451 = vunpack.c.l.b16 %v218
      %v452 = vunpack.c.h.b16 %v218
      %v453 = vunpack.c.l.b16 %v219
      %v454 = vunpack.c.h.b16 %v219
      %v455 = vunpack.c.l.b16 %v220
      %v456 = vunpack.c.h.b16 %v220
      %v457 = vunpack.c.l.b16 %v221
      %v458 = vunpack.c.h.b16 %v221
      %v459 = vunpack.c.l.b16 %v222
      %v460 = vunpack.c.h.b16 %v222
      %v461 = vunpack.c.l.b16 %v223
      %v462 = vunpack.c.h.b16 %v223
      %v463 = vunpack.c.l.b16 %v224
      %v464 = vunpack.c.h.b16 %v224
      %v465 = vunpack.c.l.b16 %v225
      %v466 = vunpack.c.h.b16 %v225
      %v467 = vunpack.c.l.b16 %v226
      %v468 = vunpack.c.h.b16 %v226
      %v469 = vunpack.c.l.b16 %v227
      %v470 = vunpack.c.h.b16 %v227
      %v471 = vunpack.c.l.b16 %v228
      %v472 = vunpack.c.h.b16 %v228
      %v473 = vunpack.c.l.b16 %v229
      %v474 = vunpack.c.h.b16 %v229
      %v475 = vunpack.c.l.b16 %v230
      %v476 = vunpack.c.h.b16 %v230
      %v477 = vunpack.c.l.b16 %v231
      %v478 = vunpack.c.h.b16 %v231
      %v479 = vunpack.c.l.b16 %v232
      %v480 = vunpack.c.h.b16 %v232
      %v481 = vunpack.c.l.b16 %v233
      %v482 = vunpack.c.h.b16 %v233
      %v483 = vunpack.c.l.b16 %v234
      %v484 = vunpack.c.h.b16 %v234
      %v485 = vunpack.c.l.b16 %v235
      %v486 = vunpack.c.h.b16 %v235
      %v487 = vunpack.c.l.b16 %v236
      %v488 = vunpack.c.h.b16 %v236
      %v489 = vunpack.c.l.b16 %v237
      %v490 = vunpack.c.h.b16 %v237
      %v491 = vunpack.c.l.b16 %v238
      %v492 = vunpack.c.h.b16 %v238
      %v493 = vunpack.c.l.b16 %v239
      %v494 = vunpack.c.h.b16 %v239
      %v495 = vunpack.c.l.b16 %v240
      %v496 = vunpack.c.h.b16 %v240
      %v497 = vunpack.c.l.b16 %v241
      %v498 = vunpack.c.h.b16 %v241
      %v499 = vunpack.c.l.b16 %v242
      %v500 = vunpack.c.h.b16 %v242
      %v501 = vunpack.c.l.b16 %v243
      %v502 = vunpack.c.h.b16 %v243
      %v503 = vunpack.c.l.b16 %v244
      %v504 = vunpack.c.h.b16 %v244
      %v505 = vunpack.c.l.b16 %v245
      %v506 = vunpack.c.h.b16 %v245
      %v507 = vunpack.c.l.b16 %v246
      %v508 = vunpack.c.h.b16 %v246
      %v509 = vunpack.c.l.b16 %v247
      %v510 = vunpack.c.h.b16 %v247
      %v511 = vunpack.c.l.b16 %v248
      %v512 = vunpack.c.h.b16 %v248
      %v513 = vunpack.c.l.b16 %v249
      %v514 = vunpack.c.h.b16 %v249
      %v515 = vunpack.c.l.b16 %v250
      %v516 = vunpack.c.h.b16 %v250
      %v517 = vunpack.c.l.b16 %v251
      %v518 = vunpack.c.h.b16 %v251
      %v519 = vunpack.c.l.b16 %v252
      %v520 = vunpack.c.h.b16 %v252
      %v521 = vunpack.c.l.b16 %v253
      %v522 = vunpack.c.h.b16 %v253
      %v523 = vunpack.c.l.b16 %v254
      %v524 = vunpack.c.h.b16 %v254
      %v525 = vunpack.c.l.b16 %v255
      %v526 = vunpack.c.h.b16 %v255
      %v527 = vunpack.c.l.b16 %v256
      %v528 = vunpack.c.h.b16 %v256
      %v529 = vpack.c.b16 %v403, %v401
      %v530 = vpack.c.b16 %v404, %v402
      %v531 = vpack.c.b16 %v407, %v405
      %v532 = vpack.c.b16 %v408, %v406
      %v533 = vpack.c.b16 %v411, %v409
      %v534 = vpack.c.b16 %v412, %v410
      %v535 = vpack.c.b16 %v415, %v413
      %v536 = vpack.c.b16 %v416, %v414
      %v537 = vpack.c.b16 %v419, %v417
      %v538 = vpack.c.b16 %v420, %v418
      %v539 = vpack.c.b16 %v423, %v421
      %v540 = vpack.c.b16 %v424, %v422
      %v541 = vpack.c.b16 %v427, %v425
      %v542 = vpack.c.b16 %v428, %v426
      %v543 = vpack.c.b16 %v431, %v429
      %v544 = vpack.c.b16 %v432, %v430
      %v545 = vpack.c.b16 %v435, %v433
      %v546 = vpack.c.b16 %v436, %v434
      %v547 = vpack.c.b16 %v439, %v437
      %v548 = vpack.c.b16 %v440, %v438
      %v549 = vpack.c.b16 %v443, %v441
      %v550 = vpack.c.b16 %v444, %v442
      %v551 = vpack.c.b16 %v447, %v445
      %v552 = vpack.c.b16 %v448, %v446
      %v553 = vpack.c.b16 %v451, %v449
      %v554 = vpack.c.b16 %v452, %v450
      %v555 = vpack.c.b16 %v455, %v453
      %v556 = vpack.c.b16 %v456, %v454
      %v557 = vpack.c.b16 %v459, %v457
      %v558 = vpack.c.b16 %v460, %v458
      %v559 = vpack.c.b16 %v463, %v461
      %v560 = vpack.c.b16 %v464, %v462
      %v561 = vpack.c.b16 %v467, %v465
      %v562 = vpack.c.b16 %v468, %v466
      %v563 = vpack.c.b16 %v471, %v469
      %v564 = vpack.c.b16 %v472, %v470
      %v565 = vpack.c.b16 %v475, %v473
      %v566 = vpack.c.b16 %v476, %v474
      %v567 = vpack.c.b16 %v479, %v477
      %v568 = vpack.c.b16 %v480, %v478
      %v569 = vpack.c.b16 %v483, %v481
      %v570 = vpack.c.b16 %v484, %v482
      %v571 = vpack.c.b16 %v487, %v485
      %v572 = vpack.c.b16 %v488, %v486
      %v573 = vpack.c.b16 %v491, %v489
      %v574 = vpack.c.b16 %v492, %v490
      %v575 = vpack.c.b16 %v495, %v493
      %v576 = vpack.c.b16 %v496, %v494
      %v577 = vpack.c.b16 %v499, %v497
      %v578 = vpack.c.b16 %v500, %v498
      %v579 = vpack.c.b16 %v503, %v501
      %v580 = vpack.c.b16 %v504, %v502
      %v581 = vpack.c.b16 %v507, %v505
      %v582 = vpack.c.b16 %v508, %v506
      %v583 = vpack.c.b16 %v511, %v509
      %v584 = vpack.c.b16 %v512, %v510
      %v585 = vpack.c.b16 %v515, %v513
      %v586 = vpack.c.b16 %v516, %v514
      %v587 = vpack.c.b16 %v519, %v517
      %v588 = vpack.c.b16 %v520, %v518
      %v589 = vpack.c.b16 %v523, %v521
      %v590 = vpack.c.b16 %v524, %v522
      %v591 = vpack.c.b16 %v527, %v525
      %v592 = vpack.c.b16 %v528, %v526
      %657 = vmatprep.subr.bf16.mxu0 %v544
      %658 = vmatpush1.bf16.msra.mxu0 %v543
      %659 = vmatprep.subr.bf16.mxu0 %v542
      %660 = vmatpush1.bf16.msra.mxu0 %v541
      %661 = vmatprep.subr.bf16.mxu0 %v540
      %662 = vmatpush1.bf16.msra.mxu0 %v539
      %663 = vmatprep.subr.bf16.mxu0 %v538
      %664 = vmatpush1.bf16.msra.mxu0 %v537
      %665 = vmatprep.subr.bf16.mxu0 %v536
      %666 = vmatpush1.bf16.msra.mxu0 %v535
      %667 = vmatprep.subr.bf16.mxu0 %v534
      %668 = vmatpush1.bf16.msra.mxu0 %v533
      %669 = vmatprep.subr.bf16.mxu0 %v532
      %670 = vmatpush1.bf16.msra.mxu0 %v531
      %671 = vmatprep.subr.bf16.mxu0 %v530
      %672 = vmatpush1.bf16.msra.mxu0 %v529
      %673 = vmatprep.subr.bf16.mxu0 %v560
      %674 = vmatpush2.bf16.msra.mxu0 %v559
      %675 = vmatprep.subr.bf16.mxu0 %v558
      %676 = vmatpush2.bf16.msra.mxu0 %v557
      %677 = vmatprep.subr.bf16.mxu0 %v556
      %678 = vmatpush2.bf16.msra.mxu0 %v555
      %679 = vmatprep.subr.bf16.mxu0 %v554
      %680 = vmatpush2.bf16.msra.mxu0 %v553
      %681 = vmatprep.subr.bf16.mxu0 %v552
      %682 = vmatpush2.bf16.msra.mxu0 %v551
      %683 = vmatprep.subr.bf16.mxu0 %v550
      %684 = vmatpush2.bf16.msra.mxu0 %v549
      %685 = vmatprep.subr.bf16.mxu0 %v548
      %686 = vmatpush2.bf16.msra.mxu0 %v547
      %687 = vmatprep.subr.bf16.mxu0 %v546
      %688 = vmatpush2.bf16.msra.mxu0 %v545
      %689 = vmatprep.mubr.bf16.mxu0 %v306
      %690 = vmatmul.mubr.bf16.gmra.mxu0 %v305
      %v691 = vpop.f32.mrf.mxu0
      %v692 = vadd.f32 0.0, %v691
      %v693 = vpop.f32.mrf.mxu0
      %v694 = vadd.f32 0.0, %v693
      %v695 = vpop.f32.mrf.mxu0
      %v696 = vadd.f32 0.0, %v695
      %v697 = vpop.f32.mrf.mxu0
      %v698 = vadd.f32 0.0, %v697
      %699 = vmatprep.mubr.bf16.mxu0 %v310
      %700 = vmatmul.mubr.bf16.gmra.mxu0 %v309
      %v701 = vpop.f32.mrf.mxu0
      %v702 = vadd.f32 0.0, %v701
      %v703 = vpop.f32.mrf.mxu0
      %v704 = vadd.f32 0.0, %v703
      %v705 = vpop.f32.mrf.mxu0
      %v706 = vadd.f32 0.0, %v705
      %v707 = vpop.f32.mrf.mxu0
      %v708 = vadd.f32 0.0, %v707
      %709 = vmatprep.mubr.bf16.mxu0 %v314
      %710 = vmatmul.mubr.bf16.gmra.mxu0 %v313
      %v711 = vpop.f32.mrf.mxu0
      %v712 = vadd.f32 0.0, %v711
      %v713 = vpop.f32.mrf.mxu0
      %v714 = vadd.f32 0.0, %v713
      %v715 = vpop.f32.mrf.mxu0
      %v716 = vadd.f32 0.0, %v715
      %v717 = vpop.f32.mrf.mxu0
      %v718 = vadd.f32 0.0, %v717
      %719 = vmatprep.mubr.bf16.mxu0 %v318
      %720 = vmatmul.mubr.bf16.gmra.mxu0 %v317
      %v721 = vpop.f32.mrf.mxu0
      %v722 = vadd.f32 0.0, %v721
      %v723 = vpop.f32.mrf.mxu0
      %v724 = vadd.f32 0.0, %v723
      %v725 = vpop.f32.mrf.mxu0
      %v726 = vadd.f32 0.0, %v725
      %v727 = vpop.f32.mrf.mxu0
      %v728 = vadd.f32 0.0, %v727
      %729 = vdwg.mxu0
      %730 = vmatprep.subr.bf16.mxu0 %v576
      %731 = vmatpush1.bf16.msra.mxu0 %v575
      %732 = vmatprep.subr.bf16.mxu0 %v574
      %733 = vmatpush1.bf16.msra.mxu0 %v573
      %734 = vmatprep.subr.bf16.mxu0 %v572
      %735 = vmatpush1.bf16.msra.mxu0 %v571
      %736 = vmatprep.subr.bf16.mxu0 %v570
      %737 = vmatpush1.bf16.msra.mxu0 %v569
      %738 = vmatprep.subr.bf16.mxu0 %v568
      %739 = vmatpush1.bf16.msra.mxu0 %v567
      %740 = vmatprep.subr.bf16.mxu0 %v566
      %741 = vmatpush1.bf16.msra.mxu0 %v565
      %742 = vmatprep.subr.bf16.mxu0 %v564
      %743 = vmatpush1.bf16.msra.mxu0 %v563
      %744 = vmatprep.subr.bf16.mxu0 %v562
      %745 = vmatpush1.bf16.msra.mxu0 %v561
      %746 = vmatprep.subr.bf16.mxu0 %v592
      %747 = vmatpush2.bf16.msra.mxu0 %v591
      %748 = vmatprep.subr.bf16.mxu0 %v590
      %749 = vmatpush2.bf16.msra.mxu0 %v589
      %750 = vmatprep.subr.bf16.mxu0 %v588
      %751 = vmatpush2.bf16.msra.mxu0 %v587
      %752 = vmatprep.subr.bf16.mxu0 %v586
      %753 = vmatpush2.bf16.msra.mxu0 %v585
      %754 = vmatprep.subr.bf16.mxu0 %v584
      %755 = vmatpush2.bf16.msra.mxu0 %v583
      %756 = vmatprep.subr.bf16.mxu0 %v582
      %757 = vmatpush2.bf16.msra.mxu0 %v581
      %758 = vmatprep.subr.bf16.mxu0 %v580
      %759 = vmatpush2.bf16.msra.mxu0 %v579
      %760 = vmatprep.subr.bf16.mxu0 %v578
      %761 = vmatpush2.bf16.msra.mxu0 %v577
      %762 = vmatprep.mubr.bf16.mxu0 %v308
      %763 = vmatmul.mubr.bf16.gmra.mxu0 %v307
      %v764 = vpop.f32.mrf.mxu0
      %v765 = vadd.f32 %v692, %v764
      %v766 = vpop.f32.mrf.mxu0
      %v767 = vadd.f32 %v694, %v766
      %v768 = vpop.f32.mrf.mxu0
      %v769 = vadd.f32 %v696, %v768
      %v770 = vpop.f32.mrf.mxu0
      %v771 = vadd.f32 %v698, %v770
      %772 = vmatprep.mubr.bf16.mxu0 %v312
      %773 = vmatmul.mubr.bf16.gmra.mxu0 %v311
      %v774 = vpop.f32.mrf.mxu0
      %v775 = vadd.f32 %v702, %v774
      %v776 = vpop.f32.mrf.mxu0
      %v777 = vadd.f32 %v704, %v776
      %v778 = vpop.f32.mrf.mxu0
      %v779 = vadd.f32 %v706, %v778
      %v780 = vpop.f32.mrf.mxu0
      %v781 = vadd.f32 %v708, %v780
      %782 = vmatprep.mubr.bf16.mxu0 %v316
      %783 = vmatmul.mubr.bf16.gmra.mxu0 %v315
      %v784 = vpop.f32.mrf.mxu0
      %v785 = vadd.f32 %v712, %v784
      %v786 = vpop.f32.mrf.mxu0
      %v787 = vadd.f32 %v714, %v786
      %v788 = vpop.f32.mrf.mxu0
      %v789 = vadd.f32 %v716, %v788
      %v790 = vpop.f32.mrf.mxu0
      %v791 = vadd.f32 %v718, %v790
      %792 = vmatprep.mubr.bf16.mxu0 %v320
      %793 = vmatmul.mubr.bf16.gmra.mxu0 %v319
      %v794 = vpop.f32.mrf.mxu0
      %v795 = vadd.f32 %v722, %v794
      %v796 = vpop.f32.mrf.mxu0
      %v797 = vadd.f32 %v724, %v796
      %v798 = vpop.f32.mrf.mxu0
      %v799 = vadd.f32 %v726, %v798
      %v800 = vpop.f32.mrf.mxu0
      %v801 = vadd.f32 %v728, %v800
      %802 = vdwg.mxu0
      %811 = vrot.lane.b32.xlu0 %v765, 64
      %v812 = vpop.permute.xlu0 %811
      %813 = vrot.lane.b32.xlu0 %v769, 64
      %v814 = vpop.permute.xlu0 %813
      %815 = vrot.lane.b32.xlu0 %v775, 64
      %v816 = vpop.permute.xlu0 %815
      %817 = vrot.lane.b32.xlu0 %v779, 64
      %v818 = vpop.permute.xlu0 %817
      %819 = vrot.lane.b32.xlu0 %v785, 64
      %v820 = vpop.permute.xlu0 %819
      %821 = vrot.lane.b32.xlu0 %v789, 64
      %v822 = vpop.permute.xlu0 %821
      %823 = vrot.lane.b32.xlu0 %v795, 64
      %v824 = vpop.permute.xlu0 %823
      %825 = vrot.lane.b32.xlu0 %v799, 64
      %v826 = vpop.permute.xlu0 %825
      %v835 = vmax.f32 %v765, %v812
      %v836 = vmax.f32 %v769, %v814
      %v837 = vmax.f32 %v775, %v816
      %v838 = vmax.f32 %v779, %v818
      %v839 = vmax.f32 %v785, %v820
      %v840 = vmax.f32 %v789, %v822
      %v841 = vmax.f32 %v795, %v824
      %v842 = vmax.f32 %v799, %v826
      %851 = vrot.lane.b32.xlu0 %v767, 64
      %v852 = vpop.permute.xlu0 %851
      %853 = vrot.lane.b32.xlu0 %v771, 64
      %v854 = vpop.permute.xlu0 %853
      %855 = vrot.lane.b32.xlu0 %v777, 64
      %v856 = vpop.permute.xlu0 %855
      %857 = vrot.lane.b32.xlu0 %v781, 64
      %v858 = vpop.permute.xlu0 %857
      %859 = vrot.lane.b32.xlu0 %v787, 64
      %v860 = vpop.permute.xlu0 %859
      %861 = vrot.lane.b32.xlu0 %v791, 64
      %v862 = vpop.permute.xlu0 %861
      %863 = vrot.lane.b32.xlu0 %v797, 64
      %v864 = vpop.permute.xlu0 %863
      %865 = vrot.lane.b32.xlu0 %v801, 64
      %v866 = vpop.permute.xlu0 %865
      %v875 = vmax.f32 %v767, %v852
      %v876 = vmax.f32 %v771, %v854
      %v877 = vmax.f32 %v777, %v856
      %v878 = vmax.f32 %v781, %v858
      %v879 = vmax.f32 %v787, %v860
      %v880 = vmax.f32 %v791, %v862
      %v881 = vmax.f32 %v797, %v864
      %v882 = vmax.f32 %v801, %v866
      %v883 = vmax.f32 %v835, %v875
      %v884 = vmax.f32 %v836, %v876
      %v885 = vmax.f32 %v837, %v877
      %v886 = vmax.f32 %v838, %v878
      %v887 = vmax.f32 %v839, %v879
      %v888 = vmax.f32 %v840, %v880
      %v889 = vmax.f32 %v841, %v881
      %v890 = vmax.f32 %v842, %v882
      %v891 = vld [vmem:[%s2] sm:$0x1]
      %v893 = vlaneseq
      %v894 = vshrl.u32 %v893, 7
      %v895 = vsub.s32 0, %v894
      %v896 = vrot.slane %v891, %v895
      %v898 = vadd.f32 %v883, %v896
      %v899 = vadd.f32 %v884, %v896
      %v900 = vadd.f32 %v885, %v896
      %v901 = vadd.f32 %v886, %v896
      %v902 = vadd.f32 %v887, %v896
      %v903 = vadd.f32 %v888, %v896
      %v904 = vadd.f32 %v889, %v896
      %v905 = vadd.f32 %v890, %v896
      %v906 = vmax.f32 %v898, 0.0
      %v907 = vmax.f32 %v899, 0.0
      %v908 = vmax.f32 %v900, 0.0
      %v909 = vmax.f32 %v901, 0.0
      %v910 = vmax.f32 %v902, 0.0
      %v911 = vmax.f32 %v903, 0.0
      %v912 = vmax.f32 %v904, 0.0
      %v913 = vmax.f32 %v905, 0.0
      %vm914 = vcmask 523264
      %915 = vst.msk [vmem:[%s175] sm:$0xff] %vm914, %v906
      %916 = vst.msk [vmem:[%s175 + $0x8] sm:$0xff] %vm914, %v907
      %917 = vst.msk [vmem:[%s175 + $0x10] sm:$0xff] %vm914, %v908
      %918 = vst.msk [vmem:[%s175 + $0x18] sm:$0xff] %vm914, %v909
      %919 = vst.msk [vmem:[%s175 + $0x20] sm:$0xff] %vm914, %v910
      %920 = vst.msk [vmem:[%s175 + $0x28] sm:$0xff] %vm914, %v911
      %921 = vst.msk [vmem:[%s175 + $0x30] sm:$0xff] %vm914, %v912
      %922 = vst.msk [vmem:[%s175 + $0x38] sm:$0xff] %vm914, %v913
      %s923 = smul.u32 8, %s14
      %p924 = scmp.lt.s32.totalorder %s923, 15
      %s925 = scalar_select %p924, %s923, 15
      %s926 = smul.addr %s925, 8
      %s927 = scalar_lea.vmem %s3, %s926
      // Predicated region
      $region33: #{cnn_forward.5} parent=31 // pred_check
        %p928 = pneg %p100
      $region34: #{cnn_forward.5} parent=31 // pred_check_branch
        %930 = sbr.rel (%p928) target = $region36
      $region35: #{cnn_forward.5} parent=31 // pred_region
        %s931 = smul.u32 8, %s14
      $region36: #{cnn_forward.5} parent=31 // pred_fallthru
        _
    $region32: #{cnn_forward.5} parent=5 // pred_fallthru
      _
    %p932 = scmp.le.s32.totalorder 2, %s9
    // Predicated region
    $region37: #{cnn_forward.5} parent=5 // pred_check
      %p933 = pneg %p932
    $region38: #{cnn_forward.5} parent=5 // pred_check_branch
      %935 = sbr.rel (%p933) target = $region40
    $region39: #{cnn_forward.5} parent=5 // pred_region
      %s936 = ssub.s32 %s9, 2
      // Predicated region
      $region41: #{cnn_forward.5} parent=39 // pred_check
        %p937 = pneg %p106
      $region42: #{cnn_forward.5} parent=39 // pred_check_branch
        %939 = sbr.rel (%p937) target = $region44
      $region43: #{cnn_forward.5} parent=39 // pred_region
        %s940 = smul.u32 8, %s15
        %p941 = scmp.lt.s32.totalorder %s940, 15
        %s942 = scalar_select %p941, %s940, 15
        %s943 = smul.addr %s942, 8
        %s944 = scalar_lea.vmem %s3, %s943
      $region44: #{cnn_forward.5} parent=39 // pred_fallthru
        _
    $region40: #{cnn_forward.5} parent=5 // pred_fallthru
      _
  $region6: #{cnn_forward.5} parent=0 // loop_footer
    %s13 = sadd.s32 1, %s9
  $region7: #{cnn_forward.5} parent=0 // loop_footer_branch
    %8 = sbr.rel target = $region3
  $region8: #{cnn_forward.5} parent=0 // loop_exit
    _

// kernel: cnn_forward.6
$region0: #{cnn_forward.6}
  #allocation0 [shape = 'u32[]', space=smem, size = 0x4, offset = 0x4, fixed_abs, tag = 'smem constant byte address 0x4 - core index']
  #allocation1 [shape = 'u32[144,128]{1,0:T(1,128)}', space=vmem, size = 0x12000, scoped, tag = 'internal scratch']
  %s0 = inlined_call_operand.vmem [shape: bf16[32,1024], index: 0, kind: input, shape index: {}]
  %s1 = inlined_call_operand.vmem [shape: bf16[1024,512], index: 1, kind: input, shape index: {}]
  %s2 = inlined_call_operand.vmem [shape: f32[1,128], index: 2, kind: input, shape index: {}]
  %s3 = inlined_call_operand.vmem [shape: f32[32,128], index: 3, kind: output, shape index: {}]
  %s4 = sld [smem:[#allocation0]]
  $region45: #{cnn_forward.6} parent=0
    _
  %s6 = ssub.s32 1, %s4
  %s7 = scalar_select 0, %s6, %s4
  loop: start=0, step=1, limit=4
  $region2: #{cnn_forward.6} parent=0 // loop_pre_header
    _
  $region3: #{cnn_forward.6} parent=0 // loop_header
    %s9 = sphi 0, %s13
    %p10 = scmp.ge.s32.totalorder %s9, 4
    %s19 = sphi 0, %s21
    %s22 = sphi 0, %s19
    %s23 = sphi 0, %s22
    %s39 = sphi 0, %s23
    %s43 = sphi 0, %s43
    %s45 = sphi 0, %s43
    %s46 = sphi 0, %s45
    %s60 = sphi 0, %s46
    %s64 = sphi 0, %s64
    %s66 = sphi 0, %s64
    %s67 = sphi 0, %s66
    %s81 = sphi 0, %s67
    %s87 = sphi 0, %s89
    %s90 = sphi 0, %s87
    %s91 = sphi 0, %s90
    %s107 = sphi 0, %s91
  $region4: #{cnn_forward.6} parent=0 // loop_header_branch
    %12 = sbr.rel (%p10) target = $region8
  $region5: #{cnn_forward.6} parent=0 // loop_body
    %s14 = ssub.s32 %s9, 1
    %s15 = ssub.s32 %s9, 2
    %s16 = sadd.s32 %s9, 1
    %s17 = ssub.s32 %s9, %s16
    %p18 = scmp.eq.s32.totalorder %s17, 0
    %s20 = sadd.s32 %s19, 1
    %s21 = scalar_select %p18, %s19, %s20
    %p24 = pneg %p18
    %p25 = scmp.eq.s32.totalorder %s9, 1
    %p26 = por %p24, %p25
    %p27 = scmp.ne.s32.totalorder %s19, %s22
    %p28 = scmp.eq.s32.totalorder %s9, 0
    %p29 = por %p27, %p28
    %p30 = scmp.ne.s32.totalorder %s19, %s22
    %p31 = scmp.eq.s32.totalorder %s14, 1
    %p32 = por %p30, %p31
    %p33 = scmp.ne.s32.totalorder %s22, %s23
    %p34 = scmp.eq.s32.totalorder %s14, 0
    %p35 = por %p33, %p34
    %p36 = scmp.ne.s32.totalorder %s22, %s23
    %p37 = scmp.eq.s32.totalorder %s15, 1
    %p38 = por %p36, %p37
    %p40 = scmp.ne.s32.totalorder %s23, %s39
    %p41 = scmp.eq.s32.totalorder %s15, 0
    %p42 = por %p40, %p41
    %s44 = sadd.s32 %s43, 1
    %p47 = scmp.eq.s32.totalorder %s9, 1
    %p48 = scmp.ne.s32.totalorder %s43, %s45
    %p49 = scmp.eq.s32.totalorder %s9, 0
    %p50 = por %p48, %p49
    %p51 = scmp.ne.s32.totalorder %s43, %s45
    %p52 = scmp.eq.s32.totalorder %s14, 1
    %p53 = por %p51, %p52
    %p54 = scmp.ne.s32.totalorder %s45, %s46
    %p55 = scmp.eq.s32.totalorder %s14, 0
    %p56 = por %p54, %p55
    %p57 = scmp.ne.s32.totalorder %s45, %s46
    %p58 = scmp.eq.s32.totalorder %s15, 1
    %p59 = por %p57, %p58
    %p61 = scmp.ne.s32.totalorder %s46, %s60
    %p62 = scmp.eq.s32.totalorder %s15, 0
    %p63 = por %p61, %p62
    %s65 = sadd.s32 %s64, 1
    %p68 = scmp.eq.s32.totalorder %s9, 1
    %p69 = scmp.ne.s32.totalorder %s64, %s66
    %p70 = scmp.eq.s32.totalorder %s9, 0
    %p71 = por %p69, %p70
    %p72 = scmp.ne.s32.totalorder %s64, %s66
    %p73 = scmp.eq.s32.totalorder %s14, 1
    %p74 = por %p72, %p73
    %p75 = scmp.ne.s32.totalorder %s66, %s67
    %p76 = scmp.eq.s32.totalorder %s14, 0
    %p77 = por %p75, %p76
    %p78 = scmp.ne.s32.totalorder %s66, %s67
    %p79 = scmp.eq.s32.totalorder %s15, 1
    %p80 = por %p78, %p79
    %p82 = scmp.ne.s32.totalorder %s67, %s81
    %p83 = scmp.eq.s32.totalorder %s15, 0
    %p84 = por %p82, %p83
    %s85 = ssub.s32 %s9, %s16
    %p86 = scmp.eq.s32.totalorder %s85, 0
    %s88 = sadd.s32 %s87, 1
    %s89 = scalar_select %p86, %s87, %s88
    %p92 = pneg %p86
    %p93 = scmp.eq.s32.totalorder %s9, 1
    %p94 = por %p92, %p93
    %p95 = scmp.ne.s32.totalorder %s87, %s90
    %p96 = scmp.eq.s32.totalorder %s9, 0
    %p97 = por %p95, %p96
    %p98 = scmp.ne.s32.totalorder %s87, %s90
    %p99 = scmp.eq.s32.totalorder %s14, 1
    %p100 = por %p98, %p99
    %p101 = scmp.ne.s32.totalorder %s90, %s91
    %p102 = scmp.eq.s32.totalorder %s14, 0
    %p103 = por %p101, %p102
    %p104 = scmp.ne.s32.totalorder %s90, %s91
    %p105 = scmp.eq.s32.totalorder %s15, 1
    %p106 = por %p104, %p105
    %p108 = scmp.ne.s32.totalorder %s91, %s107
    %p109 = scmp.eq.s32.totalorder %s15, 0
    %p110 = por %p108, %p109
    %p111 = scmp.le.s32.totalorder 1, %s9
    %p112 = scmp.lt.s32.totalorder %s9, 3
    %p113 = pnand %p111, %p112
    %p114 = pneg %p113
    // Predicated region
    $region9: #{cnn_forward.6} parent=5 // pred_check
      _
    $region10: #{cnn_forward.6} parent=5 // pred_check_branch
      %116 = sbr.rel (%p113) target = $region12
    $region11: #{cnn_forward.6} parent=5 // pred_region
      %s117 = ssub.s32 %s9, 1
      // Predicated region
      $region13: #{cnn_forward.6} parent=11 // pred_check
        %p118 = pneg %p56
      $region14: #{cnn_forward.6} parent=11 // pred_check_branch
        %120 = sbr.rel (%p118) target = $region16
      $region15: #{cnn_forward.6} parent=11 // pred_region
        _
      $region16: #{cnn_forward.6} parent=11 // pred_fallthru
        _
      // Predicated region
      $region17: #{cnn_forward.6} parent=11 // pred_check
        %p121 = pneg %p77
      $region18: #{cnn_forward.6} parent=11 // pred_check_branch
        %123 = sbr.rel (%p121) target = $region20
      $region19: #{cnn_forward.6} parent=11 // pred_region
        _
      $region20: #{cnn_forward.6} parent=11 // pred_fallthru
        _
    $region12: #{cnn_forward.6} parent=5 // pred_fallthru
      _
    %p124 = scmp.lt.s32.totalorder %s9, 2
    // Predicated region
    $region21: #{cnn_forward.6} parent=5 // pred_check
      %p125 = pneg %p124
    $region22: #{cnn_forward.6} parent=5 // pred_check_branch
      %127 = sbr.rel (%p125) target = $region24
    $region23: #{cnn_forward.6} parent=5 // pred_region
      // Predicated region
      $region25: #{cnn_forward.6} parent=23 // pred_check
        %p128 = pneg %p29
      $region26: #{cnn_forward.6} parent=23 // pred_check_branch
        %130 = sbr.rel (%p128) target = $region28
      $region27: #{cnn_forward.6} parent=23 // pred_region
        %s131 = smul.u32 2, %s9
        %p132 = scmp.lt.s32.totalorder %s131, 3
        %s133 = scalar_select %p132, %s131, 3
        %s134 = smul.addr %s133, 8
        %s135 = smul.addr %s134, 4
        %s136 = scalar_lea.vmem %s0, %s135
        %s137 = smul.u32 2, %s9
      $region28: #{cnn_forward.6} parent=23 // pred_fallthru
        _
    $region24: #{cnn_forward.6} parent=5 // pred_fallthru
      _
    %p138 = scmp.le.s32.totalorder 1, %s9
    %p139 = scmp.lt.s32.totalorder %s9, 3
    %p140 = pnand %p138, %p139
    %p141 = pneg %p140
    // Predicated region
    $region29: #{cnn_forward.6} parent=5 // pred_check
      _
    $region30: #{cnn_forward.6} parent=5 // pred_check_branch
      %143 = sbr.rel (%p140) target = $region32
    $region31: #{cnn_forward.6} parent=5 // pred_region
      %s144 = ssub.s32 %s9, 1
      %s145 = smul.u32 2, %s14
      %p146 = scmp.lt.s32.totalorder %s145, 3
      %s147 = scalar_select %p146, %s145, 3
      %s148 = smul.addr %s147, 8
      %s149 = smul.addr %s148, 4
      %s150 = scalar_lea.vmem %s0, %s149
      %p151 = pneg %p35
      %p152 = pneg %p32
      %p153 = pneg %p56
      %p154 = pneg %p53
      %p155 = pneg %p77
      %p156 = pneg %p74
      %p157 = pneg %p103
      %p158 = pneg %p100
      %s159 = smul.u32 2, %s14
      %p160 = scmp.lt.s32.totalorder %s159, 3
      %s161 = scalar_select %p160, %s159, 3
      %s162 = smul.addr %s161, 8
      %s163 = scalar_lea.vmem %s3, %s162
      %s164 = smul.u32 2, %s14
      %p165 = scmp.lt.s32.totalorder %s164, 3
      %s166 = scalar_select %p165, %s164, 3
      %s167 = smul.addr %s166, 8
      %s168 = smul.addr %s167, 4
      %s169 = scalar_lea.vmem %s0, %s168
      %s170 = smul.u32 2, %s14
      %s171 = smul.u32 2, %s14
      %p172 = scmp.lt.s32.totalorder %s171, 3
      %s173 = scalar_select %p172, %s171, 3
      %s174 = smul.addr %s173, 8
      %s175 = scalar_lea.vmem %s3, %s174
      %s176 = smul.u32 2, %s14
      %v177 = vld [vmem:[%s169] sm:$0xff]
      %v178 = vld [vmem:[%s169 + $0x8] sm:$0xff]
      %v179 = vld [vmem:[%s169 + $0x10] sm:$0xff]
      %v180 = vld [vmem:[%s169 + $0x18] sm:$0xff]
      %v181 = vld [vmem:[%s169 + $0x20] sm:$0xff]
      %v182 = vld [vmem:[%s169 + $0x28] sm:$0xff]
      %v183 = vld [vmem:[%s169 + $0x30] sm:$0xff]
      %v184 = vld [vmem:[%s169 + $0x38] sm:$0xff]
      %v185 = vld [vmem:[%s1] sm:$0xff]
      %v186 = vld [vmem:[%s1 + $0x8] sm:$0xff]
      %v187 = vld [vmem:[%s1 + $0x10] sm:$0xff]
      %v188 = vld [vmem:[%s1 + $0x18] sm:$0xff]
      %v189 = vld [vmem:[%s1 + $0x20] sm:$0xff]
      %v190 = vld [vmem:[%s1 + $0x28] sm:$0xff]
      %v191 = vld [vmem:[%s1 + $0x30] sm:$0xff]
      %v192 = vld [vmem:[%s1 + $0x38] sm:$0xff]
      %v193 = vld [vmem:[%s1 + $0x40] sm:$0xff]
      %v194 = vld [vmem:[%s1 + $0x48] sm:$0xff]
      %v195 = vld [vmem:[%s1 + $0x50] sm:$0xff]
      %v196 = vld [vmem:[%s1 + $0x58] sm:$0xff]
      %v197 = vld [vmem:[%s1 + $0x60] sm:$0xff]
      %v198 = vld [vmem:[%s1 + $0x68] sm:$0xff]
      %v199 = vld [vmem:[%s1 + $0x70] sm:$0xff]
      %v200 = vld [vmem:[%s1 + $0x78] sm:$0xff]
      %v201 = vld [vmem:[%s1 + $0x80] sm:$0xff]
      %v202 = vld [vmem:[%s1 + $0x88] sm:$0xff]
      %v203 = vld [vmem:[%s1 + $0x90] sm:$0xff]
      %v204 = vld [vmem:[%s1 + $0x98] sm:$0xff]
      %v205 = vld [vmem:[%s1 + $0xa0] sm:$0xff]
      %v206 = vld [vmem:[%s1 + $0xa8] sm:$0xff]
      %v207 = vld [vmem:[%s1 + $0xb0] sm:$0xff]
      %v208 = vld [vmem:[%s1 + $0xb8] sm:$0xff]
      %v209 = vld [vmem:[%s1 + $0xc0] sm:$0xff]
      %v210 = vld [vmem:[%s1 + $0xc8] sm:$0xff]
      %v211 = vld [vmem:[%s1 + $0xd0] sm:$0xff]
      %v212 = vld [vmem:[%s1 + $0xd8] sm:$0xff]
      %v213 = vld [vmem:[%s1 + $0xe0] sm:$0xff]
      %v214 = vld [vmem:[%s1 + $0xe8] sm:$0xff]
      %v215 = vld [vmem:[%s1 + $0xf0] sm:$0xff]
      %v216 = vld [vmem:[%s1 + $0xf8] sm:$0xff]
      %v217 = vld [vmem:[%s1 + $0x100] sm:$0xff]
      %v218 = vld [vmem:[%s1 + $0x108] sm:$0xff]
      %v219 = vld [vmem:[%s1 + $0x110] sm:$0xff]
      %v220 = vld [vmem:[%s1 + $0x118] sm:$0xff]
      %v221 = vld [vmem:[%s1 + $0x120] sm:$0xff]
      %v222 = vld [vmem:[%s1 + $0x128] sm:$0xff]
      %v223 = vld [vmem:[%s1 + $0x130] sm:$0xff]
      %v224 = vld [vmem:[%s1 + $0x138] sm:$0xff]
      %v225 = vld [vmem:[%s1 + $0x140] sm:$0xff]
      %v226 = vld [vmem:[%s1 + $0x148] sm:$0xff]
      %v227 = vld [vmem:[%s1 + $0x150] sm:$0xff]
      %v228 = vld [vmem:[%s1 + $0x158] sm:$0xff]
      %v229 = vld [vmem:[%s1 + $0x160] sm:$0xff]
      %v230 = vld [vmem:[%s1 + $0x168] sm:$0xff]
      %v231 = vld [vmem:[%s1 + $0x170] sm:$0xff]
      %v232 = vld [vmem:[%s1 + $0x178] sm:$0xff]
      %v233 = vld [vmem:[%s1 + $0x180] sm:$0xff]
      %v234 = vld [vmem:[%s1 + $0x188] sm:$0xff]
      %v235 = vld [vmem:[%s1 + $0x190] sm:$0xff]
      %v236 = vld [vmem:[%s1 + $0x198] sm:$0xff]
      %v237 = vld [vmem:[%s1 + $0x1a0] sm:$0xff]
      %v238 = vld [vmem:[%s1 + $0x1a8] sm:$0xff]
      %v239 = vld [vmem:[%s1 + $0x1b0] sm:$0xff]
      %v240 = vld [vmem:[%s1 + $0x1b8] sm:$0xff]
      %v241 = vld [vmem:[%s1 + $0x1c0] sm:$0xff]
      %v242 = vld [vmem:[%s1 + $0x1c8] sm:$0xff]
      %v243 = vld [vmem:[%s1 + $0x1d0] sm:$0xff]
      %v244 = vld [vmem:[%s1 + $0x1d8] sm:$0xff]
      %v245 = vld [vmem:[%s1 + $0x1e0] sm:$0xff]
      %v246 = vld [vmem:[%s1 + $0x1e8] sm:$0xff]
      %v247 = vld [vmem:[%s1 + $0x1f0] sm:$0xff]
      %v248 = vld [vmem:[%s1 + $0x1f8] sm:$0xff]
      %v249 = vld [vmem:[%s1 + $0x200] sm:$0xff]
      %v250 = vld [vmem:[%s1 + $0x208] sm:$0xff]
      %v251 = vld [vmem:[%s1 + $0x210] sm:$0xff]
      %v252 = vld [vmem:[%s1 + $0x218] sm:$0xff]
      %v253 = vld [vmem:[%s1 + $0x220] sm:$0xff]
      %v254 = vld [vmem:[%s1 + $0x228] sm:$0xff]
      %v255 = vld [vmem:[%s1 + $0x230] sm:$0xff]
      %v256 = vld [vmem:[%s1 + $0x238] sm:$0xff]
      %v257 = vld [vmem:[%s1 + $0x240] sm:$0xff]
      %v258 = vld [vmem:[%s1 + $0x248] sm:$0xff]
      %v259 = vld [vmem:[%s1 + $0x250] sm:$0xff]
      %v260 = vld [vmem:[%s1 + $0x258] sm:$0xff]
      %v261 = vld [vmem:[%s1 + $0x260] sm:$0xff]
      %v262 = vld [vmem:[%s1 + $0x268] sm:$0xff]
      %v263 = vld [vmem:[%s1 + $0x270] sm:$0xff]
      %v264 = vld [vmem:[%s1 + $0x278] sm:$0xff]
      %v265 = vld [vmem:[%s1 + $0x280] sm:$0xff]
      %v266 = vld [vmem:[%s1 + $0x288] sm:$0xff]
      %v267 = vld [vmem:[%s1 + $0x290] sm:$0xff]
      %v268 = vld [vmem:[%s1 + $0x298] sm:$0xff]
      %v269 = vld [vmem:[%s1 + $0x2a0] sm:$0xff]
      %v270 = vld [vmem:[%s1 + $0x2a8] sm:$0xff]
      %v271 = vld [vmem:[%s1 + $0x2b0] sm:$0xff]
      %v272 = vld [vmem:[%s1 + $0x2b8] sm:$0xff]
      %v273 = vld [vmem:[%s1 + $0x2c0] sm:$0xff]
      %v274 = vld [vmem:[%s1 + $0x2c8] sm:$0xff]
      %v275 = vld [vmem:[%s1 + $0x2d0] sm:$0xff]
      %v276 = vld [vmem:[%s1 + $0x2d8] sm:$0xff]
      %v277 = vld [vmem:[%s1 + $0x2e0] sm:$0xff]
      %v278 = vld [vmem:[%s1 + $0x2e8] sm:$0xff]
      %v279 = vld [vmem:[%s1 + $0x2f0] sm:$0xff]
      %v280 = vld [vmem:[%s1 + $0x2f8] sm:$0xff]
      %v281 = vld [vmem:[%s1 + $0x300] sm:$0xff]
      %v282 = vld [vmem:[%s1 + $0x308] sm:$0xff]
      %v283 = vld [vmem:[%s1 + $0x310] sm:$0xff]
      %v284 = vld [vmem:[%s1 + $0x318] sm:$0xff]
      %v285 = vld [vmem:[%s1 + $0x320] sm:$0xff]
      %v286 = vld [vmem:[%s1 + $0x328] sm:$0xff]
      %v287 = vld [vmem:[%s1 + $0x330] sm:$0xff]
      %v288 = vld [vmem:[%s1 + $0x338] sm:$0xff]
      %v289 = vld [vmem:[%s1 + $0x340] sm:$0xff]
      %v290 = vld [vmem:[%s1 + $0x348] sm:$0xff]
      %v291 = vld [vmem:[%s1 + $0x350] sm:$0xff]
      %v292 = vld [vmem:[%s1 + $0x358] sm:$0xff]
      %v293 = vld [vmem:[%s1 + $0x360] sm:$0xff]
      %v294 = vld [vmem:[%s1 + $0x368] sm:$0xff]
      %v295 = vld [vmem:[%s1 + $0x370] sm:$0xff]
      %v296 = vld [vmem:[%s1 + $0x378] sm:$0xff]
      %v297 = vld [vmem:[%s1 + $0x380] sm:$0xff]
      %v298 = vld [vmem:[%s1 + $0x388] sm:$0xff]
      %v299 = vld [vmem:[%s1 + $0x390] sm:$0xff]
      %v300 = vld [vmem:[%s1 + $0x398] sm:$0xff]
      %v301 = vld [vmem:[%s1 + $0x3a0] sm:$0xff]
      %v302 = vld [vmem:[%s1 + $0x3a8] sm:$0xff]
      %v303 = vld [vmem:[%s1 + $0x3b0] sm:$0xff]
      %v304 = vld [vmem:[%s1 + $0x3b8] sm:$0xff]
      %v305 = vld [vmem:[%s1 + $0x3c0] sm:$0xff]
      %v306 = vld [vmem:[%s1 + $0x3c8] sm:$0xff]
      %v307 = vld [vmem:[%s1 + $0x3d0] sm:$0xff]
      %v308 = vld [vmem:[%s1 + $0x3d8] sm:$0xff]
      %v309 = vld [vmem:[%s1 + $0x3e0] sm:$0xff]
      %v310 = vld [vmem:[%s1 + $0x3e8] sm:$0xff]
      %v311 = vld [vmem:[%s1 + $0x3f0] sm:$0xff]
      %v312 = vld [vmem:[%s1 + $0x3f8] sm:$0xff]
      %v313 = vld [vmem:[%s1 + $0x400] sm:$0xff]
      %v314 = vld [vmem:[%s1 + $0x408] sm:$0xff]
      %v315 = vld [vmem:[%s1 + $0x410] sm:$0xff]
      %v316 = vld [vmem:[%s1 + $0x418] sm:$0xff]
      %v317 = vld [vmem:[%s1 + $0x420] sm:$0xff]
      %v318 = vld [vmem:[%s1 + $0x428] sm:$0xff]
      %v319 = vld [vmem:[%s1 + $0x430] sm:$0xff]
      %v320 = vld [vmem:[%s1 + $0x438] sm:$0xff]
      %v321 = vld [vmem:[%s1 + $0x440] sm:$0xff]
      %v322 = vld [vmem:[%s1 + $0x448] sm:$0xff]
      %v323 = vld [vmem:[%s1 + $0x450] sm:$0xff]
      %v324 = vld [vmem:[%s1 + $0x458] sm:$0xff]
      %v325 = vld [vmem:[%s1 + $0x460] sm:$0xff]
      %v326 = vld [vmem:[%s1 + $0x468] sm:$0xff]
      %v327 = vld [vmem:[%s1 + $0x470] sm:$0xff]
      %v328 = vld [vmem:[%s1 + $0x478] sm:$0xff]
      %v329 = vld [vmem:[%s1 + $0x480] sm:$0xff]
      %v330 = vld [vmem:[%s1 + $0x488] sm:$0xff]
      %v331 = vld [vmem:[%s1 + $0x490] sm:$0xff]
      %v332 = vld [vmem:[%s1 + $0x498] sm:$0xff]
      %v333 = vld [vmem:[%s1 + $0x4a0] sm:$0xff]
      %v334 = vld [vmem:[%s1 + $0x4a8] sm:$0xff]
      %v335 = vld [vmem:[%s1 + $0x4b0] sm:$0xff]
      %v336 = vld [vmem:[%s1 + $0x4b8] sm:$0xff]
      %v337 = vld [vmem:[%s1 + $0x4c0] sm:$0xff]
      %v338 = vld [vmem:[%s1 + $0x4c8] sm:$0xff]
      %v339 = vld [vmem:[%s1 + $0x4d0] sm:$0xff]
      %v340 = vld [vmem:[%s1 + $0x4d8] sm:$0xff]
      %v341 = vld [vmem:[%s1 + $0x4e0] sm:$0xff]
      %v342 = vld [vmem:[%s1 + $0x4e8] sm:$0xff]
      %v343 = vld [vmem:[%s1 + $0x4f0] sm:$0xff]
      %v344 = vld [vmem:[%s1 + $0x4f8] sm:$0xff]
      %v345 = vld [vmem:[%s1 + $0x500] sm:$0xff]
      %v346 = vld [vmem:[%s1 + $0x508] sm:$0xff]
      %v347 = vld [vmem:[%s1 + $0x510] sm:$0xff]
      %v348 = vld [vmem:[%s1 + $0x518] sm:$0xff]
      %v349 = vld [vmem:[%s1 + $0x520] sm:$0xff]
      %v350 = vld [vmem:[%s1 + $0x528] sm:$0xff]
      %v351 = vld [vmem:[%s1 + $0x530] sm:$0xff]
      %v352 = vld [vmem:[%s1 + $0x538] sm:$0xff]
      %v353 = vld [vmem:[%s1 + $0x540] sm:$0xff]
      %v354 = vld [vmem:[%s1 + $0x548] sm:$0xff]
      %v355 = vld [vmem:[%s1 + $0x550] sm:$0xff]
      %v356 = vld [vmem:[%s1 + $0x558] sm:$0xff]
      %v357 = vld [vmem:[%s1 + $0x560] sm:$0xff]
      %v358 = vld [vmem:[%s1 + $0x568] sm:$0xff]
      %v359 = vld [vmem:[%s1 + $0x570] sm:$0xff]
      %v360 = vld [vmem:[%s1 + $0x578] sm:$0xff]
      %v361 = vld [vmem:[%s1 + $0x580] sm:$0xff]
      %v362 = vld [vmem:[%s1 + $0x588] sm:$0xff]
      %v363 = vld [vmem:[%s1 + $0x590] sm:$0xff]
      %v364 = vld [vmem:[%s1 + $0x598] sm:$0xff]
      %v365 = vld [vmem:[%s1 + $0x5a0] sm:$0xff]
      %v366 = vld [vmem:[%s1 + $0x5a8] sm:$0xff]
      %v367 = vld [vmem:[%s1 + $0x5b0] sm:$0xff]
      %v368 = vld [vmem:[%s1 + $0x5b8] sm:$0xff]
      %v369 = vld [vmem:[%s1 + $0x5c0] sm:$0xff]
      %v370 = vld [vmem:[%s1 + $0x5c8] sm:$0xff]
      %v371 = vld [vmem:[%s1 + $0x5d0] sm:$0xff]
      %v372 = vld [vmem:[%s1 + $0x5d8] sm:$0xff]
      %v373 = vld [vmem:[%s1 + $0x5e0] sm:$0xff]
      %v374 = vld [vmem:[%s1 + $0x5e8] sm:$0xff]
      %v375 = vld [vmem:[%s1 + $0x5f0] sm:$0xff]
      %v376 = vld [vmem:[%s1 + $0x5f8] sm:$0xff]
      %v377 = vld [vmem:[%s1 + $0x600] sm:$0xff]
      %v378 = vld [vmem:[%s1 + $0x608] sm:$0xff]
      %v379 = vld [vmem:[%s1 + $0x610] sm:$0xff]
      %v380 = vld [vmem:[%s1 + $0x618] sm:$0xff]
      %v381 = vld [vmem:[%s1 + $0x620] sm:$0xff]
      %v382 = vld [vmem:[%s1 + $0x628] sm:$0xff]
      %v383 = vld [vmem:[%s1 + $0x630] sm:$0xff]
      %v384 = vld [vmem:[%s1 + $0x638] sm:$0xff]
      %v385 = vld [vmem:[%s1 + $0x640] sm:$0xff]
      %v386 = vld [vmem:[%s1 + $0x648] sm:$0xff]
      %v387 = vld [vmem:[%s1 + $0x650] sm:$0xff]
      %v388 = vld [vmem:[%s1 + $0x658] sm:$0xff]
      %v389 = vld [vmem:[%s1 + $0x660] sm:$0xff]
      %v390 = vld [vmem:[%s1 + $0x668] sm:$0xff]
      %v391 = vld [vmem:[%s1 + $0x670] sm:$0xff]
      %v392 = vld [vmem:[%s1 + $0x678] sm:$0xff]
      %v393 = vld [vmem:[%s1 + $0x680] sm:$0xff]
      %v394 = vld [vmem:[%s1 + $0x688] sm:$0xff]
      %v395 = vld [vmem:[%s1 + $0x690] sm:$0xff]
      %v396 = vld [vmem:[%s1 + $0x698] sm:$0xff]
      %v397 = vld [vmem:[%s1 + $0x6a0] sm:$0xff]
      %v398 = vld [vmem:[%s1 + $0x6a8] sm:$0xff]
      %v399 = vld [vmem:[%s1 + $0x6b0] sm:$0xff]
      %v400 = vld [vmem:[%s1 + $0x6b8] sm:$0xff]
      %v401 = vld [vmem:[%s1 + $0x6c0] sm:$0xff]
      %v402 = vld [vmem:[%s1 + $0x6c8] sm:$0xff]
      %v403 = vld [vmem:[%s1 + $0x6d0] sm:$0xff]
      %v404 = vld [vmem:[%s1 + $0x6d8] sm:$0xff]
      %v405 = vld [vmem:[%s1 + $0x6e0] sm:$0xff]
      %v406 = vld [vmem:[%s1 + $0x6e8] sm:$0xff]
      %v407 = vld [vmem:[%s1 + $0x6f0] sm:$0xff]
      %v408 = vld [vmem:[%s1 + $0x6f8] sm:$0xff]
      %v409 = vld [vmem:[%s1 + $0x700] sm:$0xff]
      %v410 = vld [vmem:[%s1 + $0x708] sm:$0xff]
      %v411 = vld [vmem:[%s1 + $0x710] sm:$0xff]
      %v412 = vld [vmem:[%s1 + $0x718] sm:$0xff]
      %v413 = vld [vmem:[%s1 + $0x720] sm:$0xff]
      %v414 = vld [vmem:[%s1 + $0x728] sm:$0xff]
      %v415 = vld [vmem:[%s1 + $0x730] sm:$0xff]
      %v416 = vld [vmem:[%s1 + $0x738] sm:$0xff]
      %v417 = vld [vmem:[%s1 + $0x740] sm:$0xff]
      %v418 = vld [vmem:[%s1 + $0x748] sm:$0xff]
      %v419 = vld [vmem:[%s1 + $0x750] sm:$0xff]
      %v420 = vld [vmem:[%s1 + $0x758] sm:$0xff]
      %v421 = vld [vmem:[%s1 + $0x760] sm:$0xff]
      %v422 = vld [vmem:[%s1 + $0x768] sm:$0xff]
      %v423 = vld [vmem:[%s1 + $0x770] sm:$0xff]
      %v424 = vld [vmem:[%s1 + $0x778] sm:$0xff]
      %v425 = vld [vmem:[%s1 + $0x780] sm:$0xff]
      %v426 = vld [vmem:[%s1 + $0x788] sm:$0xff]
      %v427 = vld [vmem:[%s1 + $0x790] sm:$0xff]
      %v428 = vld [vmem:[%s1 + $0x798] sm:$0xff]
      %v429 = vld [vmem:[%s1 + $0x7a0] sm:$0xff]
      %v430 = vld [vmem:[%s1 + $0x7a8] sm:$0xff]
      %v431 = vld [vmem:[%s1 + $0x7b0] sm:$0xff]
      %v432 = vld [vmem:[%s1 + $0x7b8] sm:$0xff]
      %v433 = vld [vmem:[%s1 + $0x7c0] sm:$0xff]
      %v434 = vld [vmem:[%s1 + $0x7c8] sm:$0xff]
      %v435 = vld [vmem:[%s1 + $0x7d0] sm:$0xff]
      %v436 = vld [vmem:[%s1 + $0x7d8] sm:$0xff]
      %v437 = vld [vmem:[%s1 + $0x7e0] sm:$0xff]
      %v438 = vld [vmem:[%s1 + $0x7e8] sm:$0xff]
      %v439 = vld [vmem:[%s1 + $0x7f0] sm:$0xff]
      %v440 = vld [vmem:[%s1 + $0x7f8] sm:$0xff]
      %v449 = vunpack.c.l.b16 %v177
      %v450 = vunpack.c.h.b16 %v177
      %v451 = vunpack.c.l.b16 %v178
      %v452 = vunpack.c.h.b16 %v178
      %v453 = vunpack.c.l.b16 %v179
      %v454 = vunpack.c.h.b16 %v179
      %v455 = vunpack.c.l.b16 %v180
      %v456 = vunpack.c.h.b16 %v180
      %v457 = vunpack.c.l.b16 %v181
      %v458 = vunpack.c.h.b16 %v181
      %v459 = vunpack.c.l.b16 %v182
      %v460 = vunpack.c.h.b16 %v182
      %v461 = vunpack.c.l.b16 %v183
      %v462 = vunpack.c.h.b16 %v183
      %v463 = vunpack.c.l.b16 %v184
      %v464 = vunpack.c.h.b16 %v184
      %v465 = vpack.c.b16 %v457, %v449
      %v466 = vpack.c.b16 %v458, %v450
      %v467 = vpack.c.b16 %v459, %v451
      %v468 = vpack.c.b16 %v460, %v452
      %v469 = vpack.c.b16 %v461, %v453
      %v470 = vpack.c.b16 %v462, %v454
      %v471 = vpack.c.b16 %v463, %v455
      %v472 = vpack.c.b16 %v464, %v456
      %v737 = vunpack.c.l.b16 %v185
      %v738 = vunpack.c.h.b16 %v185
      %v739 = vunpack.c.l.b16 %v186
      %v740 = vunpack.c.h.b16 %v186
      %v741 = vunpack.c.l.b16 %v187
      %v742 = vunpack.c.h.b16 %v187
      %v743 = vunpack.c.l.b16 %v188
      %v744 = vunpack.c.h.b16 %v188
      %v745 = vunpack.c.l.b16 %v189
      %v746 = vunpack.c.h.b16 %v189
      %v747 = vunpack.c.l.b16 %v190
      %v748 = vunpack.c.h.b16 %v190
      %v749 = vunpack.c.l.b16 %v191
      %v750 = vunpack.c.h.b16 %v191
      %v751 = vunpack.c.l.b16 %v192
      %v752 = vunpack.c.h.b16 %v192
      %v753 = vunpack.c.l.b16 %v193
      %v754 = vunpack.c.h.b16 %v193
      %v755 = vunpack.c.l.b16 %v194
      %v756 = vunpack.c.h.b16 %v194
      %v757 = vunpack.c.l.b16 %v195
      %v758 = vunpack.c.h.b16 %v195
      %v759 = vunpack.c.l.b16 %v196
      %v760 = vunpack.c.h.b16 %v196
      %v761 = vunpack.c.l.b16 %v197
      %v762 = vunpack.c.h.b16 %v197
      %v763 = vunpack.c.l.b16 %v198
      %v764 = vunpack.c.h.b16 %v198
      %v765 = vunpack.c.l.b16 %v199
      %v766 = vunpack.c.h.b16 %v199
      %v767 = vunpack.c.l.b16 %v200
      %v768 = vunpack.c.h.b16 %v200
      %v769 = vunpack.c.l.b16 %v201
      %v770 = vunpack.c.h.b16 %v201
      %v771 = vunpack.c.l.b16 %v202
      %v772 = vunpack.c.h.b16 %v202
      %v773 = vunpack.c.l.b16 %v203
      %v774 = vunpack.c.h.b16 %v203
      %v775 = vunpack.c.l.b16 %v204
      %v776 = vunpack.c.h.b16 %v204
      %v777 = vunpack.c.l.b16 %v205
      %v778 = vunpack.c.h.b16 %v205
      %v779 = vunpack.c.l.b16 %v206
      %v780 = vunpack.c.h.b16 %v206
      %v781 = vunpack.c.l.b16 %v207
      %v782 = vunpack.c.h.b16 %v207
      %v783 = vunpack.c.l.b16 %v208
      %v784 = vunpack.c.h.b16 %v208
      %v785 = vunpack.c.l.b16 %v209
      %v786 = vunpack.c.h.b16 %v209
      %v787 = vunpack.c.l.b16 %v210
      %v788 = vunpack.c.h.b16 %v210
      %v789 = vunpack.c.l.b16 %v211
      %v790 = vunpack.c.h.b16 %v211
      %v791 = vunpack.c.l.b16 %v212
      %v792 = vunpack.c.h.b16 %v212
      %v793 = vunpack.c.l.b16 %v213
      %v794 = vunpack.c.h.b16 %v213
      %v795 = vunpack.c.l.b16 %v214
      %v796 = vunpack.c.h.b16 %v214
      %v797 = vunpack.c.l.b16 %v215
      %v798 = vunpack.c.h.b16 %v215
      %v799 = vunpack.c.l.b16 %v216
      %v800 = vunpack.c.h.b16 %v216
      %v801 = vunpack.c.l.b16 %v217
      %v802 = vunpack.c.h.b16 %v217
      %v803 = vunpack.c.l.b16 %v218
      %v804 = vunpack.c.h.b16 %v218
      %v805 = vunpack.c.l.b16 %v219
      %v806 = vunpack.c.h.b16 %v219
      %v807 = vunpack.c.l.b16 %v220
      %v808 = vunpack.c.h.b16 %v220
      %v809 = vunpack.c.l.b16 %v221
      %v810 = vunpack.c.h.b16 %v221
      %v811 = vunpack.c.l.b16 %v222
      %v812 = vunpack.c.h.b16 %v222
      %v813 = vunpack.c.l.b16 %v223
      %v814 = vunpack.c.h.b16 %v223
      %v815 = vunpack.c.l.b16 %v224
      %v816 = vunpack.c.h.b16 %v224
      %v817 = vunpack.c.l.b16 %v225
      %v818 = vunpack.c.h.b16 %v225
      %v819 = vunpack.c.l.b16 %v226
      %v820 = vunpack.c.h.b16 %v226
      %v821 = vunpack.c.l.b16 %v227
      %v822 = vunpack.c.h.b16 %v227
      %v823 = vunpack.c.l.b16 %v228
      %v824 = vunpack.c.h.b16 %v228
      %v825 = vunpack.c.l.b16 %v229
      %v826 = vunpack.c.h.b16 %v229
      %v827 = vunpack.c.l.b16 %v230
      %v828 = vunpack.c.h.b16 %v230
      %v829 = vunpack.c.l.b16 %v231
      %v830 = vunpack.c.h.b16 %v231
      %v831 = vunpack.c.l.b16 %v232
      %v832 = vunpack.c.h.b16 %v232
      %v833 = vunpack.c.l.b16 %v233
      %v834 = vunpack.c.h.b16 %v233
      %v835 = vunpack.c.l.b16 %v234
      %v836 = vunpack.c.h.b16 %v234
      %v837 = vunpack.c.l.b16 %v235
      %v838 = vunpack.c.h.b16 %v235
      %v839 = vunpack.c.l.b16 %v236
      %v840 = vunpack.c.h.b16 %v236
      %v841 = vunpack.c.l.b16 %v237
      %v842 = vunpack.c.h.b16 %v237
      %v843 = vunpack.c.l.b16 %v238
      %v844 = vunpack.c.h.b16 %v238
      %v845 = vunpack.c.l.b16 %v239
      %v846 = vunpack.c.h.b16 %v239
      %v847 = vunpack.c.l.b16 %v240
      %v848 = vunpack.c.h.b16 %v240
      %v849 = vunpack.c.l.b16 %v241
      %v850 = vunpack.c.h.b16 %v241
      %v851 = vunpack.c.l.b16 %v242
      %v852 = vunpack.c.h.b16 %v242
      %v853 = vunpack.c.l.b16 %v243
      %v854 = vunpack.c.h.b16 %v243
      %v855 = vunpack.c.l.b16 %v244
      %v856 = vunpack.c.h.b16 %v244
      %v857 = vunpack.c.l.b16 %v245
      %v858 = vunpack.c.h.b16 %v245
      %v859 = vunpack.c.l.b16 %v246
      %v860 = vunpack.c.h.b16 %v246
      %v861 = vunpack.c.l.b16 %v247
      %v862 = vunpack.c.h.b16 %v247
      %v863 = vunpack.c.l.b16 %v248
      %v864 = vunpack.c.h.b16 %v248
      %v865 = vunpack.c.l.b16 %v249
      %v866 = vunpack.c.h.b16 %v249
      %v867 = vunpack.c.l.b16 %v250
      %v868 = vunpack.c.h.b16 %v250
      %v869 = vunpack.c.l.b16 %v251
      %v870 = vunpack.c.h.b16 %v251
      %v871 = vunpack.c.l.b16 %v252
      %v872 = vunpack.c.h.b16 %v252
      %v873 = vunpack.c.l.b16 %v253
      %v874 = vunpack.c.h.b16 %v253
      %v875 = vunpack.c.l.b16 %v254
      %v876 = vunpack.c.h.b16 %v254
      %v877 = vunpack.c.l.b16 %v255
      %v878 = vunpack.c.h.b16 %v255
      %v879 = vunpack.c.l.b16 %v256
      %v880 = vunpack.c.h.b16 %v256
      %v881 = vunpack.c.l.b16 %v257
      %v882 = vunpack.c.h.b16 %v257
      %v883 = vunpack.c.l.b16 %v258
      %v884 = vunpack.c.h.b16 %v258
      %v885 = vunpack.c.l.b16 %v259
      %v886 = vunpack.c.h.b16 %v259
      %v887 = vunpack.c.l.b16 %v260
      %v888 = vunpack.c.h.b16 %v260
      %v889 = vunpack.c.l.b16 %v261
      %v890 = vunpack.c.h.b16 %v261
      %v891 = vunpack.c.l.b16 %v262
      %v892 = vunpack.c.h.b16 %v262
      %v893 = vunpack.c.l.b16 %v263
      %v894 = vunpack.c.h.b16 %v263
      %v895 = vunpack.c.l.b16 %v264
      %v896 = vunpack.c.h.b16 %v264
      %v897 = vunpack.c.l.b16 %v265
      %v898 = vunpack.c.h.b16 %v265
      %v899 = vunpack.c.l.b16 %v266
      %v900 = vunpack.c.h.b16 %v266
      %v901 = vunpack.c.l.b16 %v267
      %v902 = vunpack.c.h.b16 %v267
      %v903 = vunpack.c.l.b16 %v268
      %v904 = vunpack.c.h.b16 %v268
      %v905 = vunpack.c.l.b16 %v269
      %v906 = vunpack.c.h.b16 %v269
      %v907 = vunpack.c.l.b16 %v270
      %v908 = vunpack.c.h.b16 %v270
      %v909 = vunpack.c.l.b16 %v271
      %v910 = vunpack.c.h.b16 %v271
      %v911 = vunpack.c.l.b16 %v272
      %v912 = vunpack.c.h.b16 %v272
      %v913 = vunpack.c.l.b16 %v273
      %v914 = vunpack.c.h.b16 %v273
      %v915 = vunpack.c.l.b16 %v274
      %v916 = vunpack.c.h.b16 %v274
      %v917 = vunpack.c.l.b16 %v275
      %v918 = vunpack.c.h.b16 %v275
      %v919 = vunpack.c.l.b16 %v276
      %v920 = vunpack.c.h.b16 %v276
      %v921 = vunpack.c.l.b16 %v277
      %v922 = vunpack.c.h.b16 %v277
      %v923 = vunpack.c.l.b16 %v278
      %v924 = vunpack.c.h.b16 %v278
      %v925 = vunpack.c.l.b16 %v279
      %v926 = vunpack.c.h.b16 %v279
      %v927 = vunpack.c.l.b16 %v280
      %v928 = vunpack.c.h.b16 %v280
      %v929 = vunpack.c.l.b16 %v281
      %v930 = vunpack.c.h.b16 %v281
      %v931 = vunpack.c.l.b16 %v282
      %v932 = vunpack.c.h.b16 %v282
      %v933 = vunpack.c.l.b16 %v283
      %v934 = vunpack.c.h.b16 %v283
      %v935 = vunpack.c.l.b16 %v284
      %v936 = vunpack.c.h.b16 %v284
      %v937 = vunpack.c.l.b16 %v285
      %v938 = vunpack.c.h.b16 %v285
      %v939 = vunpack.c.l.b16 %v286
      %v940 = vunpack.c.h.b16 %v286
      %v941 = vunpack.c.l.b16 %v287
      %v942 = vunpack.c.h.b16 %v287
      %v943 = vunpack.c.l.b16 %v288
      %v944 = vunpack.c.h.b16 %v288
      %v945 = vunpack.c.l.b16 %v289
      %v946 = vunpack.c.h.b16 %v289
      %v947 = vunpack.c.l.b16 %v290
      %v948 = vunpack.c.h.b16 %v290
      %v949 = vunpack.c.l.b16 %v291
      %v950 = vunpack.c.h.b16 %v291
      %v951 = vunpack.c.l.b16 %v292
      %v952 = vunpack.c.h.b16 %v292
      %v953 = vunpack.c.l.b16 %v293
      %v954 = vunpack.c.h.b16 %v293
      %v955 = vunpack.c.l.b16 %v294
      %v956 = vunpack.c.h.b16 %v294
      %v957 = vunpack.c.l.b16 %v295
      %v958 = vunpack.c.h.b16 %v295
      %v959 = vunpack.c.l.b16 %v296
      %v960 = vunpack.c.h.b16 %v296
      %v961 = vunpack.c.l.b16 %v297
      %v962 = vunpack.c.h.b16 %v297
      %v963 = vunpack.c.l.b16 %v298
      %v964 = vunpack.c.h.b16 %v298
      %v965 = vunpack.c.l.b16 %v299
      %v966 = vunpack.c.h.b16 %v299
      %v967 = vunpack.c.l.b16 %v300
      %v968 = vunpack.c.h.b16 %v300
      %v969 = vunpack.c.l.b16 %v301
      %v970 = vunpack.c.h.b16 %v301
      %v971 = vunpack.c.l.b16 %v302
      %v972 = vunpack.c.h.b16 %v302
      %v973 = vunpack.c.l.b16 %v303
      %v974 = vunpack.c.h.b16 %v303
      %v975 = vunpack.c.l.b16 %v304
      %v976 = vunpack.c.h.b16 %v304
      %v977 = vunpack.c.l.b16 %v305
      %v978 = vunpack.c.h.b16 %v305
      %v979 = vunpack.c.l.b16 %v306
      %v980 = vunpack.c.h.b16 %v306
      %v981 = vunpack.c.l.b16 %v307
      %v982 = vunpack.c.h.b16 %v307
      %v983 = vunpack.c.l.b16 %v308
      %v984 = vunpack.c.h.b16 %v308
      %v985 = vunpack.c.l.b16 %v309
      %v986 = vunpack.c.h.b16 %v309
      %v987 = vunpack.c.l.b16 %v310
      %v988 = vunpack.c.h.b16 %v310
      %v989 = vunpack.c.l.b16 %v311
      %v990 = vunpack.c.h.b16 %v311
      %v991 = vunpack.c.l.b16 %v312
      %v992 = vunpack.c.h.b16 %v312
      %v993 = vunpack.c.l.b16 %v313
      %v994 = vunpack.c.h.b16 %v313
      %v995 = vunpack.c.l.b16 %v314
      %v996 = vunpack.c.h.b16 %v314
      %v997 = vunpack.c.l.b16 %v315
      %v998 = vunpack.c.h.b16 %v315
      %v999 = vunpack.c.l.b16 %v316
      %v1000 = vunpack.c.h.b16 %v316
      %v1001 = vunpack.c.l.b16 %v317
      %v1002 = vunpack.c.h.b16 %v317
      %v1003 = vunpack.c.l.b16 %v318
      %v1004 = vunpack.c.h.b16 %v318
      %v1005 = vunpack.c.l.b16 %v319
      %v1006 = vunpack.c.h.b16 %v319
      %v1007 = vunpack.c.l.b16 %v320
      %v1008 = vunpack.c.h.b16 %v320
      %v1009 = vunpack.c.l.b16 %v321
      %v1010 = vunpack.c.h.b16 %v321
      %v1011 = vunpack.c.l.b16 %v322
      %v1012 = vunpack.c.h.b16 %v322
      %v1013 = vunpack.c.l.b16 %v323
      %v1014 = vunpack.c.h.b16 %v323
      %v1015 = vunpack.c.l.b16 %v324
      %v1016 = vunpack.c.h.b16 %v324
      %v1017 = vunpack.c.l.b16 %v325
      %v1018 = vunpack.c.h.b16 %v325
      %v1019 = vunpack.c.l.b16 %v326
      %v1020 = vunpack.c.h.b16 %v326
      %v1021 = vunpack.c.l.b16 %v327
      %v1022 = vunpack.c.h.b16 %v327
      %v1023 = vunpack.c.l.b16 %v328
      %v1024 = vunpack.c.h.b16 %v328
      %v1025 = vunpack.c.l.b16 %v329
      %v1026 = vunpack.c.h.b16 %v329
      %v1027 = vunpack.c.l.b16 %v330
      %v1028 = vunpack.c.h.b16 %v330
      %v1029 = vunpack.c.l.b16 %v331
      %v1030 = vunpack.c.h.b16 %v331
      %v1031 = vunpack.c.l.b16 %v332
      %v1032 = vunpack.c.h.b16 %v332
      %v1033 = vunpack.c.l.b16 %v333
      %v1034 = vunpack.c.h.b16 %v333
      %v1035 = vunpack.c.l.b16 %v334
      %v1036 = vunpack.c.h.b16 %v334
      %v1037 = vunpack.c.l.b16 %v335
      %v1038 = vunpack.c.h.b16 %v335
      %v1039 = vunpack.c.l.b16 %v336
      %v1040 = vunpack.c.h.b16 %v336
      %v1041 = vunpack.c.l.b16 %v337
      %v1042 = vunpack.c.h.b16 %v337
      %v1043 = vunpack.c.l.b16 %v338
      %v1044 = vunpack.c.h.b16 %v338
      %v1045 = vunpack.c.l.b16 %v339
      %v1046 = vunpack.c.h.b16 %v339
      %v1047 = vunpack.c.l.b16 %v340
      %v1048 = vunpack.c.h.b16 %v340
      %v1049 = vunpack.c.l.b16 %v341
      %v1050 = vunpack.c.h.b16 %v341
      %v1051 = vunpack.c.l.b16 %v342
      %v1052 = vunpack.c.h.b16 %v342
      %v1053 = vunpack.c.l.b16 %v343
      %v1054 = vunpack.c.h.b16 %v343
      %v1055 = vunpack.c.l.b16 %v344
      %v1056 = vunpack.c.h.b16 %v344
      %v1057 = vunpack.c.l.b16 %v345
      %v1058 = vunpack.c.h.b16 %v345
      %v1059 = vunpack.c.l.b16 %v346
      %v1060 = vunpack.c.h.b16 %v346
      %v1061 = vunpack.c.l.b16 %v347
      %v1062 = vunpack.c.h.b16 %v347
      %v1063 = vunpack.c.l.b16 %v348
      %v1064 = vunpack.c.h.b16 %v348
      %v1065 = vunpack.c.l.b16 %v349
      %v1066 = vunpack.c.h.b16 %v349
      %v1067 = vunpack.c.l.b16 %v350
      %v1068 = vunpack.c.h.b16 %v350
      %v1069 = vunpack.c.l.b16 %v351
      %v1070 = vunpack.c.h.b16 %v351
      %v1071 = vunpack.c.l.b16 %v352
      %v1072 = vunpack.c.h.b16 %v352
      %v1073 = vunpack.c.l.b16 %v353
      %v1074 = vunpack.c.h.b16 %v353
      %v1075 = vunpack.c.l.b16 %v354
      %v1076 = vunpack.c.h.b16 %v354
      %v1077 = vunpack.c.l.b16 %v355
      %v1078 = vunpack.c.h.b16 %v355
      %v1079 = vunpack.c.l.b16 %v356
      %v1080 = vunpack.c.h.b16 %v356
      %v1081 = vunpack.c.l.b16 %v357
      %v1082 = vunpack.c.h.b16 %v357
      %v1083 = vunpack.c.l.b16 %v358
      %v1084 = vunpack.c.h.b16 %v358
      %v1085 = vunpack.c.l.b16 %v359
      %v1086 = vunpack.c.h.b16 %v359
      %v1087 = vunpack.c.l.b16 %v360
      %v1088 = vunpack.c.h.b16 %v360
      %v1089 = vunpack.c.l.b16 %v361
      %v1090 = vunpack.c.h.b16 %v361
      %v1091 = vunpack.c.l.b16 %v362
      %v1092 = vunpack.c.h.b16 %v362
      %v1093 = vunpack.c.l.b16 %v363
      %v1094 = vunpack.c.h.b16 %v363
      %v1095 = vunpack.c.l.b16 %v364
      %v1096 = vunpack.c.h.b16 %v364
      %v1097 = vunpack.c.l.b16 %v365
      %v1098 = vunpack.c.h.b16 %v365
      %v1099 = vunpack.c.l.b16 %v366
      %v1100 = vunpack.c.h.b16 %v366
      %v1101 = vunpack.c.l.b16 %v367
      %v1102 = vunpack.c.h.b16 %v367
      %v1103 = vunpack.c.l.b16 %v368
      %v1104 = vunpack.c.h.b16 %v368
      %v1105 = vunpack.c.l.b16 %v369
      %v1106 = vunpack.c.h.b16 %v369
      %v1107 = vunpack.c.l.b16 %v370
      %v1108 = vunpack.c.h.b16 %v370
      %v1109 = vunpack.c.l.b16 %v371
      %v1110 = vunpack.c.h.b16 %v371
      %v1111 = vunpack.c.l.b16 %v372
      %v1112 = vunpack.c.h.b16 %v372
      %v1113 = vunpack.c.l.b16 %v373
      %v1114 = vunpack.c.h.b16 %v373
      %v1115 = vunpack.c.l.b16 %v374
      %v1116 = vunpack.c.h.b16 %v374
      %v1117 = vunpack.c.l.b16 %v375
      %v1118 = vunpack.c.h.b16 %v375
      %v1119 = vunpack.c.l.b16 %v376
      %v1120 = vunpack.c.h.b16 %v376
      %v1121 = vunpack.c.l.b16 %v377
      %v1122 = vunpack.c.h.b16 %v377
      %v1123 = vunpack.c.l.b16 %v378
      %v1124 = vunpack.c.h.b16 %v378
      %v1125 = vunpack.c.l.b16 %v379
      %v1126 = vunpack.c.h.b16 %v379
      %v1127 = vunpack.c.l.b16 %v380
      %v1128 = vunpack.c.h.b16 %v380
      %v1129 = vunpack.c.l.b16 %v381
      %v1130 = vunpack.c.h.b16 %v381
      %v1131 = vunpack.c.l.b16 %v382
      %v1132 = vunpack.c.h.b16 %v382
      %v1133 = vunpack.c.l.b16 %v383
      %v1134 = vunpack.c.h.b16 %v383
      %v1135 = vunpack.c.l.b16 %v384
      %v1136 = vunpack.c.h.b16 %v384
      %v1137 = vunpack.c.l.b16 %v385
      %v1138 = vunpack.c.h.b16 %v385
      %v1139 = vunpack.c.l.b16 %v386
      %v1140 = vunpack.c.h.b16 %v386
      %v1141 = vunpack.c.l.b16 %v387
      %v1142 = vunpack.c.h.b16 %v387
      %v1143 = vunpack.c.l.b16 %v388
      %v1144 = vunpack.c.h.b16 %v388
      %v1145 = vunpack.c.l.b16 %v389
      %v1146 = vunpack.c.h.b16 %v389
      %v1147 = vunpack.c.l.b16 %v390
      %v1148 = vunpack.c.h.b16 %v390
      %v1149 = vunpack.c.l.b16 %v391
      %v1150 = vunpack.c.h.b16 %v391
      %v1151 = vunpack.c.l.b16 %v392
      %v1152 = vunpack.c.h.b16 %v392
      %v1153 = vunpack.c.l.b16 %v393
      %v1154 = vunpack.c.h.b16 %v393
      %v1155 = vunpack.c.l.b16 %v394
      %v1156 = vunpack.c.h.b16 %v394
      %v1157 = vunpack.c.l.b16 %v395
      %v1158 = vunpack.c.h.b16 %v395
      %v1159 = vunpack.c.l.b16 %v396
      %v1160 = vunpack.c.h.b16 %v396
      %v1161 = vunpack.c.l.b16 %v397
      %v1162 = vunpack.c.h.b16 %v397
      %v1163 = vunpack.c.l.b16 %v398
      %v1164 = vunpack.c.h.b16 %v398
      %v1165 = vunpack.c.l.b16 %v399
      %v1166 = vunpack.c.h.b16 %v399
      %v1167 = vunpack.c.l.b16 %v400
      %v1168 = vunpack.c.h.b16 %v400
      %v1169 = vunpack.c.l.b16 %v401
      %v1170 = vunpack.c.h.b16 %v401
      %v1171 = vunpack.c.l.b16 %v402
      %v1172 = vunpack.c.h.b16 %v402
      %v1173 = vunpack.c.l.b16 %v403
      %v1174 = vunpack.c.h.b16 %v403
      %v1175 = vunpack.c.l.b16 %v404
      %v1176 = vunpack.c.h.b16 %v404
      %v1177 = vunpack.c.l.b16 %v405
      %v1178 = vunpack.c.h.b16 %v405
      %v1179 = vunpack.c.l.b16 %v406
      %v1180 = vunpack.c.h.b16 %v406
      %v1181 = vunpack.c.l.b16 %v407
      %v1182 = vunpack.c.h.b16 %v407
      %v1183 = vunpack.c.l.b16 %v408
      %v1184 = vunpack.c.h.b16 %v408
      %v1185 = vunpack.c.l.b16 %v409
      %v1186 = vunpack.c.h.b16 %v409
      %v1187 = vunpack.c.l.b16 %v410
      %v1188 = vunpack.c.h.b16 %v410
      %v1189 = vunpack.c.l.b16 %v411
      %v1190 = vunpack.c.h.b16 %v411
      %v1191 = vunpack.c.l.b16 %v412
      %v1192 = vunpack.c.h.b16 %v412
      %v1193 = vunpack.c.l.b16 %v413
      %v1194 = vunpack.c.h.b16 %v413
      %v1195 = vunpack.c.l.b16 %v414
      %v1196 = vunpack.c.h.b16 %v414
      %v1197 = vunpack.c.l.b16 %v415
      %v1198 = vunpack.c.h.b16 %v415
      %v1199 = vunpack.c.l.b16 %v416
      %v1200 = vunpack.c.h.b16 %v416
      %v1201 = vunpack.c.l.b16 %v417
      %v1202 = vunpack.c.h.b16 %v417
      %v1203 = vunpack.c.l.b16 %v418
      %v1204 = vunpack.c.h.b16 %v418
      %v1205 = vunpack.c.l.b16 %v419
      %v1206 = vunpack.c.h.b16 %v419
      %v1207 = vunpack.c.l.b16 %v420
      %v1208 = vunpack.c.h.b16 %v420
      %v1209 = vunpack.c.l.b16 %v421
      %v1210 = vunpack.c.h.b16 %v421
      %v1211 = vunpack.c.l.b16 %v422
      %v1212 = vunpack.c.h.b16 %v422
      %v1213 = vunpack.c.l.b16 %v423
      %v1214 = vunpack.c.h.b16 %v423
      %v1215 = vunpack.c.l.b16 %v424
      %v1216 = vunpack.c.h.b16 %v424
      %v1217 = vunpack.c.l.b16 %v425
      %v1218 = vunpack.c.h.b16 %v425
      %v1219 = vunpack.c.l.b16 %v426
      %v1220 = vunpack.c.h.b16 %v426
      %v1221 = vunpack.c.l.b16 %v427
      %v1222 = vunpack.c.h.b16 %v427
      %v1223 = vunpack.c.l.b16 %v428
      %v1224 = vunpack.c.h.b16 %v428
      %v1225 = vunpack.c.l.b16 %v429
      %v1226 = vunpack.c.h.b16 %v429
      %v1227 = vunpack.c.l.b16 %v430
      %v1228 = vunpack.c.h.b16 %v430
      %v1229 = vunpack.c.l.b16 %v431
      %v1230 = vunpack.c.h.b16 %v431
      %v1231 = vunpack.c.l.b16 %v432
      %v1232 = vunpack.c.h.b16 %v432
      %v1233 = vunpack.c.l.b16 %v433
      %v1234 = vunpack.c.h.b16 %v433
      %v1235 = vunpack.c.l.b16 %v434
      %v1236 = vunpack.c.h.b16 %v434
      %v1237 = vunpack.c.l.b16 %v435
      %v1238 = vunpack.c.h.b16 %v435
      %v1239 = vunpack.c.l.b16 %v436
      %v1240 = vunpack.c.h.b16 %v436
      %v1241 = vunpack.c.l.b16 %v437
      %v1242 = vunpack.c.h.b16 %v437
      %v1243 = vunpack.c.l.b16 %v438
      %v1244 = vunpack.c.h.b16 %v438
      %v1245 = vunpack.c.l.b16 %v439
      %v1246 = vunpack.c.h.b16 %v439
      %v1247 = vunpack.c.l.b16 %v440
      %v1248 = vunpack.c.h.b16 %v440
      %v1249 = vpack.c.b16 %v741, %v737
      %v1250 = vpack.c.b16 %v742, %v738
      %v1251 = vpack.c.b16 %v743, %v739
      %v1252 = vpack.c.b16 %v744, %v740
      %v1253 = vpack.c.b16 %v749, %v745
      %v1254 = vpack.c.b16 %v750, %v746
      %v1255 = vpack.c.b16 %v751, %v747
      %v1256 = vpack.c.b16 %v752, %v748
      %v1257 = vpack.c.b16 %v757, %v753
      %v1258 = vpack.c.b16 %v758, %v754
      %v1259 = vpack.c.b16 %v759, %v755
      %v1260 = vpack.c.b16 %v760, %v756
      %v1261 = vpack.c.b16 %v765, %v761
      %v1262 = vpack.c.b16 %v766, %v762
      %v1263 = vpack.c.b16 %v767, %v763
      %v1264 = vpack.c.b16 %v768, %v764
      %v1265 = vpack.c.b16 %v773, %v769
      %v1266 = vpack.c.b16 %v774, %v770
      %v1267 = vpack.c.b16 %v775, %v771
      %v1268 = vpack.c.b16 %v776, %v772
      %v1269 = vpack.c.b16 %v781, %v777
      %v1270 = vpack.c.b16 %v782, %v778
      %v1271 = vpack.c.b16 %v783, %v779
      %v1272 = vpack.c.b16 %v784, %v780
      %v1273 = vpack.c.b16 %v789, %v785
      %v1274 = vpack.c.b16 %v790, %v786
      %v1275 = vpack.c.b16 %v791, %v787
      %v1276 = vpack.c.b16 %v792, %v788
      %v1277 = vpack.c.b16 %v797, %v793
      %v1278 = vpack.c.b16 %v798, %v794
      %v1279 = vpack.c.b16 %v799, %v795
      %v1280 = vpack.c.b16 %v800, %v796
      %v1281 = vpack.c.b16 %v805, %v801
      %v1282 = vpack.c.b16 %v806, %v802
      %v1283 = vpack.c.b16 %v807, %v803
      %v1284 = vpack.c.b16 %v808, %v804
      %v1285 = vpack.c.b16 %v813, %v809
      %v1286 = vpack.c.b16 %v814, %v810
      %v1287 = vpack.c.b16 %v815, %v811
      %v1288 = vpack.c.b16 %v816, %v812
      %v1289 = vpack.c.b16 %v821, %v817
      %v1290 = vpack.c.b16 %v822, %v818
      %v1291 = vpack.c.b16 %v823, %v819
      %v1292 = vpack.c.b16 %v824, %v820
      %v1293 = vpack.c.b16 %v829, %v825
      %v1294 = vpack.c.b16 %v830, %v826
      %v1295 = vpack.c.b16 %v831, %v827
      %v1296 = vpack.c.b16 %v832, %v828
      %v1297 = vpack.c.b16 %v837, %v833
      %v1298 = vpack.c.b16 %v838, %v834
      %v1299 = vpack.c.b16 %v839, %v835
      %v1300 = vpack.c.b16 %v840, %v836
      %v1301 = vpack.c.b16 %v845, %v841
      %v1302 = vpack.c.b16 %v846, %v842
      %v1303 = vpack.c.b16 %v847, %v843
      %v1304 = vpack.c.b16 %v848, %v844
      %v1305 = vpack.c.b16 %v853, %v849
      %v1306 = vpack.c.b16 %v854, %v850
      %v1307 = vpack.c.b16 %v855, %v851
      %v1308 = vpack.c.b16 %v856, %v852
      %v1309 = vpack.c.b16 %v861, %v857
      %v1310 = vpack.c.b16 %v862, %v858
      %v1311 = vpack.c.b16 %v863, %v859
      %v1312 = vpack.c.b16 %v864, %v860
      %v1313 = vpack.c.b16 %v869, %v865
      %v1314 = vpack.c.b16 %v870, %v866
      %v1315 = vpack.c.b16 %v871, %v867
      %v1316 = vpack.c.b16 %v872, %v868
      %v1317 = vpack.c.b16 %v877, %v873
      %v1318 = vpack.c.b16 %v878, %v874
      %v1319 = vpack.c.b16 %v879, %v875
      %v1320 = vpack.c.b16 %v880, %v876
      %v1321 = vpack.c.b16 %v885, %v881
      %v1322 = vpack.c.b16 %v886, %v882
      %v1323 = vpack.c.b16 %v887, %v883
      %v1324 = vpack.c.b16 %v888, %v884
      %v1325 = vpack.c.b16 %v893, %v889
      %v1326 = vpack.c.b16 %v894, %v890
      %v1327 = vpack.c.b16 %v895, %v891
      %v1328 = vpack.c.b16 %v896, %v892
      %v1329 = vpack.c.b16 %v901, %v897
      %v1330 = vpack.c.b16 %v902, %v898
      %v1331 = vpack.c.b16 %v903, %v899
      %v1332 = vpack.c.b16 %v904, %v900
      %v1333 = vpack.c.b16 %v909, %v905
      %v1334 = vpack.c.b16 %v910, %v906
      %v1335 = vpack.c.b16 %v911, %v907
      %v1336 = vpack.c.b16 %v912, %v908
      %v1337 = vpack.c.b16 %v917, %v913
      %v1338 = vpack.c.b16 %v918, %v914
      %v1339 = vpack.c.b16 %v919, %v915
      %v1340 = vpack.c.b16 %v920, %v916
      %v1341 = vpack.c.b16 %v925, %v921
      %v1342 = vpack.c.b16 %v926, %v922
      %v1343 = vpack.c.b16 %v927, %v923
      %v1344 = vpack.c.b16 %v928, %v924
      %v1345 = vpack.c.b16 %v933, %v929
      %v1346 = vpack.c.b16 %v934, %v930
      %v1347 = vpack.c.b16 %v935, %v931
      %v1348 = vpack.c.b16 %v936, %v932
      %v1349 = vpack.c.b16 %v941, %v937
      %v1350 = vpack.c.b16 %v942, %v938
      %v1351 = vpack.c.b16 %v943, %v939
      %v1352 = vpack.c.b16 %v944, %v940
      %v1353 = vpack.c.b16 %v949, %v945
      %v1354 = vpack.c.b16 %v950, %v946
      %v1355 = vpack.c.b16 %v951, %v947
      %v1356 = vpack.c.b16 %v952, %v948
      %v1357 = vpack.c.b16 %v957, %v953
      %v1358 = vpack.c.b16 %v958, %v954
      %v1359 = vpack.c.b16 %v959, %v955
      %v1360 = vpack.c.b16 %v960, %v956
      %v1361 = vpack.c.b16 %v965, %v961
      %v1362 = vpack.c.b16 %v966, %v962
      %v1363 = vpack.c.b16 %v967, %v963
      %v1364 = vpack.c.b16 %v968, %v964
      %v1365 = vpack.c.b16 %v973, %v969
      %v1366 = vpack.c.b16 %v974, %v970
      %v1367 = vpack.c.b16 %v975, %v971
      %v1368 = vpack.c.b16 %v976, %v972
      %v1369 = vpack.c.b16 %v981, %v977
      %v1370 = vpack.c.b16 %v982, %v978
      %v1371 = vpack.c.b16 %v983, %v979
      %v1372 = vpack.c.b16 %v984, %v980
      %v1373 = vpack.c.b16 %v989, %v985
      %v1374 = vpack.c.b16 %v990, %v986
      %v1375 = vpack.c.b16 %v991, %v987
      %v1376 = vpack.c.b16 %v992, %v988
      %v1377 = vpack.c.b16 %v997, %v993
      %v1378 = vpack.c.b16 %v998, %v994
      %v1379 = vpack.c.b16 %v999, %v995
      %v1380 = vpack.c.b16 %v1000, %v996
      %v1381 = vpack.c.b16 %v1005, %v1001
      %v1382 = vpack.c.b16 %v1006, %v1002
      %v1383 = vpack.c.b16 %v1007, %v1003
      %v1384 = vpack.c.b16 %v1008, %v1004
      %v1385 = vpack.c.b16 %v1013, %v1009
      %v1386 = vpack.c.b16 %v1014, %v1010
      %v1387 = vpack.c.b16 %v1015, %v1011
      %v1388 = vpack.c.b16 %v1016, %v1012
      %v1389 = vpack.c.b16 %v1021, %v1017
      %v1390 = vpack.c.b16 %v1022, %v1018
      %v1391 = vpack.c.b16 %v1023, %v1019
      %v1392 = vpack.c.b16 %v1024, %v1020
      %v1393 = vpack.c.b16 %v1029, %v1025
      %v1394 = vpack.c.b16 %v1030, %v1026
      %v1395 = vpack.c.b16 %v1031, %v1027
      %v1396 = vpack.c.b16 %v1032, %v1028
      %v1397 = vpack.c.b16 %v1037, %v1033
      %v1398 = vpack.c.b16 %v1038, %v1034
      %v1399 = vpack.c.b16 %v1039, %v1035
      %v1400 = vpack.c.b16 %v1040, %v1036
      %v1401 = vpack.c.b16 %v1045, %v1041
      %v1402 = vpack.c.b16 %v1046, %v1042
      %v1403 = vpack.c.b16 %v1047, %v1043
      %v1404 = vpack.c.b16 %v1048, %v1044
      %v1405 = vpack.c.b16 %v1053, %v1049
      %v1406 = vpack.c.b16 %v1054, %v1050
      %v1407 = vpack.c.b16 %v1055, %v1051
      %v1408 = vpack.c.b16 %v1056, %v1052
      %v1409 = vpack.c.b16 %v1061, %v1057
      %v1410 = vpack.c.b16 %v1062, %v1058
      %v1411 = vpack.c.b16 %v1063, %v1059
      %v1412 = vpack.c.b16 %v1064, %v1060
      %v1413 = vpack.c.b16 %v1069, %v1065
      %v1414 = vpack.c.b16 %v1070, %v1066
      %v1415 = vpack.c.b16 %v1071, %v1067
      %v1416 = vpack.c.b16 %v1072, %v1068
      %v1417 = vpack.c.b16 %v1077, %v1073
      %v1418 = vpack.c.b16 %v1078, %v1074
      %v1419 = vpack.c.b16 %v1079, %v1075
      %v1420 = vpack.c.b16 %v1080, %v1076
      %v1421 = vpack.c.b16 %v1085, %v1081
      %v1422 = vpack.c.b16 %v1086, %v1082
      %v1423 = vpack.c.b16 %v1087, %v1083
      %v1424 = vpack.c.b16 %v1088, %v1084
      %v1425 = vpack.c.b16 %v1093, %v1089
      %v1426 = vpack.c.b16 %v1094, %v1090
      %v1427 = vpack.c.b16 %v1095, %v1091
      %v1428 = vpack.c.b16 %v1096, %v1092
      %v1429 = vpack.c.b16 %v1101, %v1097
      %v1430 = vpack.c.b16 %v1102, %v1098
      %v1431 = vpack.c.b16 %v1103, %v1099
      %v1432 = vpack.c.b16 %v1104, %v1100
      %v1433 = vpack.c.b16 %v1109, %v1105
      %v1434 = vpack.c.b16 %v1110, %v1106
      %v1435 = vpack.c.b16 %v1111, %v1107
      %v1436 = vpack.c.b16 %v1112, %v1108
      %v1437 = vpack.c.b16 %v1117, %v1113
      %v1438 = vpack.c.b16 %v1118, %v1114
      %v1439 = vpack.c.b16 %v1119, %v1115
      %v1440 = vpack.c.b16 %v1120, %v1116
      %v1441 = vpack.c.b16 %v1125, %v1121
      %v1442 = vpack.c.b16 %v1126, %v1122
      %v1443 = vpack.c.b16 %v1127, %v1123
      %v1444 = vpack.c.b16 %v1128, %v1124
      %v1445 = vpack.c.b16 %v1133, %v1129
      %v1446 = vpack.c.b16 %v1134, %v1130
      %v1447 = vpack.c.b16 %v1135, %v1131
      %v1448 = vpack.c.b16 %v1136, %v1132
      %v1449 = vpack.c.b16 %v1141, %v1137
      %v1450 = vpack.c.b16 %v1142, %v1138
      %v1451 = vpack.c.b16 %v1143, %v1139
      %v1452 = vpack.c.b16 %v1144, %v1140
      %v1453 = vpack.c.b16 %v1149, %v1145
      %v1454 = vpack.c.b16 %v1150, %v1146
      %v1455 = vpack.c.b16 %v1151, %v1147
      %v1456 = vpack.c.b16 %v1152, %v1148
      %v1457 = vpack.c.b16 %v1157, %v1153
      %v1458 = vpack.c.b16 %v1158, %v1154
      %v1459 = vpack.c.b16 %v1159, %v1155
      %v1460 = vpack.c.b16 %v1160, %v1156
      %v1461 = vpack.c.b16 %v1165, %v1161
      %v1462 = vpack.c.b16 %v1166, %v1162
      %v1463 = vpack.c.b16 %v1167, %v1163
      %v1464 = vpack.c.b16 %v1168, %v1164
      %v1465 = vpack.c.b16 %v1173, %v1169
      %v1466 = vpack.c.b16 %v1174, %v1170
      %v1467 = vpack.c.b16 %v1175, %v1171
      %v1468 = vpack.c.b16 %v1176, %v1172
      %v1469 = vpack.c.b16 %v1181, %v1177
      %v1470 = vpack.c.b16 %v1182, %v1178
      %v1471 = vpack.c.b16 %v1183, %v1179
      %v1472 = vpack.c.b16 %v1184, %v1180
      %v1473 = vpack.c.b16 %v1189, %v1185
      %v1474 = vpack.c.b16 %v1190, %v1186
      %v1475 = vpack.c.b16 %v1191, %v1187
      %v1476 = vpack.c.b16 %v1192, %v1188
      %v1477 = vpack.c.b16 %v1197, %v1193
      %v1478 = vpack.c.b16 %v1198, %v1194
      %v1479 = vpack.c.b16 %v1199, %v1195
      %v1480 = vpack.c.b16 %v1200, %v1196
      %v1481 = vpack.c.b16 %v1205, %v1201
      %v1482 = vpack.c.b16 %v1206, %v1202
      %v1483 = vpack.c.b16 %v1207, %v1203
      %v1484 = vpack.c.b16 %v1208, %v1204
      %v1485 = vpack.c.b16 %v1213, %v1209
      %v1486 = vpack.c.b16 %v1214, %v1210
      %v1487 = vpack.c.b16 %v1215, %v1211
      %v1488 = vpack.c.b16 %v1216, %v1212
      %v1489 = vpack.c.b16 %v1221, %v1217
      %v1490 = vpack.c.b16 %v1222, %v1218
      %v1491 = vpack.c.b16 %v1223, %v1219
      %v1492 = vpack.c.b16 %v1224, %v1220
      %v1493 = vpack.c.b16 %v1229, %v1225
      %v1494 = vpack.c.b16 %v1230, %v1226
      %v1495 = vpack.c.b16 %v1231, %v1227
      %v1496 = vpack.c.b16 %v1232, %v1228
      %v1497 = vpack.c.b16 %v1237, %v1233
      %v1498 = vpack.c.b16 %v1238, %v1234
      %v1499 = vpack.c.b16 %v1239, %v1235
      %v1500 = vpack.c.b16 %v1240, %v1236
      %v1501 = vpack.c.b16 %v1245, %v1241
      %v1502 = vpack.c.b16 %v1246, %v1242
      %v1503 = vpack.c.b16 %v1247, %v1243
      %v1504 = vpack.c.b16 %v1248, %v1244
      %1761 = vmatprep.subr.bf16.mxu0 %v1278
      %1762 = vmatpush1.bf16.msra.mxu0 %v1277
      %1763 = vmatprep.subr.bf16.mxu0 %v1274
      %1764 = vmatpush1.bf16.msra.mxu0 %v1273
      %1765 = vmatprep.subr.bf16.mxu0 %v1270
      %1766 = vmatpush1.bf16.msra.mxu0 %v1269
      %1767 = vmatprep.subr.bf16.mxu0 %v1266
      %1768 = vmatpush1.bf16.msra.mxu0 %v1265
      %1769 = vmatprep.subr.bf16.mxu0 %v1262
      %1770 = vmatpush1.bf16.msra.mxu0 %v1261
      %1771 = vmatprep.subr.bf16.mxu0 %v1258
      %1772 = vmatpush1.bf16.msra.mxu0 %v1257
      %1773 = vmatprep.subr.bf16.mxu0 %v1254
      %1774 = vmatpush1.bf16.msra.mxu0 %v1253
      %1775 = vmatprep.subr.bf16.mxu0 %v1250
      %1776 = vmatpush1.bf16.msra.mxu0 %v1249
      %1777 = vmatprep.subr.bf16.mxu0 %v1310
      %1778 = vmatpush2.bf16.msra.mxu0 %v1309
      %1779 = vmatprep.subr.bf16.mxu0 %v1306
      %1780 = vmatpush2.bf16.msra.mxu0 %v1305
      %1781 = vmatprep.subr.bf16.mxu0 %v1302
      %1782 = vmatpush2.bf16.msra.mxu0 %v1301
      %1783 = vmatprep.subr.bf16.mxu0 %v1298
      %1784 = vmatpush2.bf16.msra.mxu0 %v1297
      %1785 = vmatprep.subr.bf16.mxu0 %v1294
      %1786 = vmatpush2.bf16.msra.mxu0 %v1293
      %1787 = vmatprep.subr.bf16.mxu0 %v1290
      %1788 = vmatpush2.bf16.msra.mxu0 %v1289
      %1789 = vmatprep.subr.bf16.mxu0 %v1286
      %1790 = vmatpush2.bf16.msra.mxu0 %v1285
      %1791 = vmatprep.subr.bf16.mxu0 %v1282
      %1792 = vmatpush2.bf16.msra.mxu0 %v1281
      %1793 = vmatprep.mubr.bf16.mxu0 %v466
      %1794 = vmatmul.mubr.bf16.gmra.mxu0 %v465
      %v1795 = vpop.f32.mrf.mxu0
      %v1796 = vadd.f32 0.0, %v1795
      %v1797 = vpop.f32.mrf.mxu0
      %v1798 = vadd.f32 0.0, %v1797
      %v1799 = vpop.f32.mrf.mxu0
      %v1800 = vadd.f32 0.0, %v1799
      %v1801 = vpop.f32.mrf.mxu0
      %v1802 = vadd.f32 0.0, %v1801
      %1803 = vdwg.mxu0
      %1804 = vmatprep.subr.bf16.mxu0 %v1342
      %1805 = vmatpush1.bf16.msra.mxu0 %v1341
      %1806 = vmatprep.subr.bf16.mxu0 %v1338
      %1807 = vmatpush1.bf16.msra.mxu0 %v1337
      %1808 = vmatprep.subr.bf16.mxu0 %v1334
      %1809 = vmatpush1.bf16.msra.mxu0 %v1333
      %1810 = vmatprep.subr.bf16.mxu0 %v1330
      %1811 = vmatpush1.bf16.msra.mxu0 %v1329
      %1812 = vmatprep.subr.bf16.mxu0 %v1326
      %1813 = vmatpush1.bf16.msra.mxu0 %v1325
      %1814 = vmatprep.subr.bf16.mxu0 %v1322
      %1815 = vmatpush1.bf16.msra.mxu0 %v1321
      %1816 = vmatprep.subr.bf16.mxu0 %v1318
      %1817 = vmatpush1.bf16.msra.mxu0 %v1317
      %1818 = vmatprep.subr.bf16.mxu0 %v1314
      %1819 = vmatpush1.bf16.msra.mxu0 %v1313
      %1820 = vmatprep.subr.bf16.mxu0 %v1374
      %1821 = vmatpush2.bf16.msra.mxu0 %v1373
      %1822 = vmatprep.subr.bf16.mxu0 %v1370
      %1823 = vmatpush2.bf16.msra.mxu0 %v1369
      %1824 = vmatprep.subr.bf16.mxu0 %v1366
      %1825 = vmatpush2.bf16.msra.mxu0 %v1365
      %1826 = vmatprep.subr.bf16.mxu0 %v1362
      %1827 = vmatpush2.bf16.msra.mxu0 %v1361
      %1828 = vmatprep.subr.bf16.mxu0 %v1358
      %1829 = vmatpush2.bf16.msra.mxu0 %v1357
      %1830 = vmatprep.subr.bf16.mxu0 %v1354
      %1831 = vmatpush2.bf16.msra.mxu0 %v1353
      %1832 = vmatprep.subr.bf16.mxu0 %v1350
      %1833 = vmatpush2.bf16.msra.mxu0 %v1349
      %1834 = vmatprep.subr.bf16.mxu0 %v1346
      %1835 = vmatpush2.bf16.msra.mxu0 %v1345
      %1836 = vmatprep.mubr.bf16.mxu0 %v468
      %1837 = vmatmul.mubr.bf16.gmra.mxu0 %v467
      %v1838 = vpop.f32.mrf.mxu0
      %v1839 = vadd.f32 %v1796, %v1838
      %v1840 = vpop.f32.mrf.mxu0
      %v1841 = vadd.f32 %v1798, %v1840
      %v1842 = vpop.f32.mrf.mxu0
      %v1843 = vadd.f32 %v1800, %v1842
      %v1844 = vpop.f32.mrf.mxu0
      %v1845 = vadd.f32 %v1802, %v1844
      %1846 = vdwg.mxu0
      %1847 = vmatprep.subr.bf16.mxu0 %v1406
      %1848 = vmatpush1.bf16.msra.mxu0 %v1405
      %1849 = vmatprep.subr.bf16.mxu0 %v1402
      %1850 = vmatpush1.bf16.msra.mxu0 %v1401
      %1851 = vmatprep.subr.bf16.mxu0 %v1398
      %1852 = vmatpush1.bf16.msra.mxu0 %v1397
      %1853 = vmatprep.subr.bf16.mxu0 %v1394
      %1854 = vmatpush1.bf16.msra.mxu0 %v1393
      %1855 = vmatprep.subr.bf16.mxu0 %v1390
      %1856 = vmatpush1.bf16.msra.mxu0 %v1389
      %1857 = vmatprep.subr.bf16.mxu0 %v1386
      %1858 = vmatpush1.bf16.msra.mxu0 %v1385
      %1859 = vmatprep.subr.bf16.mxu0 %v1382
      %1860 = vmatpush1.bf16.msra.mxu0 %v1381
      %1861 = vmatprep.subr.bf16.mxu0 %v1378
      %1862 = vmatpush1.bf16.msra.mxu0 %v1377
      %1863 = vmatprep.subr.bf16.mxu0 %v1438
      %1864 = vmatpush2.bf16.msra.mxu0 %v1437
      %1865 = vmatprep.subr.bf16.mxu0 %v1434
      %1866 = vmatpush2.bf16.msra.mxu0 %v1433
      %1867 = vmatprep.subr.bf16.mxu0 %v1430
      %1868 = vmatpush2.bf16.msra.mxu0 %v1429
      %1869 = vmatprep.subr.bf16.mxu0 %v1426
      %1870 = vmatpush2.bf16.msra.mxu0 %v1425
      %1871 = vmatprep.subr.bf16.mxu0 %v1422
      %1872 = vmatpush2.bf16.msra.mxu0 %v1421
      %1873 = vmatprep.subr.bf16.mxu0 %v1418
      %1874 = vmatpush2.bf16.msra.mxu0 %v1417
      %1875 = vmatprep.subr.bf16.mxu0 %v1414
      %1876 = vmatpush2.bf16.msra.mxu0 %v1413
      %1877 = vmatprep.subr.bf16.mxu0 %v1410
      %1878 = vmatpush2.bf16.msra.mxu0 %v1409
      %1879 = vmatprep.mubr.bf16.mxu0 %v470
      %1880 = vmatmul.mubr.bf16.gmra.mxu0 %v469
      %v1881 = vpop.f32.mrf.mxu0
      %v1882 = vadd.f32 %v1839, %v1881
      %v1883 = vpop.f32.mrf.mxu0
      %v1884 = vadd.f32 %v1841, %v1883
      %v1885 = vpop.f32.mrf.mxu0
      %v1886 = vadd.f32 %v1843, %v1885
      %v1887 = vpop.f32.mrf.mxu0
      %v1888 = vadd.f32 %v1845, %v1887
      %1889 = vdwg.mxu0
      %1890 = vmatprep.subr.bf16.mxu0 %v1470
      %1891 = vmatpush1.bf16.msra.mxu0 %v1469
      %1892 = vmatprep.subr.bf16.mxu0 %v1466
      %1893 = vmatpush1.bf16.msra.mxu0 %v1465
      %1894 = vmatprep.subr.bf16.mxu0 %v1462
      %1895 = vmatpush1.bf16.msra.mxu0 %v1461
      %1896 = vmatprep.subr.bf16.mxu0 %v1458
      %1897 = vmatpush1.bf16.msra.mxu0 %v1457
      %1898 = vmatprep.subr.bf16.mxu0 %v1454
      %1899 = vmatpush1.bf16.msra.mxu0 %v1453
      %1900 = vmatprep.subr.bf16.mxu0 %v1450
      %1901 = vmatpush1.bf16.msra.mxu0 %v1449
      %1902 = vmatprep.subr.bf16.mxu0 %v1446
      %1903 = vmatpush1.bf16.msra.mxu0 %v1445
      %1904 = vmatprep.subr.bf16.mxu0 %v1442
      %1905 = vmatpush1.bf16.msra.mxu0 %v1441
      %1906 = vmatprep.subr.bf16.mxu0 %v1502
      %1907 = vmatpush2.bf16.msra.mxu0 %v1501
      %1908 = vmatprep.subr.bf16.mxu0 %v1498
      %1909 = vmatpush2.bf16.msra.mxu0 %v1497
      %1910 = vmatprep.subr.bf16.mxu0 %v1494
      %1911 = vmatpush2.bf16.msra.mxu0 %v1493
      %1912 = vmatprep.subr.bf16.mxu0 %v1490
      %1913 = vmatpush2.bf16.msra.mxu0 %v1489
      %1914 = vmatprep.subr.bf16.mxu0 %v1486
      %1915 = vmatpush2.bf16.msra.mxu0 %v1485
      %1916 = vmatprep.subr.bf16.mxu0 %v1482
      %1917 = vmatpush2.bf16.msra.mxu0 %v1481
      %1918 = vmatprep.subr.bf16.mxu0 %v1478
      %1919 = vmatpush2.bf16.msra.mxu0 %v1477
      %1920 = vmatprep.subr.bf16.mxu0 %v1474
      %1921 = vmatpush2.bf16.msra.mxu0 %v1473
      %1922 = vmatprep.mubr.bf16.mxu0 %v472
      %1923 = vmatmul.mubr.bf16.gmra.mxu0 %v471
      %v1924 = vpop.f32.mrf.mxu0
      %v1925 = vadd.f32 %v1882, %v1924
      %v1926 = vpop.f32.mrf.mxu0
      %v1927 = vadd.f32 %v1884, %v1926
      %v1928 = vpop.f32.mrf.mxu0
      %v1929 = vadd.f32 %v1886, %v1928
      %v1930 = vpop.f32.mrf.mxu0
      %v1931 = vadd.f32 %v1888, %v1930
      %1932 = vdwg.mxu0
      %1933 = vmatprep.subr.bf16.mxu0 %v1280
      %1934 = vmatpush1.bf16.msra.mxu0 %v1279
      %1935 = vmatprep.subr.bf16.mxu0 %v1276
      %1936 = vmatpush1.bf16.msra.mxu0 %v1275
      %1937 = vmatprep.subr.bf16.mxu0 %v1272
      %1938 = vmatpush1.bf16.msra.mxu0 %v1271
      %1939 = vmatprep.subr.bf16.mxu0 %v1268
      %1940 = vmatpush1.bf16.msra.mxu0 %v1267
      %1941 = vmatprep.subr.bf16.mxu0 %v1264
      %1942 = vmatpush1.bf16.msra.mxu0 %v1263
      %1943 = vmatprep.subr.bf16.mxu0 %v1260
      %1944 = vmatpush1.bf16.msra.mxu0 %v1259
      %1945 = vmatprep.subr.bf16.mxu0 %v1256
      %1946 = vmatpush1.bf16.msra.mxu0 %v1255
      %1947 = vmatprep.subr.bf16.mxu0 %v1252
      %1948 = vmatpush1.bf16.msra.mxu0 %v1251
      %1949 = vmatprep.subr.bf16.mxu0 %v1312
      %1950 = vmatpush2.bf16.msra.mxu0 %v1311
      %1951 = vmatprep.subr.bf16.mxu0 %v1308
      %1952 = vmatpush2.bf16.msra.mxu0 %v1307
      %1953 = vmatprep.subr.bf16.mxu0 %v1304
      %1954 = vmatpush2.bf16.msra.mxu0 %v1303
      %1955 = vmatprep.subr.bf16.mxu0 %v1300
      %1956 = vmatpush2.bf16.msra.mxu0 %v1299
      %1957 = vmatprep.subr.bf16.mxu0 %v1296
      %1958 = vmatpush2.bf16.msra.mxu0 %v1295
      %1959 = vmatprep.subr.bf16.mxu0 %v1292
      %1960 = vmatpush2.bf16.msra.mxu0 %v1291
      %1961 = vmatprep.subr.bf16.mxu0 %v1288
      %1962 = vmatpush2.bf16.msra.mxu0 %v1287
      %1963 = vmatprep.subr.bf16.mxu0 %v1284
      %1964 = vmatpush2.bf16.msra.mxu0 %v1283
      %1965 = vmatprep.mubr.bf16.mxu0 %v466
      %1966 = vmatmul.mubr.bf16.gmra.mxu0 %v465
      %v1967 = vpop.f32.mrf.mxu0
      %v1968 = vadd.f32 0.0, %v1967
      %v1969 = vpop.f32.mrf.mxu0
      %v1970 = vadd.f32 0.0, %v1969
      %v1971 = vpop.f32.mrf.mxu0
      %v1972 = vadd.f32 0.0, %v1971
      %v1973 = vpop.f32.mrf.mxu0
      %v1974 = vadd.f32 0.0, %v1973
      %1975 = vdwg.mxu0
      %1976 = vmatprep.subr.bf16.mxu0 %v1344
      %1977 = vmatpush1.bf16.msra.mxu0 %v1343
      %1978 = vmatprep.subr.bf16.mxu0 %v1340
      %1979 = vmatpush1.bf16.msra.mxu0 %v1339
      %1980 = vmatprep.subr.bf16.mxu0 %v1336
      %1981 = vmatpush1.bf16.msra.mxu0 %v1335
      %1982 = vmatprep.subr.bf16.mxu0 %v1332
      %1983 = vmatpush1.bf16.msra.mxu0 %v1331
      %1984 = vmatprep.subr.bf16.mxu0 %v1328
      %1985 = vmatpush1.bf16.msra.mxu0 %v1327
      %1986 = vmatprep.subr.bf16.mxu0 %v1324
      %1987 = vmatpush1.bf16.msra.mxu0 %v1323
      %1988 = vmatprep.subr.bf16.mxu0 %v1320
      %1989 = vmatpush1.bf16.msra.mxu0 %v1319
      %1990 = vmatprep.subr.bf16.mxu0 %v1316
      %1991 = vmatpush1.bf16.msra.mxu0 %v1315
      %1992 = vmatprep.subr.bf16.mxu0 %v1376
      %1993 = vmatpush2.bf16.msra.mxu0 %v1375
      %1994 = vmatprep.subr.bf16.mxu0 %v1372
      %1995 = vmatpush2.bf16.msra.mxu0 %v1371
      %1996 = vmatprep.subr.bf16.mxu0 %v1368
      %1997 = vmatpush2.bf16.msra.mxu0 %v1367
      %1998 = vmatprep.subr.bf16.mxu0 %v1364
      %1999 = vmatpush2.bf16.msra.mxu0 %v1363
      %2000 = vmatprep.subr.bf16.mxu0 %v1360
      %2001 = vmatpush2.bf16.msra.mxu0 %v1359
      %2002 = vmatprep.subr.bf16.mxu0 %v1356
      %2003 = vmatpush2.bf16.msra.mxu0 %v1355
      %2004 = vmatprep.subr.bf16.mxu0 %v1352
      %2005 = vmatpush2.bf16.msra.mxu0 %v1351
      %2006 = vmatprep.subr.bf16.mxu0 %v1348
      %2007 = vmatpush2.bf16.msra.mxu0 %v1347
      %2008 = vmatprep.mubr.bf16.mxu0 %v468
      %2009 = vmatmul.mubr.bf16.gmra.mxu0 %v467
      %v2010 = vpop.f32.mrf.mxu0
      %v2011 = vadd.f32 %v1968, %v2010
      %v2012 = vpop.f32.mrf.mxu0
      %v2013 = vadd.f32 %v1970, %v2012
      %v2014 = vpop.f32.mrf.mxu0
      %v2015 = vadd.f32 %v1972, %v2014
      %v2016 = vpop.f32.mrf.mxu0
      %v2017 = vadd.f32 %v1974, %v2016
      %2018 = vdwg.mxu0
      %2019 = vmatprep.subr.bf16.mxu0 %v1408
      %2020 = vmatpush1.bf16.msra.mxu0 %v1407
      %2021 = vmatprep.subr.bf16.mxu0 %v1404
      %2022 = vmatpush1.bf16.msra.mxu0 %v1403
      %2023 = vmatprep.subr.bf16.mxu0 %v1400
      %2024 = vmatpush1.bf16.msra.mxu0 %v1399
      %2025 = vmatprep.subr.bf16.mxu0 %v1396
      %2026 = vmatpush1.bf16.msra.mxu0 %v1395
      %2027 = vmatprep.subr.bf16.mxu0 %v1392
      %2028 = vmatpush1.bf16.msra.mxu0 %v1391
      %2029 = vmatprep.subr.bf16.mxu0 %v1388
      %2030 = vmatpush1.bf16.msra.mxu0 %v1387
      %2031 = vmatprep.subr.bf16.mxu0 %v1384
      %2032 = vmatpush1.bf16.msra.mxu0 %v1383
      %2033 = vmatprep.subr.bf16.mxu0 %v1380
      %2034 = vmatpush1.bf16.msra.mxu0 %v1379
      %2035 = vmatprep.subr.bf16.mxu0 %v1440
      %2036 = vmatpush2.bf16.msra.mxu0 %v1439
      %2037 = vmatprep.subr.bf16.mxu0 %v1436
      %2038 = vmatpush2.bf16.msra.mxu0 %v1435
      %2039 = vmatprep.subr.bf16.mxu0 %v1432
      %2040 = vmatpush2.bf16.msra.mxu0 %v1431
      %2041 = vmatprep.subr.bf16.mxu0 %v1428
      %2042 = vmatpush2.bf16.msra.mxu0 %v1427
      %2043 = vmatprep.subr.bf16.mxu0 %v1424
      %2044 = vmatpush2.bf16.msra.mxu0 %v1423
      %2045 = vmatprep.subr.bf16.mxu0 %v1420
      %2046 = vmatpush2.bf16.msra.mxu0 %v1419
      %2047 = vmatprep.subr.bf16.mxu0 %v1416
      %2048 = vmatpush2.bf16.msra.mxu0 %v1415
      %2049 = vmatprep.subr.bf16.mxu0 %v1412
      %2050 = vmatpush2.bf16.msra.mxu0 %v1411
      %2051 = vmatprep.mubr.bf16.mxu0 %v470
      %2052 = vmatmul.mubr.bf16.gmra.mxu0 %v469
      %v2053 = vpop.f32.mrf.mxu0
      %v2054 = vadd.f32 %v2011, %v2053
      %v2055 = vpop.f32.mrf.mxu0
      %v2056 = vadd.f32 %v2013, %v2055
      %v2057 = vpop.f32.mrf.mxu0
      %v2058 = vadd.f32 %v2015, %v2057
      %v2059 = vpop.f32.mrf.mxu0
      %v2060 = vadd.f32 %v2017, %v2059
      %2061 = vdwg.mxu0
      %2062 = vmatprep.subr.bf16.mxu0 %v1472
      %2063 = vmatpush1.bf16.msra.mxu0 %v1471
      %2064 = vmatprep.subr.bf16.mxu0 %v1468
      %2065 = vmatpush1.bf16.msra.mxu0 %v1467
      %2066 = vmatprep.subr.bf16.mxu0 %v1464
      %2067 = vmatpush1.bf16.msra.mxu0 %v1463
      %2068 = vmatprep.subr.bf16.mxu0 %v1460
      %2069 = vmatpush1.bf16.msra.mxu0 %v1459
      %2070 = vmatprep.subr.bf16.mxu0 %v1456
      %2071 = vmatpush1.bf16.msra.mxu0 %v1455
      %2072 = vmatprep.subr.bf16.mxu0 %v1452
      %2073 = vmatpush1.bf16.msra.mxu0 %v1451
      %2074 = vmatprep.subr.bf16.mxu0 %v1448
      %2075 = vmatpush1.bf16.msra.mxu0 %v1447
      %2076 = vmatprep.subr.bf16.mxu0 %v1444
      %2077 = vmatpush1.bf16.msra.mxu0 %v1443
      %2078 = vmatprep.subr.bf16.mxu0 %v1504
      %2079 = vmatpush2.bf16.msra.mxu0 %v1503
      %2080 = vmatprep.subr.bf16.mxu0 %v1500
      %2081 = vmatpush2.bf16.msra.mxu0 %v1499
      %2082 = vmatprep.subr.bf16.mxu0 %v1496
      %2083 = vmatpush2.bf16.msra.mxu0 %v1495
      %2084 = vmatprep.subr.bf16.mxu0 %v1492
      %2085 = vmatpush2.bf16.msra.mxu0 %v1491
      %2086 = vmatprep.subr.bf16.mxu0 %v1488
      %2087 = vmatpush2.bf16.msra.mxu0 %v1487
      %2088 = vmatprep.subr.bf16.mxu0 %v1484
      %2089 = vmatpush2.bf16.msra.mxu0 %v1483
      %2090 = vmatprep.subr.bf16.mxu0 %v1480
      %2091 = vmatpush2.bf16.msra.mxu0 %v1479
      %2092 = vmatprep.subr.bf16.mxu0 %v1476
      %2093 = vmatpush2.bf16.msra.mxu0 %v1475
      %2094 = vmatprep.mubr.bf16.mxu0 %v472
      %2095 = vmatmul.mubr.bf16.gmra.mxu0 %v471
      %v2096 = vpop.f32.mrf.mxu0
      %v2097 = vadd.f32 %v2054, %v2096
      %v2098 = vpop.f32.mrf.mxu0
      %v2099 = vadd.f32 %v2056, %v2098
      %v2100 = vpop.f32.mrf.mxu0
      %v2101 = vadd.f32 %v2058, %v2100
      %v2102 = vpop.f32.mrf.mxu0
      %v2103 = vadd.f32 %v2060, %v2102
      %2104 = vdwg.mxu0
      %v2105 = vmax.f32 %v1925, %v1927
      %v2106 = vmax.f32 %v1929, %v1931
      %v2107 = vmax.f32 %v2097, %v2099
      %v2108 = vmax.f32 %v2101, %v2103
      %v2109 = vmax.f32 %v2105, %v2107
      %v2110 = vmax.f32 %v2106, %v2108
      %v2111 = vld [vmem:[%s2] sm:$0x1]
      %v2113 = vlaneseq
      %v2114 = vshrl.u32 %v2113, 7
      %v2115 = vsub.s32 0, %v2114
      %v2116 = vrot.slane %v2111, %v2115
      %v2118 = vadd.f32 %v2109, %v2116
      %v2119 = vadd.f32 %v2110, %v2116
      %v2120 = vmax.f32 %v2118, 0.0
      %v2121 = vmax.f32 %v2119, 0.0
      %2122 = vst [vmem:[%s175] sm:$0xff] %v2120
      %2123 = vst [vmem:[%s175 + $0x8] sm:$0xff] %v2121
      %s2124 = smul.u32 2, %s14
      %p2125 = scmp.lt.s32.totalorder %s2124, 3
      %s2126 = scalar_select %p2125, %s2124, 3
      %s2127 = smul.addr %s2126, 8
      %s2128 = scalar_lea.vmem %s3, %s2127
      // Predicated region
      $region33: #{cnn_forward.6} parent=31 // pred_check
        %p2129 = pneg %p100
      $region34: #{cnn_forward.6} parent=31 // pred_check_branch
        %2131 = sbr.rel (%p2129) target = $region36
      $region35: #{cnn_forward.6} parent=31 // pred_region
        %s2132 = smul.u32 2, %s14
      $region36: #{cnn_forward.6} parent=31 // pred_fallthru
        _
    $region32: #{cnn_forward.6} parent=5 // pred_fallthru
      _
    %p2133 = scmp.le.s32.totalorder 2, %s9
    // Predicated region
    $region37: #{cnn_forward.6} parent=5 // pred_check
      %p2134 = pneg %p2133
    $region38: #{cnn_forward.6} parent=5 // pred_check_branch
      %2136 = sbr.rel (%p2134) target = $region40
    $region39: #{cnn_forward.6} parent=5 // pred_region
      %s2137 = ssub.s32 %s9, 2
      // Predicated region
      $region41: #{cnn_forward.6} parent=39 // pred_check
        %p2138 = pneg %p106
      $region42: #{cnn_forward.6} parent=39 // pred_check_branch
        %2140 = sbr.rel (%p2138) target = $region44
      $region43: #{cnn_forward.6} parent=39 // pred_region
        %s2141 = smul.u32 2, %s15
        %p2142 = scmp.lt.s32.totalorder %s2141, 3
        %s2143 = scalar_select %p2142, %s2141, 3
        %s2144 = smul.addr %s2143, 8
        %s2145 = scalar_lea.vmem %s3, %s2144
      $region44: #{cnn_forward.6} parent=39 // pred_fallthru
        _
    $region40: #{cnn_forward.6} parent=5 // pred_fallthru
      _
  $region6: #{cnn_forward.6} parent=0 // loop_footer
    %s13 = sadd.s32 1, %s9
  $region7: #{cnn_forward.6} parent=0 // loop_footer_branch
    %8 = sbr.rel target = $region3
  $region8: #{cnn_forward.6} parent=0 // loop_exit
    _

// kernel: cnn_forward.7
$region0: #{cnn_forward.7}
  #allocation0 [shape = 'u32[]', space=smem, size = 0x4, offset = 0x4, fixed_abs, tag = 'smem constant byte address 0x4 - core index']
  #allocation1 [shape = 'u32[144,128]{1,0:T(1,128)}', space=vmem, size = 0x12000, scoped, tag = 'internal scratch']
  %s0 = inlined_call_operand.vmem [shape: bf16[2,2048], index: 0, kind: input, shape index: {}]
  %s1 = inlined_call_operand.vmem [shape: bf16[2048,128], index: 1, kind: input, shape index: {}]
  %s2 = inlined_call_operand.vmem [shape: f32[1,128], index: 2, kind: input, shape index: {}]
  %s3 = inlined_call_operand.hbm [shape: f32[2,128], index: 3, kind: output, shape index: {}]
  %s4 = sld [smem:[#allocation0]]
  $region22: #{cnn_forward.7} parent=0
    _
  %s6 = ssub.s32 1, %s4
  %s7 = scalar_select 0, %s6, %s4
  $region1: #{cnn_forward.7} parent=0
    #allocation2 [shape = 'u8[1024]{0}', space=vmem, size = 0x400, scoped, tag = 'output window, operand 0, single buffered']
    #allocation3 [shape = 's32[1]{0}', space=sflag, size = 0x4, scoped, tag = 'scoped memory for cnn_forward.7']
    %8 = vsyncpa [#allocation3], 0
    // Predicated region
    $region2: #{cnn_forward.7} parent=1 // pred_check
      _
    $region3: #{cnn_forward.7} parent=1 // pred_check_branch
      %10 = sbr.rel (0) target = $region5
    $region4: #{cnn_forward.7} parent=1 // pred_region
      _
    $region5: #{cnn_forward.7} parent=1 // pred_fallthru
      _
    // Predicated region
    $region6: #{cnn_forward.7} parent=1 // pred_check
      _
    $region7: #{cnn_forward.7} parent=1 // pred_check_branch
      %12 = sbr.rel (0) target = $region9
    $region8: #{cnn_forward.7} parent=1 // pred_region
      _
    $region9: #{cnn_forward.7} parent=1 // pred_fallthru
      _
    // Predicated region
    $region10: #{cnn_forward.7} parent=1 // pred_check
      _
    $region11: #{cnn_forward.7} parent=1 // pred_check_branch
      %14 = sbr.rel (0) target = $region13
    $region12: #{cnn_forward.7} parent=1 // pred_region
      _
    $region13: #{cnn_forward.7} parent=1 // pred_fallthru
      _
    %v16 = vld [vmem:[%s0] sm:$0xff]
    %v17 = vld [vmem:[%s0 + $0x8] sm:$0xff]
    %v18 = vld [vmem:[%s1] sm:$0xf]
    %v19 = vld [vmem:[%s1 + $0x4] sm:$0xf]
    %v20 = vld [vmem:[%s1 + $0x8] sm:$0xf]
    %v21 = vld [vmem:[%s1 + $0xc] sm:$0xf]
    %v22 = vld [vmem:[%s1 + $0x10] sm:$0xf]
    %v23 = vld [vmem:[%s1 + $0x14] sm:$0xf]
    %v24 = vld [vmem:[%s1 + $0x18] sm:$0xf]
    %v25 = vld [vmem:[%s1 + $0x1c] sm:$0xf]
    %v26 = vld [vmem:[%s1 + $0x20] sm:$0xf]
    %v27 = vld [vmem:[%s1 + $0x24] sm:$0xf]
    %v28 = vld [vmem:[%s1 + $0x28] sm:$0xf]
    %v29 = vld [vmem:[%s1 + $0x2c] sm:$0xf]
    %v30 = vld [vmem:[%s1 + $0x30] sm:$0xf]
    %v31 = vld [vmem:[%s1 + $0x34] sm:$0xf]
    %v32 = vld [vmem:[%s1 + $0x38] sm:$0xf]
    %v33 = vld [vmem:[%s1 + $0x3c] sm:$0xf]
    %v34 = vld [vmem:[%s1 + $0x40] sm:$0xf]
    %v35 = vld [vmem:[%s1 + $0x44] sm:$0xf]
    %v36 = vld [vmem:[%s1 + $0x48] sm:$0xf]
    %v37 = vld [vmem:[%s1 + $0x4c] sm:$0xf]
    %v38 = vld [vmem:[%s1 + $0x50] sm:$0xf]
    %v39 = vld [vmem:[%s1 + $0x54] sm:$0xf]
    %v40 = vld [vmem:[%s1 + $0x58] sm:$0xf]
    %v41 = vld [vmem:[%s1 + $0x5c] sm:$0xf]
    %v42 = vld [vmem:[%s1 + $0x60] sm:$0xf]
    %v43 = vld [vmem:[%s1 + $0x64] sm:$0xf]
    %v44 = vld [vmem:[%s1 + $0x68] sm:$0xf]
    %v45 = vld [vmem:[%s1 + $0x6c] sm:$0xf]
    %v46 = vld [vmem:[%s1 + $0x70] sm:$0xf]
    %v47 = vld [vmem:[%s1 + $0x74] sm:$0xf]
    %v48 = vld [vmem:[%s1 + $0x78] sm:$0xf]
    %v49 = vld [vmem:[%s1 + $0x7c] sm:$0xf]
    %v50 = vld [vmem:[%s1 + $0x80] sm:$0xf]
    %v51 = vld [vmem:[%s1 + $0x84] sm:$0xf]
    %v52 = vld [vmem:[%s1 + $0x88] sm:$0xf]
    %v53 = vld [vmem:[%s1 + $0x8c] sm:$0xf]
    %v54 = vld [vmem:[%s1 + $0x90] sm:$0xf]
    %v55 = vld [vmem:[%s1 + $0x94] sm:$0xf]
    %v56 = vld [vmem:[%s1 + $0x98] sm:$0xf]
    %v57 = vld [vmem:[%s1 + $0x9c] sm:$0xf]
    %v58 = vld [vmem:[%s1 + $0xa0] sm:$0xf]
    %v59 = vld [vmem:[%s1 + $0xa4] sm:$0xf]
    %v60 = vld [vmem:[%s1 + $0xa8] sm:$0xf]
    %v61 = vld [vmem:[%s1 + $0xac] sm:$0xf]
    %v62 = vld [vmem:[%s1 + $0xb0] sm:$0xf]
    %v63 = vld [vmem:[%s1 + $0xb4] sm:$0xf]
    %v64 = vld [vmem:[%s1 + $0xb8] sm:$0xf]
    %v65 = vld [vmem:[%s1 + $0xbc] sm:$0xf]
    %v66 = vld [vmem:[%s1 + $0xc0] sm:$0xf]
    %v67 = vld [vmem:[%s1 + $0xc4] sm:$0xf]
    %v68 = vld [vmem:[%s1 + $0xc8] sm:$0xf]
    %v69 = vld [vmem:[%s1 + $0xcc] sm:$0xf]
    %v70 = vld [vmem:[%s1 + $0xd0] sm:$0xf]
    %v71 = vld [vmem:[%s1 + $0xd4] sm:$0xf]
    %v72 = vld [vmem:[%s1 + $0xd8] sm:$0xf]
    %v73 = vld [vmem:[%s1 + $0xdc] sm:$0xf]
    %v74 = vld [vmem:[%s1 + $0xe0] sm:$0xf]
    %v75 = vld [vmem:[%s1 + $0xe4] sm:$0xf]
    %v76 = vld [vmem:[%s1 + $0xe8] sm:$0xf]
    %v77 = vld [vmem:[%s1 + $0xec] sm:$0xf]
    %v78 = vld [vmem:[%s1 + $0xf0] sm:$0xf]
    %v79 = vld [vmem:[%s1 + $0xf4] sm:$0xf]
    %v80 = vld [vmem:[%s1 + $0xf8] sm:$0xf]
    %v81 = vld [vmem:[%s1 + $0xfc] sm:$0xf]
    %v82 = vld [vmem:[%s1 + $0x100] sm:$0xf]
    %v83 = vld [vmem:[%s1 + $0x104] sm:$0xf]
    %v84 = vld [vmem:[%s1 + $0x108] sm:$0xf]
    %v85 = vld [vmem:[%s1 + $0x10c] sm:$0xf]
    %v86 = vld [vmem:[%s1 + $0x110] sm:$0xf]
    %v87 = vld [vmem:[%s1 + $0x114] sm:$0xf]
    %v88 = vld [vmem:[%s1 + $0x118] sm:$0xf]
    %v89 = vld [vmem:[%s1 + $0x11c] sm:$0xf]
    %v90 = vld [vmem:[%s1 + $0x120] sm:$0xf]
    %v91 = vld [vmem:[%s1 + $0x124] sm:$0xf]
    %v92 = vld [vmem:[%s1 + $0x128] sm:$0xf]
    %v93 = vld [vmem:[%s1 + $0x12c] sm:$0xf]
    %v94 = vld [vmem:[%s1 + $0x130] sm:$0xf]
    %v95 = vld [vmem:[%s1 + $0x134] sm:$0xf]
    %v96 = vld [vmem:[%s1 + $0x138] sm:$0xf]
    %v97 = vld [vmem:[%s1 + $0x13c] sm:$0xf]
    %v98 = vld [vmem:[%s1 + $0x140] sm:$0xf]
    %v99 = vld [vmem:[%s1 + $0x144] sm:$0xf]
    %v100 = vld [vmem:[%s1 + $0x148] sm:$0xf]
    %v101 = vld [vmem:[%s1 + $0x14c] sm:$0xf]
    %v102 = vld [vmem:[%s1 + $0x150] sm:$0xf]
    %v103 = vld [vmem:[%s1 + $0x154] sm:$0xf]
    %v104 = vld [vmem:[%s1 + $0x158] sm:$0xf]
    %v105 = vld [vmem:[%s1 + $0x15c] sm:$0xf]
    %v106 = vld [vmem:[%s1 + $0x160] sm:$0xf]
    %v107 = vld [vmem:[%s1 + $0x164] sm:$0xf]
    %v108 = vld [vmem:[%s1 + $0x168] sm:$0xf]
    %v109 = vld [vmem:[%s1 + $0x16c] sm:$0xf]
    %v110 = vld [vmem:[%s1 + $0x170] sm:$0xf]
    %v111 = vld [vmem:[%s1 + $0x174] sm:$0xf]
    %v112 = vld [vmem:[%s1 + $0x178] sm:$0xf]
    %v113 = vld [vmem:[%s1 + $0x17c] sm:$0xf]
    %v114 = vld [vmem:[%s1 + $0x180] sm:$0xf]
    %v115 = vld [vmem:[%s1 + $0x184] sm:$0xf]
    %v116 = vld [vmem:[%s1 + $0x188] sm:$0xf]
    %v117 = vld [vmem:[%s1 + $0x18c] sm:$0xf]
    %v118 = vld [vmem:[%s1 + $0x190] sm:$0xf]
    %v119 = vld [vmem:[%s1 + $0x194] sm:$0xf]
    %v120 = vld [vmem:[%s1 + $0x198] sm:$0xf]
    %v121 = vld [vmem:[%s1 + $0x19c] sm:$0xf]
    %v122 = vld [vmem:[%s1 + $0x1a0] sm:$0xf]
    %v123 = vld [vmem:[%s1 + $0x1a4] sm:$0xf]
    %v124 = vld [vmem:[%s1 + $0x1a8] sm:$0xf]
    %v125 = vld [vmem:[%s1 + $0x1ac] sm:$0xf]
    %v126 = vld [vmem:[%s1 + $0x1b0] sm:$0xf]
    %v127 = vld [vmem:[%s1 + $0x1b4] sm:$0xf]
    %v128 = vld [vmem:[%s1 + $0x1b8] sm:$0xf]
    %v129 = vld [vmem:[%s1 + $0x1bc] sm:$0xf]
    %v130 = vld [vmem:[%s1 + $0x1c0] sm:$0xf]
    %v131 = vld [vmem:[%s1 + $0x1c4] sm:$0xf]
    %v132 = vld [vmem:[%s1 + $0x1c8] sm:$0xf]
    %v133 = vld [vmem:[%s1 + $0x1cc] sm:$0xf]
    %v134 = vld [vmem:[%s1 + $0x1d0] sm:$0xf]
    %v135 = vld [vmem:[%s1 + $0x1d4] sm:$0xf]
    %v136 = vld [vmem:[%s1 + $0x1d8] sm:$0xf]
    %v137 = vld [vmem:[%s1 + $0x1dc] sm:$0xf]
    %v138 = vld [vmem:[%s1 + $0x1e0] sm:$0xf]
    %v139 = vld [vmem:[%s1 + $0x1e4] sm:$0xf]
    %v140 = vld [vmem:[%s1 + $0x1e8] sm:$0xf]
    %v141 = vld [vmem:[%s1 + $0x1ec] sm:$0xf]
    %v142 = vld [vmem:[%s1 + $0x1f0] sm:$0xf]
    %v143 = vld [vmem:[%s1 + $0x1f4] sm:$0xf]
    %v144 = vld [vmem:[%s1 + $0x1f8] sm:$0xf]
    %v145 = vld [vmem:[%s1 + $0x1fc] sm:$0xf]
    %v146 = vld [vmem:[%s1 + $0x200] sm:$0xf]
    %v147 = vld [vmem:[%s1 + $0x204] sm:$0xf]
    %v148 = vld [vmem:[%s1 + $0x208] sm:$0xf]
    %v149 = vld [vmem:[%s1 + $0x20c] sm:$0xf]
    %v150 = vld [vmem:[%s1 + $0x210] sm:$0xf]
    %v151 = vld [vmem:[%s1 + $0x214] sm:$0xf]
    %v152 = vld [vmem:[%s1 + $0x218] sm:$0xf]
    %v153 = vld [vmem:[%s1 + $0x21c] sm:$0xf]
    %v154 = vld [vmem:[%s1 + $0x220] sm:$0xf]
    %v155 = vld [vmem:[%s1 + $0x224] sm:$0xf]
    %v156 = vld [vmem:[%s1 + $0x228] sm:$0xf]
    %v157 = vld [vmem:[%s1 + $0x22c] sm:$0xf]
    %v158 = vld [vmem:[%s1 + $0x230] sm:$0xf]
    %v159 = vld [vmem:[%s1 + $0x234] sm:$0xf]
    %v160 = vld [vmem:[%s1 + $0x238] sm:$0xf]
    %v161 = vld [vmem:[%s1 + $0x23c] sm:$0xf]
    %v162 = vld [vmem:[%s1 + $0x240] sm:$0xf]
    %v163 = vld [vmem:[%s1 + $0x244] sm:$0xf]
    %v164 = vld [vmem:[%s1 + $0x248] sm:$0xf]
    %v165 = vld [vmem:[%s1 + $0x24c] sm:$0xf]
    %v166 = vld [vmem:[%s1 + $0x250] sm:$0xf]
    %v167 = vld [vmem:[%s1 + $0x254] sm:$0xf]
    %v168 = vld [vmem:[%s1 + $0x258] sm:$0xf]
    %v169 = vld [vmem:[%s1 + $0x25c] sm:$0xf]
    %v170 = vld [vmem:[%s1 + $0x260] sm:$0xf]
    %v171 = vld [vmem:[%s1 + $0x264] sm:$0xf]
    %v172 = vld [vmem:[%s1 + $0x268] sm:$0xf]
    %v173 = vld [vmem:[%s1 + $0x26c] sm:$0xf]
    %v174 = vld [vmem:[%s1 + $0x270] sm:$0xf]
    %v175 = vld [vmem:[%s1 + $0x274] sm:$0xf]
    %v176 = vld [vmem:[%s1 + $0x278] sm:$0xf]
    %v177 = vld [vmem:[%s1 + $0x27c] sm:$0xf]
    %v178 = vld [vmem:[%s1 + $0x280] sm:$0xf]
    %v179 = vld [vmem:[%s1 + $0x284] sm:$0xf]
    %v180 = vld [vmem:[%s1 + $0x288] sm:$0xf]
    %v181 = vld [vmem:[%s1 + $0x28c] sm:$0xf]
    %v182 = vld [vmem:[%s1 + $0x290] sm:$0xf]
    %v183 = vld [vmem:[%s1 + $0x294] sm:$0xf]
    %v184 = vld [vmem:[%s1 + $0x298] sm:$0xf]
    %v185 = vld [vmem:[%s1 + $0x29c] sm:$0xf]
    %v186 = vld [vmem:[%s1 + $0x2a0] sm:$0xf]
    %v187 = vld [vmem:[%s1 + $0x2a4] sm:$0xf]
    %v188 = vld [vmem:[%s1 + $0x2a8] sm:$0xf]
    %v189 = vld [vmem:[%s1 + $0x2ac] sm:$0xf]
    %v190 = vld [vmem:[%s1 + $0x2b0] sm:$0xf]
    %v191 = vld [vmem:[%s1 + $0x2b4] sm:$0xf]
    %v192 = vld [vmem:[%s1 + $0x2b8] sm:$0xf]
    %v193 = vld [vmem:[%s1 + $0x2bc] sm:$0xf]
    %v194 = vld [vmem:[%s1 + $0x2c0] sm:$0xf]
    %v195 = vld [vmem:[%s1 + $0x2c4] sm:$0xf]
    %v196 = vld [vmem:[%s1 + $0x2c8] sm:$0xf]
    %v197 = vld [vmem:[%s1 + $0x2cc] sm:$0xf]
    %v198 = vld [vmem:[%s1 + $0x2d0] sm:$0xf]
    %v199 = vld [vmem:[%s1 + $0x2d4] sm:$0xf]
    %v200 = vld [vmem:[%s1 + $0x2d8] sm:$0xf]
    %v201 = vld [vmem:[%s1 + $0x2dc] sm:$0xf]
    %v202 = vld [vmem:[%s1 + $0x2e0] sm:$0xf]
    %v203 = vld [vmem:[%s1 + $0x2e4] sm:$0xf]
    %v204 = vld [vmem:[%s1 + $0x2e8] sm:$0xf]
    %v205 = vld [vmem:[%s1 + $0x2ec] sm:$0xf]
    %v206 = vld [vmem:[%s1 + $0x2f0] sm:$0xf]
    %v207 = vld [vmem:[%s1 + $0x2f4] sm:$0xf]
    %v208 = vld [vmem:[%s1 + $0x2f8] sm:$0xf]
    %v209 = vld [vmem:[%s1 + $0x2fc] sm:$0xf]
    %v210 = vld [vmem:[%s1 + $0x300] sm:$0xf]
    %v211 = vld [vmem:[%s1 + $0x304] sm:$0xf]
    %v212 = vld [vmem:[%s1 + $0x308] sm:$0xf]
    %v213 = vld [vmem:[%s1 + $0x30c] sm:$0xf]
    %v214 = vld [vmem:[%s1 + $0x310] sm:$0xf]
    %v215 = vld [vmem:[%s1 + $0x314] sm:$0xf]
    %v216 = vld [vmem:[%s1 + $0x318] sm:$0xf]
    %v217 = vld [vmem:[%s1 + $0x31c] sm:$0xf]
    %v218 = vld [vmem:[%s1 + $0x320] sm:$0xf]
    %v219 = vld [vmem:[%s1 + $0x324] sm:$0xf]
    %v220 = vld [vmem:[%s1 + $0x328] sm:$0xf]
    %v221 = vld [vmem:[%s1 + $0x32c] sm:$0xf]
    %v222 = vld [vmem:[%s1 + $0x330] sm:$0xf]
    %v223 = vld [vmem:[%s1 + $0x334] sm:$0xf]
    %v224 = vld [vmem:[%s1 + $0x338] sm:$0xf]
    %v225 = vld [vmem:[%s1 + $0x33c] sm:$0xf]
    %v226 = vld [vmem:[%s1 + $0x340] sm:$0xf]
    %v227 = vld [vmem:[%s1 + $0x344] sm:$0xf]
    %v228 = vld [vmem:[%s1 + $0x348] sm:$0xf]
    %v229 = vld [vmem:[%s1 + $0x34c] sm:$0xf]
    %v230 = vld [vmem:[%s1 + $0x350] sm:$0xf]
    %v231 = vld [vmem:[%s1 + $0x354] sm:$0xf]
    %v232 = vld [vmem:[%s1 + $0x358] sm:$0xf]
    %v233 = vld [vmem:[%s1 + $0x35c] sm:$0xf]
    %v234 = vld [vmem:[%s1 + $0x360] sm:$0xf]
    %v235 = vld [vmem:[%s1 + $0x364] sm:$0xf]
    %v236 = vld [vmem:[%s1 + $0x368] sm:$0xf]
    %v237 = vld [vmem:[%s1 + $0x36c] sm:$0xf]
    %v238 = vld [vmem:[%s1 + $0x370] sm:$0xf]
    %v239 = vld [vmem:[%s1 + $0x374] sm:$0xf]
    %v240 = vld [vmem:[%s1 + $0x378] sm:$0xf]
    %v241 = vld [vmem:[%s1 + $0x37c] sm:$0xf]
    %v242 = vld [vmem:[%s1 + $0x380] sm:$0xf]
    %v243 = vld [vmem:[%s1 + $0x384] sm:$0xf]
    %v244 = vld [vmem:[%s1 + $0x388] sm:$0xf]
    %v245 = vld [vmem:[%s1 + $0x38c] sm:$0xf]
    %v246 = vld [vmem:[%s1 + $0x390] sm:$0xf]
    %v247 = vld [vmem:[%s1 + $0x394] sm:$0xf]
    %v248 = vld [vmem:[%s1 + $0x398] sm:$0xf]
    %v249 = vld [vmem:[%s1 + $0x39c] sm:$0xf]
    %v250 = vld [vmem:[%s1 + $0x3a0] sm:$0xf]
    %v251 = vld [vmem:[%s1 + $0x3a4] sm:$0xf]
    %v252 = vld [vmem:[%s1 + $0x3a8] sm:$0xf]
    %v253 = vld [vmem:[%s1 + $0x3ac] sm:$0xf]
    %v254 = vld [vmem:[%s1 + $0x3b0] sm:$0xf]
    %v255 = vld [vmem:[%s1 + $0x3b4] sm:$0xf]
    %v256 = vld [vmem:[%s1 + $0x3b8] sm:$0xf]
    %v257 = vld [vmem:[%s1 + $0x3bc] sm:$0xf]
    %v258 = vld [vmem:[%s1 + $0x3c0] sm:$0xf]
    %v259 = vld [vmem:[%s1 + $0x3c4] sm:$0xf]
    %v260 = vld [vmem:[%s1 + $0x3c8] sm:$0xf]
    %v261 = vld [vmem:[%s1 + $0x3cc] sm:$0xf]
    %v262 = vld [vmem:[%s1 + $0x3d0] sm:$0xf]
    %v263 = vld [vmem:[%s1 + $0x3d4] sm:$0xf]
    %v264 = vld [vmem:[%s1 + $0x3d8] sm:$0xf]
    %v265 = vld [vmem:[%s1 + $0x3dc] sm:$0xf]
    %v266 = vld [vmem:[%s1 + $0x3e0] sm:$0xf]
    %v267 = vld [vmem:[%s1 + $0x3e4] sm:$0xf]
    %v268 = vld [vmem:[%s1 + $0x3e8] sm:$0xf]
    %v269 = vld [vmem:[%s1 + $0x3ec] sm:$0xf]
    %v270 = vld [vmem:[%s1 + $0x3f0] sm:$0xf]
    %v271 = vld [vmem:[%s1 + $0x3f4] sm:$0xf]
    %v272 = vld [vmem:[%s1 + $0x3f8] sm:$0xf]
    %v273 = vld [vmem:[%s1 + $0x3fc] sm:$0xf]
    %v274 = vld [vmem:[%s2] sm:$0x1]
    %v276 = vlaneseq
    %v277 = vshrl.u32 %v276, 7
    %v278 = vsub.s32 0, %v277
    %v279 = vrot.slane %v274, %v278
    %v283 = vcombine.high %v16, %v16
    %v285 = vunpack.c.l.s4 1966171168
    %v286 = vunpack.c.0.s8 %v285
    %v287 = vlaneseq
    %v288 = vshrl.u32 %v287, 7
    %v289 = vsub.s32 %v286, %v288
    %v290 = vrot.slane %v16, %v289
    %v292 = vunpack.c.l.s4 1966171168
    %v293 = vunpack.c.0.s8 %v292
    %v294 = vlaneseq
    %v295 = vshrl.u32 %v294, 7
    %v296 = vsub.s32 %v293, %v295
    %v297 = vrot.slane %v283, %v296
    %v298 = vcombine.high %v290, %v290
    %v299 = vcombine.high %v297, %v297
    %v301 = vunpack.c.l.s4 1966171168
    %v302 = vunpack.c.0.s8 %v301
    %v303 = vlaneseq
    %v304 = vshrl.u32 %v303, 7
    %v305 = vsub.s32 %v302, %v304
    %v306 = vrot.slane %v290, %v305
    %v308 = vunpack.c.l.s4 1966171168
    %v309 = vunpack.c.0.s8 %v308
    %v310 = vlaneseq
    %v311 = vshrl.u32 %v310, 7
    %v312 = vsub.s32 %v309, %v311
    %v313 = vrot.slane %v297, %v312
    %v315 = vunpack.c.l.s4 1966171168
    %v316 = vunpack.c.0.s8 %v315
    %v317 = vlaneseq
    %v318 = vshrl.u32 %v317, 7
    %v319 = vsub.s32 %v316, %v318
    %v320 = vrot.slane %v298, %v319
    %v322 = vunpack.c.l.s4 1966171168
    %v323 = vunpack.c.0.s8 %v322
    %v324 = vlaneseq
    %v325 = vshrl.u32 %v324, 7
    %v326 = vsub.s32 %v323, %v325
    %v327 = vrot.slane %v299, %v326
    %v328 = vcombine.high %v306, %v306
    %v329 = vcombine.high %v313, %v313
    %v330 = vcombine.high %v320, %v320
    %v331 = vcombine.high %v327, %v327
    %v332 = vcombine.high %v17, %v17
    %v334 = vunpack.c.l.s4 1966171168
    %v335 = vunpack.c.0.s8 %v334
    %v336 = vlaneseq
    %v337 = vshrl.u32 %v336, 7
    %v338 = vsub.s32 %v335, %v337
    %v339 = vrot.slane %v17, %v338
    %v341 = vunpack.c.l.s4 1966171168
    %v342 = vunpack.c.0.s8 %v341
    %v343 = vlaneseq
    %v344 = vshrl.u32 %v343, 7
    %v345 = vsub.s32 %v342, %v344
    %v346 = vrot.slane %v332, %v345
    %v347 = vcombine.high %v339, %v339
    %v348 = vcombine.high %v346, %v346
    %v350 = vunpack.c.l.s4 1966171168
    %v351 = vunpack.c.0.s8 %v350
    %v352 = vlaneseq
    %v353 = vshrl.u32 %v352, 7
    %v354 = vsub.s32 %v351, %v353
    %v355 = vrot.slane %v339, %v354
    %v357 = vunpack.c.l.s4 1966171168
    %v358 = vunpack.c.0.s8 %v357
    %v359 = vlaneseq
    %v360 = vshrl.u32 %v359, 7
    %v361 = vsub.s32 %v358, %v360
    %v362 = vrot.slane %v346, %v361
    %v364 = vunpack.c.l.s4 1966171168
    %v365 = vunpack.c.0.s8 %v364
    %v366 = vlaneseq
    %v367 = vshrl.u32 %v366, 7
    %v368 = vsub.s32 %v365, %v367
    %v369 = vrot.slane %v347, %v368
    %v371 = vunpack.c.l.s4 1966171168
    %v372 = vunpack.c.0.s8 %v371
    %v373 = vlaneseq
    %v374 = vshrl.u32 %v373, 7
    %v375 = vsub.s32 %v372, %v374
    %v376 = vrot.slane %v348, %v375
    %v377 = vcombine.high %v355, %v355
    %v378 = vcombine.high %v362, %v362
    %v379 = vcombine.high %v369, %v369
    %v380 = vcombine.high %v376, %v376
    %v653 = vunpack.c.l.b16 %v18
    %v654 = vunpack.c.l.b16 %v19
    %v655 = vunpack.c.l.b16 %v20
    %v656 = vunpack.c.l.b16 %v21
    %v657 = vunpack.c.l.b16 %v22
    %v658 = vunpack.c.l.b16 %v23
    %v659 = vunpack.c.l.b16 %v24
    %v660 = vunpack.c.l.b16 %v25
    %v661 = vunpack.c.l.b16 %v26
    %v662 = vunpack.c.l.b16 %v27
    %v663 = vunpack.c.l.b16 %v28
    %v664 = vunpack.c.l.b16 %v29
    %v665 = vunpack.c.l.b16 %v30
    %v666 = vunpack.c.l.b16 %v31
    %v667 = vunpack.c.l.b16 %v32
    %v668 = vunpack.c.l.b16 %v33
    %v669 = vunpack.c.l.b16 %v34
    %v670 = vunpack.c.l.b16 %v35
    %v671 = vunpack.c.l.b16 %v36
    %v672 = vunpack.c.l.b16 %v37
    %v673 = vunpack.c.l.b16 %v38
    %v674 = vunpack.c.l.b16 %v39
    %v675 = vunpack.c.l.b16 %v40
    %v676 = vunpack.c.l.b16 %v41
    %v677 = vunpack.c.l.b16 %v42
    %v678 = vunpack.c.l.b16 %v43
    %v679 = vunpack.c.l.b16 %v44
    %v680 = vunpack.c.l.b16 %v45
    %v681 = vunpack.c.l.b16 %v46
    %v682 = vunpack.c.l.b16 %v47
    %v683 = vunpack.c.l.b16 %v48
    %v684 = vunpack.c.l.b16 %v49
    %v685 = vunpack.c.l.b16 %v50
    %v686 = vunpack.c.l.b16 %v51
    %v687 = vunpack.c.l.b16 %v52
    %v688 = vunpack.c.l.b16 %v53
    %v689 = vunpack.c.l.b16 %v54
    %v690 = vunpack.c.l.b16 %v55
    %v691 = vunpack.c.l.b16 %v56
    %v692 = vunpack.c.l.b16 %v57
    %v693 = vunpack.c.l.b16 %v58
    %v694 = vunpack.c.l.b16 %v59
    %v695 = vunpack.c.l.b16 %v60
    %v696 = vunpack.c.l.b16 %v61
    %v697 = vunpack.c.l.b16 %v62
    %v698 = vunpack.c.l.b16 %v63
    %v699 = vunpack.c.l.b16 %v64
    %v700 = vunpack.c.l.b16 %v65
    %v701 = vunpack.c.l.b16 %v66
    %v702 = vunpack.c.l.b16 %v67
    %v703 = vunpack.c.l.b16 %v68
    %v704 = vunpack.c.l.b16 %v69
    %v705 = vunpack.c.l.b16 %v70
    %v706 = vunpack.c.l.b16 %v71
    %v707 = vunpack.c.l.b16 %v72
    %v708 = vunpack.c.l.b16 %v73
    %v709 = vunpack.c.l.b16 %v74
    %v710 = vunpack.c.l.b16 %v75
    %v711 = vunpack.c.l.b16 %v76
    %v712 = vunpack.c.l.b16 %v77
    %v713 = vunpack.c.l.b16 %v78
    %v714 = vunpack.c.l.b16 %v79
    %v715 = vunpack.c.l.b16 %v80
    %v716 = vunpack.c.l.b16 %v81
    %v717 = vunpack.c.l.b16 %v82
    %v718 = vunpack.c.l.b16 %v83
    %v719 = vunpack.c.l.b16 %v84
    %v720 = vunpack.c.l.b16 %v85
    %v721 = vunpack.c.l.b16 %v86
    %v722 = vunpack.c.l.b16 %v87
    %v723 = vunpack.c.l.b16 %v88
    %v724 = vunpack.c.l.b16 %v89
    %v725 = vunpack.c.l.b16 %v90
    %v726 = vunpack.c.l.b16 %v91
    %v727 = vunpack.c.l.b16 %v92
    %v728 = vunpack.c.l.b16 %v93
    %v729 = vunpack.c.l.b16 %v94
    %v730 = vunpack.c.l.b16 %v95
    %v731 = vunpack.c.l.b16 %v96
    %v732 = vunpack.c.l.b16 %v97
    %v733 = vunpack.c.l.b16 %v98
    %v734 = vunpack.c.l.b16 %v99
    %v735 = vunpack.c.l.b16 %v100
    %v736 = vunpack.c.l.b16 %v101
    %v737 = vunpack.c.l.b16 %v102
    %v738 = vunpack.c.l.b16 %v103
    %v739 = vunpack.c.l.b16 %v104
    %v740 = vunpack.c.l.b16 %v105
    %v741 = vunpack.c.l.b16 %v106
    %v742 = vunpack.c.l.b16 %v107
    %v743 = vunpack.c.l.b16 %v108
    %v744 = vunpack.c.l.b16 %v109
    %v745 = vunpack.c.l.b16 %v110
    %v746 = vunpack.c.l.b16 %v111
    %v747 = vunpack.c.l.b16 %v112
    %v748 = vunpack.c.l.b16 %v113
    %v749 = vunpack.c.l.b16 %v114
    %v750 = vunpack.c.l.b16 %v115
    %v751 = vunpack.c.l.b16 %v116
    %v752 = vunpack.c.l.b16 %v117
    %v753 = vunpack.c.l.b16 %v118
    %v754 = vunpack.c.l.b16 %v119
    %v755 = vunpack.c.l.b16 %v120
    %v756 = vunpack.c.l.b16 %v121
    %v757 = vunpack.c.l.b16 %v122
    %v758 = vunpack.c.l.b16 %v123
    %v759 = vunpack.c.l.b16 %v124
    %v760 = vunpack.c.l.b16 %v125
    %v761 = vunpack.c.l.b16 %v126
    %v762 = vunpack.c.l.b16 %v127
    %v763 = vunpack.c.l.b16 %v128
    %v764 = vunpack.c.l.b16 %v129
    %v765 = vunpack.c.l.b16 %v130
    %v766 = vunpack.c.l.b16 %v131
    %v767 = vunpack.c.l.b16 %v132
    %v768 = vunpack.c.l.b16 %v133
    %v769 = vunpack.c.l.b16 %v134
    %v770 = vunpack.c.l.b16 %v135
    %v771 = vunpack.c.l.b16 %v136
    %v772 = vunpack.c.l.b16 %v137
    %v773 = vunpack.c.l.b16 %v138
    %v774 = vunpack.c.l.b16 %v139
    %v775 = vunpack.c.l.b16 %v140
    %v776 = vunpack.c.l.b16 %v141
    %v777 = vunpack.c.l.b16 %v142
    %v778 = vunpack.c.l.b16 %v143
    %v779 = vunpack.c.l.b16 %v144
    %v780 = vunpack.c.l.b16 %v145
    %v781 = vunpack.c.l.b16 %v146
    %v782 = vunpack.c.l.b16 %v147
    %v783 = vunpack.c.l.b16 %v148
    %v784 = vunpack.c.l.b16 %v149
    %v785 = vunpack.c.l.b16 %v150
    %v786 = vunpack.c.l.b16 %v151
    %v787 = vunpack.c.l.b16 %v152
    %v788 = vunpack.c.l.b16 %v153
    %v789 = vunpack.c.l.b16 %v154
    %v790 = vunpack.c.l.b16 %v155
    %v791 = vunpack.c.l.b16 %v156
    %v792 = vunpack.c.l.b16 %v157
    %v793 = vunpack.c.l.b16 %v158
    %v794 = vunpack.c.l.b16 %v159
    %v795 = vunpack.c.l.b16 %v160
    %v796 = vunpack.c.l.b16 %v161
    %v797 = vunpack.c.l.b16 %v162
    %v798 = vunpack.c.l.b16 %v163
    %v799 = vunpack.c.l.b16 %v164
    %v800 = vunpack.c.l.b16 %v165
    %v801 = vunpack.c.l.b16 %v166
    %v802 = vunpack.c.l.b16 %v167
    %v803 = vunpack.c.l.b16 %v168
    %v804 = vunpack.c.l.b16 %v169
    %v805 = vunpack.c.l.b16 %v170
    %v806 = vunpack.c.l.b16 %v171
    %v807 = vunpack.c.l.b16 %v172
    %v808 = vunpack.c.l.b16 %v173
    %v809 = vunpack.c.l.b16 %v174
    %v810 = vunpack.c.l.b16 %v175
    %v811 = vunpack.c.l.b16 %v176
    %v812 = vunpack.c.l.b16 %v177
    %v813 = vunpack.c.l.b16 %v178
    %v814 = vunpack.c.l.b16 %v179
    %v815 = vunpack.c.l.b16 %v180
    %v816 = vunpack.c.l.b16 %v181
    %v817 = vunpack.c.l.b16 %v182
    %v818 = vunpack.c.l.b16 %v183
    %v819 = vunpack.c.l.b16 %v184
    %v820 = vunpack.c.l.b16 %v185
    %v821 = vunpack.c.l.b16 %v186
    %v822 = vunpack.c.l.b16 %v187
    %v823 = vunpack.c.l.b16 %v188
    %v824 = vunpack.c.l.b16 %v189
    %v825 = vunpack.c.l.b16 %v190
    %v826 = vunpack.c.l.b16 %v191
    %v827 = vunpack.c.l.b16 %v192
    %v828 = vunpack.c.l.b16 %v193
    %v829 = vunpack.c.l.b16 %v194
    %v830 = vunpack.c.l.b16 %v195
    %v831 = vunpack.c.l.b16 %v196
    %v832 = vunpack.c.l.b16 %v197
    %v833 = vunpack.c.l.b16 %v198
    %v834 = vunpack.c.l.b16 %v199
    %v835 = vunpack.c.l.b16 %v200
    %v836 = vunpack.c.l.b16 %v201
    %v837 = vunpack.c.l.b16 %v202
    %v838 = vunpack.c.l.b16 %v203
    %v839 = vunpack.c.l.b16 %v204
    %v840 = vunpack.c.l.b16 %v205
    %v841 = vunpack.c.l.b16 %v206
    %v842 = vunpack.c.l.b16 %v207
    %v843 = vunpack.c.l.b16 %v208
    %v844 = vunpack.c.l.b16 %v209
    %v845 = vunpack.c.l.b16 %v210
    %v846 = vunpack.c.l.b16 %v211
    %v847 = vunpack.c.l.b16 %v212
    %v848 = vunpack.c.l.b16 %v213
    %v849 = vunpack.c.l.b16 %v214
    %v850 = vunpack.c.l.b16 %v215
    %v851 = vunpack.c.l.b16 %v216
    %v852 = vunpack.c.l.b16 %v217
    %v853 = vunpack.c.l.b16 %v218
    %v854 = vunpack.c.l.b16 %v219
    %v855 = vunpack.c.l.b16 %v220
    %v856 = vunpack.c.l.b16 %v221
    %v857 = vunpack.c.l.b16 %v222
    %v858 = vunpack.c.l.b16 %v223
    %v859 = vunpack.c.l.b16 %v224
    %v860 = vunpack.c.l.b16 %v225
    %v861 = vunpack.c.l.b16 %v226
    %v862 = vunpack.c.l.b16 %v227
    %v863 = vunpack.c.l.b16 %v228
    %v864 = vunpack.c.l.b16 %v229
    %v865 = vunpack.c.l.b16 %v230
    %v866 = vunpack.c.l.b16 %v231
    %v867 = vunpack.c.l.b16 %v232
    %v868 = vunpack.c.l.b16 %v233
    %v869 = vunpack.c.l.b16 %v234
    %v870 = vunpack.c.l.b16 %v235
    %v871 = vunpack.c.l.b16 %v236
    %v872 = vunpack.c.l.b16 %v237
    %v873 = vunpack.c.l.b16 %v238
    %v874 = vunpack.c.l.b16 %v239
    %v875 = vunpack.c.l.b16 %v240
    %v876 = vunpack.c.l.b16 %v241
    %v877 = vunpack.c.l.b16 %v242
    %v878 = vunpack.c.l.b16 %v243
    %v879 = vunpack.c.l.b16 %v244
    %v880 = vunpack.c.l.b16 %v245
    %v881 = vunpack.c.l.b16 %v246
    %v882 = vunpack.c.l.b16 %v247
    %v883 = vunpack.c.l.b16 %v248
    %v884 = vunpack.c.l.b16 %v249
    %v885 = vunpack.c.l.b16 %v250
    %v886 = vunpack.c.l.b16 %v251
    %v887 = vunpack.c.l.b16 %v252
    %v888 = vunpack.c.l.b16 %v253
    %v889 = vunpack.c.l.b16 %v254
    %v890 = vunpack.c.l.b16 %v255
    %v891 = vunpack.c.l.b16 %v256
    %v892 = vunpack.c.l.b16 %v257
    %v893 = vunpack.c.l.b16 %v258
    %v894 = vunpack.c.l.b16 %v259
    %v895 = vunpack.c.l.b16 %v260
    %v896 = vunpack.c.l.b16 %v261
    %v897 = vunpack.c.l.b16 %v262
    %v898 = vunpack.c.l.b16 %v263
    %v899 = vunpack.c.l.b16 %v264
    %v900 = vunpack.c.l.b16 %v265
    %v901 = vunpack.c.l.b16 %v266
    %v902 = vunpack.c.l.b16 %v267
    %v903 = vunpack.c.l.b16 %v268
    %v904 = vunpack.c.l.b16 %v269
    %v905 = vunpack.c.l.b16 %v270
    %v906 = vunpack.c.l.b16 %v271
    %v907 = vunpack.c.l.b16 %v272
    %v908 = vunpack.c.l.b16 %v273
    %v909 = vpack.c.b16 %v654, %v653
    %v910 = vpack.c.b16 %v656, %v655
    %v911 = vpack.c.b16 %v658, %v657
    %v912 = vpack.c.b16 %v660, %v659
    %v913 = vpack.c.b16 %v662, %v661
    %v914 = vpack.c.b16 %v664, %v663
    %v915 = vpack.c.b16 %v666, %v665
    %v916 = vpack.c.b16 %v668, %v667
    %v917 = vpack.c.b16 %v670, %v669
    %v918 = vpack.c.b16 %v672, %v671
    %v919 = vpack.c.b16 %v674, %v673
    %v920 = vpack.c.b16 %v676, %v675
    %v921 = vpack.c.b16 %v678, %v677
    %v922 = vpack.c.b16 %v680, %v679
    %v923 = vpack.c.b16 %v682, %v681
    %v924 = vpack.c.b16 %v684, %v683
    %v925 = vpack.c.b16 %v686, %v685
    %v926 = vpack.c.b16 %v688, %v687
    %v927 = vpack.c.b16 %v690, %v689
    %v928 = vpack.c.b16 %v692, %v691
    %v929 = vpack.c.b16 %v694, %v693
    %v930 = vpack.c.b16 %v696, %v695
    %v931 = vpack.c.b16 %v698, %v697
    %v932 = vpack.c.b16 %v700, %v699
    %v933 = vpack.c.b16 %v702, %v701
    %v934 = vpack.c.b16 %v704, %v703
    %v935 = vpack.c.b16 %v706, %v705
    %v936 = vpack.c.b16 %v708, %v707
    %v937 = vpack.c.b16 %v710, %v709
    %v938 = vpack.c.b16 %v712, %v711
    %v939 = vpack.c.b16 %v714, %v713
    %v940 = vpack.c.b16 %v716, %v715
    %v941 = vpack.c.b16 %v718, %v717
    %v942 = vpack.c.b16 %v720, %v719
    %v943 = vpack.c.b16 %v722, %v721
    %v944 = vpack.c.b16 %v724, %v723
    %v945 = vpack.c.b16 %v726, %v725
    %v946 = vpack.c.b16 %v728, %v727
    %v947 = vpack.c.b16 %v730, %v729
    %v948 = vpack.c.b16 %v732, %v731
    %v949 = vpack.c.b16 %v734, %v733
    %v950 = vpack.c.b16 %v736, %v735
    %v951 = vpack.c.b16 %v738, %v737
    %v952 = vpack.c.b16 %v740, %v739
    %v953 = vpack.c.b16 %v742, %v741
    %v954 = vpack.c.b16 %v744, %v743
    %v955 = vpack.c.b16 %v746, %v745
    %v956 = vpack.c.b16 %v748, %v747
    %v957 = vpack.c.b16 %v750, %v749
    %v958 = vpack.c.b16 %v752, %v751
    %v959 = vpack.c.b16 %v754, %v753
    %v960 = vpack.c.b16 %v756, %v755
    %v961 = vpack.c.b16 %v758, %v757
    %v962 = vpack.c.b16 %v760, %v759
    %v963 = vpack.c.b16 %v762, %v761
    %v964 = vpack.c.b16 %v764, %v763
    %v965 = vpack.c.b16 %v766, %v765
    %v966 = vpack.c.b16 %v768, %v767
    %v967 = vpack.c.b16 %v770, %v769
    %v968 = vpack.c.b16 %v772, %v771
    %v969 = vpack.c.b16 %v774, %v773
    %v970 = vpack.c.b16 %v776, %v775
    %v971 = vpack.c.b16 %v778, %v777
    %v972 = vpack.c.b16 %v780, %v779
    %v973 = vpack.c.b16 %v782, %v781
    %v974 = vpack.c.b16 %v784, %v783
    %v975 = vpack.c.b16 %v786, %v785
    %v976 = vpack.c.b16 %v788, %v787
    %v977 = vpack.c.b16 %v790, %v789
    %v978 = vpack.c.b16 %v792, %v791
    %v979 = vpack.c.b16 %v794, %v793
    %v980 = vpack.c.b16 %v796, %v795
    %v981 = vpack.c.b16 %v798, %v797
    %v982 = vpack.c.b16 %v800, %v799
    %v983 = vpack.c.b16 %v802, %v801
    %v984 = vpack.c.b16 %v804, %v803
    %v985 = vpack.c.b16 %v806, %v805
    %v986 = vpack.c.b16 %v808, %v807
    %v987 = vpack.c.b16 %v810, %v809
    %v988 = vpack.c.b16 %v812, %v811
    %v989 = vpack.c.b16 %v814, %v813
    %v990 = vpack.c.b16 %v816, %v815
    %v991 = vpack.c.b16 %v818, %v817
    %v992 = vpack.c.b16 %v820, %v819
    %v993 = vpack.c.b16 %v822, %v821
    %v994 = vpack.c.b16 %v824, %v823
    %v995 = vpack.c.b16 %v826, %v825
    %v996 = vpack.c.b16 %v828, %v827
    %v997 = vpack.c.b16 %v830, %v829
    %v998 = vpack.c.b16 %v832, %v831
    %v999 = vpack.c.b16 %v834, %v833
    %v1000 = vpack.c.b16 %v836, %v835
    %v1001 = vpack.c.b16 %v838, %v837
    %v1002 = vpack.c.b16 %v840, %v839
    %v1003 = vpack.c.b16 %v842, %v841
    %v1004 = vpack.c.b16 %v844, %v843
    %v1005 = vpack.c.b16 %v846, %v845
    %v1006 = vpack.c.b16 %v848, %v847
    %v1007 = vpack.c.b16 %v850, %v849
    %v1008 = vpack.c.b16 %v852, %v851
    %v1009 = vpack.c.b16 %v854, %v853
    %v1010 = vpack.c.b16 %v856, %v855
    %v1011 = vpack.c.b16 %v858, %v857
    %v1012 = vpack.c.b16 %v860, %v859
    %v1013 = vpack.c.b16 %v862, %v861
    %v1014 = vpack.c.b16 %v864, %v863
    %v1015 = vpack.c.b16 %v866, %v865
    %v1016 = vpack.c.b16 %v868, %v867
    %v1017 = vpack.c.b16 %v870, %v869
    %v1018 = vpack.c.b16 %v872, %v871
    %v1019 = vpack.c.b16 %v874, %v873
    %v1020 = vpack.c.b16 %v876, %v875
    %v1021 = vpack.c.b16 %v878, %v877
    %v1022 = vpack.c.b16 %v880, %v879
    %v1023 = vpack.c.b16 %v882, %v881
    %v1024 = vpack.c.b16 %v884, %v883
    %v1025 = vpack.c.b16 %v886, %v885
    %v1026 = vpack.c.b16 %v888, %v887
    %v1027 = vpack.c.b16 %v890, %v889
    %v1028 = vpack.c.b16 %v892, %v891
    %v1029 = vpack.c.b16 %v894, %v893
    %v1030 = vpack.c.b16 %v896, %v895
    %v1031 = vpack.c.b16 %v898, %v897
    %v1032 = vpack.c.b16 %v900, %v899
    %v1033 = vpack.c.b16 %v902, %v901
    %v1034 = vpack.c.b16 %v904, %v903
    %v1035 = vpack.c.b16 %v906, %v905
    %v1036 = vpack.c.b16 %v908, %v907
    %1165 = vmatprep.subr.bf16.mxu0 0
    %1166 = vmatpush1.bf16.msra.mxu0 %v916
    %1167 = vmatprep.subr.bf16.mxu0 0
    %1168 = vmatpush1.bf16.msra.mxu0 %v915
    %1169 = vmatprep.subr.bf16.mxu0 0
    %1170 = vmatpush1.bf16.msra.mxu0 %v914
    %1171 = vmatprep.subr.bf16.mxu0 0
    %1172 = vmatpush1.bf16.msra.mxu0 %v913
    %1173 = vmatprep.subr.bf16.mxu0 0
    %1174 = vmatpush1.bf16.msra.mxu0 %v912
    %1175 = vmatprep.subr.bf16.mxu0 0
    %1176 = vmatpush1.bf16.msra.mxu0 %v911
    %1177 = vmatprep.subr.bf16.mxu0 0
    %1178 = vmatpush1.bf16.msra.mxu0 %v910
    %1179 = vmatprep.subr.bf16.mxu0 0
    %1180 = vmatpush1.bf16.msra.mxu0 %v909
    %1181 = vmatprep.subr.bf16.mxu0 0
    %1182 = vmatpush2.bf16.msra.mxu0 %v924
    %1183 = vmatprep.subr.bf16.mxu0 0
    %1184 = vmatpush2.bf16.msra.mxu0 %v923
    %1185 = vmatprep.subr.bf16.mxu0 0
    %1186 = vmatpush2.bf16.msra.mxu0 %v922
    %1187 = vmatprep.subr.bf16.mxu0 0
    %1188 = vmatpush2.bf16.msra.mxu0 %v921
    %1189 = vmatprep.subr.bf16.mxu0 0
    %1190 = vmatpush2.bf16.msra.mxu0 %v920
    %1191 = vmatprep.subr.bf16.mxu0 0
    %1192 = vmatpush2.bf16.msra.mxu0 %v919
    %1193 = vmatprep.subr.bf16.mxu0 0
    %1194 = vmatpush2.bf16.msra.mxu0 %v918
    %1195 = vmatprep.subr.bf16.mxu0 0
    %1196 = vmatpush2.bf16.msra.mxu0 %v917
    %1197 = vmatprep.mubr.bf16.mxu0 %v320
    %1198 = vmatmul.mubr.bf16.gmra.mxu0 %v306
    %v1199 = vpop.f32.mrf.mxu0
    %v1200 = vadd.f32 %v279, %v1199
    %v1201 = vpop.f32.mrf.mxu0
    %v1202 = vpop.f32.mrf.mxu0
    %v1203 = vpop.f32.mrf.mxu0
    %1204 = vdwg.mxu0
    %1205 = vmatprep.subr.bf16.mxu0 0
    %1206 = vmatpush1.bf16.msra.mxu0 %v932
    %1207 = vmatprep.subr.bf16.mxu0 0
    %1208 = vmatpush1.bf16.msra.mxu0 %v931
    %1209 = vmatprep.subr.bf16.mxu0 0
    %1210 = vmatpush1.bf16.msra.mxu0 %v930
    %1211 = vmatprep.subr.bf16.mxu0 0
    %1212 = vmatpush1.bf16.msra.mxu0 %v929
    %1213 = vmatprep.subr.bf16.mxu0 0
    %1214 = vmatpush1.bf16.msra.mxu0 %v928
    %1215 = vmatprep.subr.bf16.mxu0 0
    %1216 = vmatpush1.bf16.msra.mxu0 %v927
    %1217 = vmatprep.subr.bf16.mxu0 0
    %1218 = vmatpush1.bf16.msra.mxu0 %v926
    %1219 = vmatprep.subr.bf16.mxu0 0
    %1220 = vmatpush1.bf16.msra.mxu0 %v925
    %1221 = vmatprep.subr.bf16.mxu0 0
    %1222 = vmatpush2.bf16.msra.mxu0 %v940
    %1223 = vmatprep.subr.bf16.mxu0 0
    %1224 = vmatpush2.bf16.msra.mxu0 %v939
    %1225 = vmatprep.subr.bf16.mxu0 0
    %1226 = vmatpush2.bf16.msra.mxu0 %v938
    %1227 = vmatprep.subr.bf16.mxu0 0
    %1228 = vmatpush2.bf16.msra.mxu0 %v937
    %1229 = vmatprep.subr.bf16.mxu0 0
    %1230 = vmatpush2.bf16.msra.mxu0 %v936
    %1231 = vmatprep.subr.bf16.mxu0 0
    %1232 = vmatpush2.bf16.msra.mxu0 %v935
    %1233 = vmatprep.subr.bf16.mxu0 0
    %1234 = vmatpush2.bf16.msra.mxu0 %v934
    %1235 = vmatprep.subr.bf16.mxu0 0
    %1236 = vmatpush2.bf16.msra.mxu0 %v933
    %1237 = vmatprep.mubr.bf16.mxu0 %v330
    %1238 = vmatmul.mubr.bf16.gmra.mxu0 %v328
    %v1239 = vpop.f32.mrf.mxu0
    %v1240 = vadd.f32 %v1200, %v1239
    %v1241 = vpop.f32.mrf.mxu0
    %v1242 = vpop.f32.mrf.mxu0
    %v1243 = vpop.f32.mrf.mxu0
    %1244 = vdwg.mxu0
    %1245 = vmatprep.subr.bf16.mxu0 0
    %1246 = vmatpush1.bf16.msra.mxu0 %v948
    %1247 = vmatprep.subr.bf16.mxu0 0
    %1248 = vmatpush1.bf16.msra.mxu0 %v947
    %1249 = vmatprep.subr.bf16.mxu0 0
    %1250 = vmatpush1.bf16.msra.mxu0 %v946
    %1251 = vmatprep.subr.bf16.mxu0 0
    %1252 = vmatpush1.bf16.msra.mxu0 %v945
    %1253 = vmatprep.subr.bf16.mxu0 0
    %1254 = vmatpush1.bf16.msra.mxu0 %v944
    %1255 = vmatprep.subr.bf16.mxu0 0
    %1256 = vmatpush1.bf16.msra.mxu0 %v943
    %1257 = vmatprep.subr.bf16.mxu0 0
    %1258 = vmatpush1.bf16.msra.mxu0 %v942
    %1259 = vmatprep.subr.bf16.mxu0 0
    %1260 = vmatpush1.bf16.msra.mxu0 %v941
    %1261 = vmatprep.subr.bf16.mxu0 0
    %1262 = vmatpush2.bf16.msra.mxu0 %v956
    %1263 = vmatprep.subr.bf16.mxu0 0
    %1264 = vmatpush2.bf16.msra.mxu0 %v955
    %1265 = vmatprep.subr.bf16.mxu0 0
    %1266 = vmatpush2.bf16.msra.mxu0 %v954
    %1267 = vmatprep.subr.bf16.mxu0 0
    %1268 = vmatpush2.bf16.msra.mxu0 %v953
    %1269 = vmatprep.subr.bf16.mxu0 0
    %1270 = vmatpush2.bf16.msra.mxu0 %v952
    %1271 = vmatprep.subr.bf16.mxu0 0
    %1272 = vmatpush2.bf16.msra.mxu0 %v951
    %1273 = vmatprep.subr.bf16.mxu0 0
    %1274 = vmatpush2.bf16.msra.mxu0 %v950
    %1275 = vmatprep.subr.bf16.mxu0 0
    %1276 = vmatpush2.bf16.msra.mxu0 %v949
    %1277 = vmatprep.mubr.bf16.mxu0 %v327
    %1278 = vmatmul.mubr.bf16.gmra.mxu0 %v313
    %v1279 = vpop.f32.mrf.mxu0
    %v1280 = vadd.f32 %v1240, %v1279
    %v1281 = vpop.f32.mrf.mxu0
    %v1282 = vpop.f32.mrf.mxu0
    %v1283 = vpop.f32.mrf.mxu0
    %1284 = vdwg.mxu0
    %1285 = vmatprep.subr.bf16.mxu0 0
    %1286 = vmatpush1.bf16.msra.mxu0 %v964
    %1287 = vmatprep.subr.bf16.mxu0 0
    %1288 = vmatpush1.bf16.msra.mxu0 %v963
    %1289 = vmatprep.subr.bf16.mxu0 0
    %1290 = vmatpush1.bf16.msra.mxu0 %v962
    %1291 = vmatprep.subr.bf16.mxu0 0
    %1292 = vmatpush1.bf16.msra.mxu0 %v961
    %1293 = vmatprep.subr.bf16.mxu0 0
    %1294 = vmatpush1.bf16.msra.mxu0 %v960
    %1295 = vmatprep.subr.bf16.mxu0 0
    %1296 = vmatpush1.bf16.msra.mxu0 %v959
    %1297 = vmatprep.subr.bf16.mxu0 0
    %1298 = vmatpush1.bf16.msra.mxu0 %v958
    %1299 = vmatprep.subr.bf16.mxu0 0
    %1300 = vmatpush1.bf16.msra.mxu0 %v957
    %1301 = vmatprep.subr.bf16.mxu0 0
    %1302 = vmatpush2.bf16.msra.mxu0 %v972
    %1303 = vmatprep.subr.bf16.mxu0 0
    %1304 = vmatpush2.bf16.msra.mxu0 %v971
    %1305 = vmatprep.subr.bf16.mxu0 0
    %1306 = vmatpush2.bf16.msra.mxu0 %v970
    %1307 = vmatprep.subr.bf16.mxu0 0
    %1308 = vmatpush2.bf16.msra.mxu0 %v969
    %1309 = vmatprep.subr.bf16.mxu0 0
    %1310 = vmatpush2.bf16.msra.mxu0 %v968
    %1311 = vmatprep.subr.bf16.mxu0 0
    %1312 = vmatpush2.bf16.msra.mxu0 %v967
    %1313 = vmatprep.subr.bf16.mxu0 0
    %1314 = vmatpush2.bf16.msra.mxu0 %v966
    %1315 = vmatprep.subr.bf16.mxu0 0
    %1316 = vmatpush2.bf16.msra.mxu0 %v965
    %1317 = vmatprep.mubr.bf16.mxu0 %v331
    %1318 = vmatmul.mubr.bf16.gmra.mxu0 %v329
    %v1319 = vpop.f32.mrf.mxu0
    %v1320 = vadd.f32 %v1280, %v1319
    %v1321 = vpop.f32.mrf.mxu0
    %v1322 = vpop.f32.mrf.mxu0
    %v1323 = vpop.f32.mrf.mxu0
    %1324 = vdwg.mxu0
    %1325 = vmatprep.subr.bf16.mxu0 0
    %1326 = vmatpush1.bf16.msra.mxu0 %v980
    %1327 = vmatprep.subr.bf16.mxu0 0
    %1328 = vmatpush1.bf16.msra.mxu0 %v979
    %1329 = vmatprep.subr.bf16.mxu0 0
    %1330 = vmatpush1.bf16.msra.mxu0 %v978
    %1331 = vmatprep.subr.bf16.mxu0 0
    %1332 = vmatpush1.bf16.msra.mxu0 %v977
    %1333 = vmatprep.subr.bf16.mxu0 0
    %1334 = vmatpush1.bf16.msra.mxu0 %v976
    %1335 = vmatprep.subr.bf16.mxu0 0
    %1336 = vmatpush1.bf16.msra.mxu0 %v975
    %1337 = vmatprep.subr.bf16.mxu0 0
    %1338 = vmatpush1.bf16.msra.mxu0 %v974
    %1339 = vmatprep.subr.bf16.mxu0 0
    %1340 = vmatpush1.bf16.msra.mxu0 %v973
    %1341 = vmatprep.subr.bf16.mxu0 0
    %1342 = vmatpush2.bf16.msra.mxu0 %v988
    %1343 = vmatprep.subr.bf16.mxu0 0
    %1344 = vmatpush2.bf16.msra.mxu0 %v987
    %1345 = vmatprep.subr.bf16.mxu0 0
    %1346 = vmatpush2.bf16.msra.mxu0 %v986
    %1347 = vmatprep.subr.bf16.mxu0 0
    %1348 = vmatpush2.bf16.msra.mxu0 %v985
    %1349 = vmatprep.subr.bf16.mxu0 0
    %1350 = vmatpush2.bf16.msra.mxu0 %v984
    %1351 = vmatprep.subr.bf16.mxu0 0
    %1352 = vmatpush2.bf16.msra.mxu0 %v983
    %1353 = vmatprep.subr.bf16.mxu0 0
    %1354 = vmatpush2.bf16.msra.mxu0 %v982
    %1355 = vmatprep.subr.bf16.mxu0 0
    %1356 = vmatpush2.bf16.msra.mxu0 %v981
    %1357 = vmatprep.mubr.bf16.mxu0 %v369
    %1358 = vmatmul.mubr.bf16.gmra.mxu0 %v355
    %v1359 = vpop.f32.mrf.mxu0
    %v1360 = vadd.f32 %v1320, %v1359
    %v1361 = vpop.f32.mrf.mxu0
    %v1362 = vpop.f32.mrf.mxu0
    %v1363 = vpop.f32.mrf.mxu0
    %1364 = vdwg.mxu0
    %1365 = vmatprep.subr.bf16.mxu0 0
    %1366 = vmatpush1.bf16.msra.mxu0 %v996
    %1367 = vmatprep.subr.bf16.mxu0 0
    %1368 = vmatpush1.bf16.msra.mxu0 %v995
    %1369 = vmatprep.subr.bf16.mxu0 0
    %1370 = vmatpush1.bf16.msra.mxu0 %v994
    %1371 = vmatprep.subr.bf16.mxu0 0
    %1372 = vmatpush1.bf16.msra.mxu0 %v993
    %1373 = vmatprep.subr.bf16.mxu0 0
    %1374 = vmatpush1.bf16.msra.mxu0 %v992
    %1375 = vmatprep.subr.bf16.mxu0 0
    %1376 = vmatpush1.bf16.msra.mxu0 %v991
    %1377 = vmatprep.subr.bf16.mxu0 0
    %1378 = vmatpush1.bf16.msra.mxu0 %v990
    %1379 = vmatprep.subr.bf16.mxu0 0
    %1380 = vmatpush1.bf16.msra.mxu0 %v989
    %1381 = vmatprep.subr.bf16.mxu0 0
    %1382 = vmatpush2.bf16.msra.mxu0 %v1004
    %1383 = vmatprep.subr.bf16.mxu0 0
    %1384 = vmatpush2.bf16.msra.mxu0 %v1003
    %1385 = vmatprep.subr.bf16.mxu0 0
    %1386 = vmatpush2.bf16.msra.mxu0 %v1002
    %1387 = vmatprep.subr.bf16.mxu0 0
    %1388 = vmatpush2.bf16.msra.mxu0 %v1001
    %1389 = vmatprep.subr.bf16.mxu0 0
    %1390 = vmatpush2.bf16.msra.mxu0 %v1000
    %1391 = vmatprep.subr.bf16.mxu0 0
    %1392 = vmatpush2.bf16.msra.mxu0 %v999
    %1393 = vmatprep.subr.bf16.mxu0 0
    %1394 = vmatpush2.bf16.msra.mxu0 %v998
    %1395 = vmatprep.subr.bf16.mxu0 0
    %1396 = vmatpush2.bf16.msra.mxu0 %v997
    %1397 = vmatprep.mubr.bf16.mxu0 %v379
    %1398 = vmatmul.mubr.bf16.gmra.mxu0 %v377
    %v1399 = vpop.f32.mrf.mxu0
    %v1400 = vadd.f32 %v1360, %v1399
    %v1401 = vpop.f32.mrf.mxu0
    %v1402 = vpop.f32.mrf.mxu0
    %v1403 = vpop.f32.mrf.mxu0
    %1404 = vdwg.mxu0
    %1405 = vmatprep.subr.bf16.mxu0 0
    %1406 = vmatpush1.bf16.msra.mxu0 %v1012
    %1407 = vmatprep.subr.bf16.mxu0 0
    %1408 = vmatpush1.bf16.msra.mxu0 %v1011
    %1409 = vmatprep.subr.bf16.mxu0 0
    %1410 = vmatpush1.bf16.msra.mxu0 %v1010
    %1411 = vmatprep.subr.bf16.mxu0 0
    %1412 = vmatpush1.bf16.msra.mxu0 %v1009
    %1413 = vmatprep.subr.bf16.mxu0 0
    %1414 = vmatpush1.bf16.msra.mxu0 %v1008
    %1415 = vmatprep.subr.bf16.mxu0 0
    %1416 = vmatpush1.bf16.msra.mxu0 %v1007
    %1417 = vmatprep.subr.bf16.mxu0 0
    %1418 = vmatpush1.bf16.msra.mxu0 %v1006
    %1419 = vmatprep.subr.bf16.mxu0 0
    %1420 = vmatpush1.bf16.msra.mxu0 %v1005
    %1421 = vmatprep.subr.bf16.mxu0 0
    %1422 = vmatpush2.bf16.msra.mxu0 %v1020
    %1423 = vmatprep.subr.bf16.mxu0 0
    %1424 = vmatpush2.bf16.msra.mxu0 %v1019
    %1425 = vmatprep.subr.bf16.mxu0 0
    %1426 = vmatpush2.bf16.msra.mxu0 %v1018
    %1427 = vmatprep.subr.bf16.mxu0 0
    %1428 = vmatpush2.bf16.msra.mxu0 %v1017
    %1429 = vmatprep.subr.bf16.mxu0 0
    %1430 = vmatpush2.bf16.msra.mxu0 %v1016
    %1431 = vmatprep.subr.bf16.mxu0 0
    %1432 = vmatpush2.bf16.msra.mxu0 %v1015
    %1433 = vmatprep.subr.bf16.mxu0 0
    %1434 = vmatpush2.bf16.msra.mxu0 %v1014
    %1435 = vmatprep.subr.bf16.mxu0 0
    %1436 = vmatpush2.bf16.msra.mxu0 %v1013
    %1437 = vmatprep.mubr.bf16.mxu0 %v376
    %1438 = vmatmul.mubr.bf16.gmra.mxu0 %v362
    %v1439 = vpop.f32.mrf.mxu0
    %v1440 = vadd.f32 %v1400, %v1439
    %v1441 = vpop.f32.mrf.mxu0
    %v1442 = vpop.f32.mrf.mxu0
    %v1443 = vpop.f32.mrf.mxu0
    %1444 = vdwg.mxu0
    %1445 = vmatprep.subr.bf16.mxu0 0
    %1446 = vmatpush1.bf16.msra.mxu0 %v1028
    %1447 = vmatprep.subr.bf16.mxu0 0
    %1448 = vmatpush1.bf16.msra.mxu0 %v1027
    %1449 = vmatprep.subr.bf16.mxu0 0
    %1450 = vmatpush1.bf16.msra.mxu0 %v1026
    %1451 = vmatprep.subr.bf16.mxu0 0
    %1452 = vmatpush1.bf16.msra.mxu0 %v1025
    %1453 = vmatprep.subr.bf16.mxu0 0
    %1454 = vmatpush1.bf16.msra.mxu0 %v1024
    %1455 = vmatprep.subr.bf16.mxu0 0
    %1456 = vmatpush1.bf16.msra.mxu0 %v1023
    %1457 = vmatprep.subr.bf16.mxu0 0
    %1458 = vmatpush1.bf16.msra.mxu0 %v1022
    %1459 = vmatprep.subr.bf16.mxu0 0
    %1460 = vmatpush1.bf16.msra.mxu0 %v1021
    %1461 = vmatprep.subr.bf16.mxu0 0
    %1462 = vmatpush2.bf16.msra.mxu0 %v1036
    %1463 = vmatprep.subr.bf16.mxu0 0
    %1464 = vmatpush2.bf16.msra.mxu0 %v1035
    %1465 = vmatprep.subr.bf16.mxu0 0
    %1466 = vmatpush2.bf16.msra.mxu0 %v1034
    %1467 = vmatprep.subr.bf16.mxu0 0
    %1468 = vmatpush2.bf16.msra.mxu0 %v1033
    %1469 = vmatprep.subr.bf16.mxu0 0
    %1470 = vmatpush2.bf16.msra.mxu0 %v1032
    %1471 = vmatprep.subr.bf16.mxu0 0
    %1472 = vmatpush2.bf16.msra.mxu0 %v1031
    %1473 = vmatprep.subr.bf16.mxu0 0
    %1474 = vmatpush2.bf16.msra.mxu0 %v1030
    %1475 = vmatprep.subr.bf16.mxu0 0
    %1476 = vmatpush2.bf16.msra.mxu0 %v1029
    %1477 = vmatprep.mubr.bf16.mxu0 %v380
    %1478 = vmatmul.mubr.bf16.gmra.mxu0 %v378
    %v1479 = vpop.f32.mrf.mxu0
    %v1480 = vadd.f32 %v1440, %v1479
    %v1481 = vpop.f32.mrf.mxu0
    %v1482 = vpop.f32.mrf.mxu0
    %v1483 = vpop.f32.mrf.mxu0
    %1484 = vdwg.mxu0
    %1485 = vst [vmem:[#allocation2] sm:$0x3] %v1480
    // Predicated region
    $region14: #{cnn_forward.7} parent=1 // pred_check
      _
    $region15: #{cnn_forward.7} parent=1 // pred_check_branch
      %1487 = sbr.rel (0) target = $region17
    $region16: #{cnn_forward.7} parent=1 // pred_region
      %s1489 = ssub.s32 32, 32
      %1490 = vsyncadd [#allocation3], %s1489
      %s1492 = sshll.u32 [#allocation2], 4
      %s1493 = int_to_ptr.vmem [resolvable:$true] %s1492
      %1495 = dma.vmem_to_hbm [thread:$0]  %s1493, 32, %s3, [#allocation3]
    $region17: #{cnn_forward.7} parent=1 // pred_fallthru
      _
    // Predicated region
    $region18: #{cnn_forward.7} parent=1 // pred_check
      _
    $region19: #{cnn_forward.7} parent=1 // pred_check_branch
      %1497 = sbr.rel (0) target = $region21
    $region20: #{cnn_forward.7} parent=1 // pred_region
      %1498 = dma.done [#allocation3], 32
    $region21: #{cnn_forward.7} parent=1 // pred_fallthru
      _
    %1499 = vsyncpa [#allocation3], 1

</llo_original>
